<compile_context>
chip_gen: v7x
topology: tpu7x:2x2x1
jax: 0.10.0
libtpu: 0.0.40
codegen_flags: <defaults>
</compile_context>

<pallas_src>
import functools
import numpy as np
import jax
import jax.numpy as jnp
from jax.experimental import pallas as pl
from jax.experimental.pallas import tpu as pltpu


def _round_up(x, m):
    return ((x + m - 1) // m) * m


# ----------------------------------------------------------------------------
# Pallas kernel: fused conv3x3+BN+ReLU -> conv3x3+BN+ReLU for Bt images
# (images are concatenated along lanes with per-image stride L = Np // Bt).
# ----------------------------------------------------------------------------
def _conv_block_kernel(x_ref, mask_ref, w1_ref, b1_ref, w2_ref, b2_ref,
                       out_ref, stack1_ref, stack2_ref, h_ref,
                       *, Wp, Np, S, Cin, Cout):
    # Zero the never-written halo regions of the h scratch exactly once; the
    # slab [S, S+Np) is fully (and mask-zeroed) rewritten every grid step.
    @pl.when(pl.program_id(0) == 0)
    def _():
        h_ref[...] = jnp.zeros_like(h_ref)

    # ---- conv1 (+ folded BN) + ReLU ----------------------------------------
    # im2col: nine lane-shifted whole-width windows stacked on sublanes,
    # then a single MXU dot with K = 9*Cin.
    for t in range(9):
        dy, dx = divmod(t, 3)
        off = dy * Wp + dx                              # static lane offset
        stack1_ref[t * Cin:(t + 1) * Cin, :] = x_ref[0, :, pl.ds(off, Np)]
    h = jnp.dot(w1_ref[...], stack1_ref[...],
                preferred_element_type=jnp.float32)      # [Cout, Np]
    h = jnp.maximum(h + b1_ref[...], 0.0) * mask_ref[...]
    # Lane-dense store (S is 128-aligned, Np a multiple of 128).  The masked
    # tail columns of each image double as the zero halo for the next image.
    h_ref[:, pl.ds(S, Np)] = h

    # ---- conv2 (+ folded BN) + ReLU ----------------------------------------
    base = S - Wp - 1                                    # >= 0 by construction
    for t in range(9):
        dy, dx = divmod(t, 3)
        off = base + dy * Wp + dx
        stack2_ref[t * Cout:(t + 1) * Cout, :] = h_ref[:, pl.ds(off, Np)]
    y = jnp.dot(w2_ref[...], stack2_ref[...],
                preferred_element_type=jnp.float32)      # [Cout, Np]
    out_ref[0] = jnp.maximum(y + b2_ref[...], 0.0).astype(out_ref.dtype)


# ----------------------------------------------------------------------------
# Parameters (deterministic synthetic init, shapes from conv_block_r2u.__init__)
# ----------------------------------------------------------------------------
def init_params(key, ch_in, ch_out):
    ks = jax.random.split(key, 4)
    f32 = jnp.float32

    def w(kk, shape):
        fan_in = shape[1] * shape[2] * shape[3]
        return jax.random.normal(kk, shape, f32) / np.sqrt(fan_in)

    p = {
        "w1": w(ks[0], (ch_out, ch_in, 3, 3)),
        "b1": jax.random.normal(ks[1], (ch_out,), f32) * 0.05,
        "w2": w(ks[2], (ch_out, ch_out, 3, 3)),
        "b2": jax.random.normal(ks[3], (ch_out,), f32) * 0.05,
    }
    # BatchNorm2d at PyTorch defaults (inference mode, running stats)
    for i in (1, 2):
        p[f"bn{i}_g"] = jnp.ones((ch_out,), f32)
        p[f"bn{i}_b"] = jnp.zeros((ch_out,), f32)
        p[f"bn{i}_mu"] = jnp.zeros((ch_out,), f32)
        p[f"bn{i}_var"] = jnp.ones((ch_out,), f32)
    return p


def _fold_bn(w, b, g, be, mu, var, eps):
    scale = g / jnp.sqrt(var + eps)
    return w * scale[:, None, None, None], (b - mu) * scale + be


# ----------------------------------------------------------------------------
# Forward wrapper
# ----------------------------------------------------------------------------
def conv_block_r2u_forward(params, x, eps=1e-5):
    f32 = jnp.float32
    B, Cin, H, W = x.shape
    Cout = params["w1"].shape[0]

    # Fold BN (inference running stats) into the conv weights/biases.
    w1f, b1f = _fold_bn(params["w1"], params["b1"], params["bn1_g"],
                        params["bn1_b"], params["bn1_mu"], params["bn1_var"], eps)
    w2f, b2f = _fold_bn(params["w2"], params["b2"], params["bn2_g"],
                        params["bn2_b"], params["bn2_mu"], params["bn2_var"], eps)

    # Channel dims padded to sublane multiples so the im2col stacks use
    # 8-aligned sublane stores (padded channels are exactly zero end-to-end).
    Cin_p = _round_up(Cin, 8)
    Cout_p = _round_up(Cout, 8)

    Wp, Hp = W + 2, H + 2                       # 1-px halo on each side
    L = _round_up(Hp * Wp + 2, 128)             # per-image lane stride (128-multiple)
    S = _round_up(Wp + 1, 128)                  # 128-aligned start of h in the scratch

    # Fold Bt images into the matmul N dimension per grid step.
    Bt = 1
    for d in range(1, B + 1):
        if B % d == 0 and d * L <= max(1024, L):
            Bt = d
    nb = B // Bt
    Np = Bt * L                                            # matmul N per grid step
    Win = Np + _round_up(2 * Wp + 2, 128)                  # input block width (slice reach)
    Lh = S + Np + _round_up(Wp + 1, 128)                   # h scratch width

    # Lane-dense im2col weights: column (dy*3+dx)*Cin_p + c  <->  stack row.
    def tapify(w, cin_p):
        co, ci = w.shape[0], w.shape[1]
        w = jnp.pad(w, ((0, Cout_p - co), (0, cin_p - ci), (0, 0), (0, 0)))
        return jnp.transpose(w, (0, 2, 3, 1)).reshape(Cout_p, 9 * cin_p)

    w1_taps = tapify(w1f, Cin_p)                           # [Cout_p, 9*Cin_p]
    w2_taps = tapify(w2f, Cout_p)                          # [Cout_p, 9*Cout_p]
    b1p = jnp.pad(b1f, (0, Cout_p - Cout)).reshape(Cout_p, 1)
    b2p = jnp.pad(b2f, (0, Cout_p - Cout)).reshape(Cout_p, 1)

    # Input layout: NCHW kept; per image, the zero-padded (Hp x Wp) map is
    # flattened into a 128-multiple lane segment of length L; Bt images are
    # concatenated along lanes per grid step.
    xp = jnp.pad(x, ((0, 0), (0, Cin_p - Cin), (1, 1), (1, 1)))    # [B,Cin_p,Hp,Wp]
    xf = xp.reshape(B, Cin_p, Hp * Wp)
    xf = jnp.pad(xf, ((0, 0), (0, 0), (0, L - Hp * Wp)))           # [B,Cin_p,L]
    xf = xf.reshape(nb, Bt, Cin_p, L).transpose(0, 2, 1, 3).reshape(nb, Cin_p, Np)
    xf = jnp.pad(xf, ((0, 0), (0, 0), (0, Win - Np)))              # [nb,Cin_p,Win]

    # Mask that zeroes garbage columns and the per-image tail of h (so the flat
    # Wp-stride trick + inter-image halo work for conv2).
    q = jnp.arange(Np)
    p = q % L
    mask = ((p < H * Wp) & ((p % Wp) < W)).astype(f32).reshape(1, Np)

    kern = functools.partial(_conv_block_kernel, Wp=Wp, Np=Np, S=S,
                             Cin=Cin_p, Cout=Cout_p)
    out_flat = pl.pallas_call(
        kern,
        out_shape=jax.ShapeDtypeStruct((nb, Cout_p, Np), f32),
        grid_spec=pltpu.PrefetchScalarGridSpec(
            num_scalar_prefetch=0,
            grid=(nb,),
            in_specs=[
                pl.BlockSpec((1, Cin_p, Win), lambda g: (g, 0, 0)),      # images
                pl.BlockSpec((1, Np), lambda g: (0, 0)),                 # mask
                pl.BlockSpec((Cout_p, 9 * Cin_p), lambda g: (0, 0)),     # conv1 W
                pl.BlockSpec((Cout_p, 1), lambda g: (0, 0)),             # conv1 bias
                pl.BlockSpec((Cout_p, 9 * Cout_p), lambda g: (0, 0)),    # conv2 W
                pl.BlockSpec((Cout_p, 1), lambda g: (0, 0)),             # conv2 bias
            ],
            out_specs=pl.BlockSpec((1, Cout_p, Np), lambda g: (g, 0, 0)),
            scratch_shapes=[
                pltpu.VMEM((9 * Cin_p, Np), f32),     # conv1 im2col stack
                pltpu.VMEM((9 * Cout_p, Np), f32),    # conv2 im2col stack
                pltpu.VMEM((Cout_p, Lh), f32),        # haloed intermediate h
            ],
        ),
        compiler_params=pltpu.CompilerParams(
            dimension_semantics=("parallel",),
            vmem_limit_bytes=64 * 1024 * 1024),
    )(xf, mask, w1_taps, b1p, w2_taps, b2p)

    # Un-interleave the lane-batched images; drop channel / lane padding.  NCHW.
    out = out_flat.reshape(nb, Cout_p, Bt, L).transpose(0, 2, 1, 3)
    out = out.reshape(B, Cout_p, L)[:, :Cout, :H * Wp]
    return out.reshape(B, Cout, H, Wp)[:, :, :, :W]


# ----------------------------------------------------------------------------
# Pure-JAX reference (for correctness check)
# ----------------------------------------------------------------------------
def conv_block_r2u_reference(params, x, eps=1e-5):
    def bn(z, g, be, mu, var):
        return (g[None, :, None, None]
                * (z - mu[None, :, None, None])
                / jnp.sqrt(var[None, :, None, None] + eps)
                + be[None, :, None, None])

    def conv(z, w, b):
        y = jax.lax.conv_general_dilated(
            z, w, window_strides=(1, 1), padding=((1, 1), (1, 1)),
            dimension_numbers=("NCHW", "OIHW", "NCHW"),
            precision=jax.lax.Precision.HIGHEST)
        return y + b[None, :, None, None]

    h = jnp.maximum(bn(conv(x, params["w1"], params["b1"]),
                       params["bn1_g"], params["bn1_b"],
                       params["bn1_mu"], params["bn1_var"]), 0.0)
    y = jnp.maximum(bn(conv(h, params["w2"], params["b2"]),
                       params["bn2_g"], params["bn2_b"],
                       params["bn2_mu"], params["bn2_var"]), 0.0)
    return y


if __name__ == "__main__":
    key = jax.random.PRNGKey(0)
    ch_in, ch_out = 4, 32
    B, H, W = 2, 16, 16

    kp, kx = jax.random.split(key)
    params = init_params(kp, ch_in, ch_out)
    x = jax.random.normal(kx, (B, ch_in, H, W), jnp.float32)

    out = conv_block_r2u_forward(params, x)
    out = jax.block_until_ready(out)
    assert out.shape == (B, ch_out, H, W)

    ref = conv_block_r2u_reference(params, x)
    np.testing.assert_allclose(np.asarray(out), np.asarray(ref),
                               rtol=1e-4, atol=1e-4)
    print("KERNEL_OK")
</pallas_src>

<mosaic_0001>
module attributes {stable_mosaic.version = 11 : i64} {
  func.func @_conv_block_kernel(%arg0: i32, %arg1: memref<1x8x896xf32, #tpu.memory_space<vmem>>, %arg2: memref<1x768xf32, #tpu.memory_space<vmem>>, %arg3: memref<32x72xf32, #tpu.memory_space<vmem>>, %arg4: memref<32x1xf32, #tpu.memory_space<vmem>>, %arg5: memref<32x288xf32, #tpu.memory_space<vmem>>, %arg6: memref<32x1xf32, #tpu.memory_space<vmem>>, %arg7: memref<1x32x768xf32, #tpu.memory_space<vmem>>, %arg8: memref<72x768xf32, #tpu.memory_space<vmem>>, %arg9: memref<288x768xf32, #tpu.memory_space<vmem>>, %arg10: memref<32x1024xf32, #tpu.memory_space<vmem>>) attributes {dimension_semantics = [#tpu.dimension_semantics<parallel>], iteration_bounds = array<i64: 1>, scalar_prefetch = 0 : i64, scratch_operands = 3 : i64, tpu.core_type = #tpu.core_type<tc>, window_params = [{transform_indices = @transform_0, window_bounds = array<i64: 1, 8, 896>}, {pipeline_mode = #tpu.pipeline_mode<synchronous>, transform_indices = @transform_1, window_bounds = array<i64: 1, 768>}, {pipeline_mode = #tpu.pipeline_mode<synchronous>, transform_indices = @transform_2, window_bounds = array<i64: 32, 72>}, {pipeline_mode = #tpu.pipeline_mode<synchronous>, transform_indices = @transform_3, window_bounds = array<i64: 32, 1>}, {pipeline_mode = #tpu.pipeline_mode<synchronous>, transform_indices = @transform_4, window_bounds = array<i64: 32, 288>}, {pipeline_mode = #tpu.pipeline_mode<synchronous>, transform_indices = @transform_5, window_bounds = array<i64: 32, 1>}, {transform_indices = @transform_6, window_bounds = array<i64: 1, 32, 768>}]} {
    %c0_i32 = arith.constant 0 : i32
    %0 = arith.cmpi eq, %arg0, %c0_i32 : i32
    %1 = arith.extui %0 : i1 to i32
    %c0_i32_0 = arith.constant 0 : i32
    %2 = arith.cmpi ne, %1, %c0_i32_0 : i32
    scf.if %2 {
      %cst_73 = arith.constant 0.000000e+00 : f32
      %71 = vector.broadcast %cst_73 : f32 to vector<32x1024xf32>
      %c0_74 = arith.constant 0 : index
      %c0_75 = arith.constant 0 : index
      %72 = vector.load %arg10[%c0_74, %c0_75] : memref<32x1024xf32, #tpu.memory_space<vmem>>, vector<32x1024xf32>
      tpu.vector_store %arg10[%c0_74, %c0_75], %71 {strides = array<i32>} : memref<32x1024xf32, #tpu.memory_space<vmem>>, vector<32x1024xf32>,
    } else {
    }
    %c0 = arith.constant 0 : index
    %c0_1 = arith.constant 0 : index
    %c0_2 = arith.constant 0 : index
    %3 = vector.load %arg1[%c0, %c0_1, %c0_2] : memref<1x8x896xf32, #tpu.memory_space<vmem>>, vector<1x8x768xf32>
    %4 = vector.shape_cast %3 : vector<1x8x768xf32> to vector<8x768xf32>
    %c0_3 = arith.constant 0 : index
    %c0_4 = arith.constant 0 : index
    %5 = vector.load %arg8[%c0_3, %c0_4] : memref<72x768xf32, #tpu.memory_space<vmem>>, vector<8x768xf32>
    tpu.vector_store %arg8[%c0_3, %c0_4], %4 {strides = array<i32>} : memref<72x768xf32, #tpu.memory_space<vmem>>, vector<8x768xf32>,
    %c0_5 = arith.constant 0 : index
    %c0_6 = arith.constant 0 : index
    %c1 = arith.constant 1 : index
    %6 = vector.load %arg1[%c0_5, %c0_6, %c1] : memref<1x8x896xf32, #tpu.memory_space<vmem>>, vector<1x8x768xf32>
    %7 = vector.shape_cast %6 : vector<1x8x768xf32> to vector<8x768xf32>
    %c8 = arith.constant 8 : index
    %c0_7 = arith.constant 0 : index
    %8 = vector.load %arg8[%c8, %c0_7] : memref<72x768xf32, #tpu.memory_space<vmem>>, vector<8x768xf32>
    tpu.vector_store %arg8[%c8, %c0_7], %7 {strides = array<i32>} : memref<72x768xf32, #tpu.memory_space<vmem>>, vector<8x768xf32>,
    %c0_8 = arith.constant 0 : index
    %c0_9 = arith.constant 0 : index
    %c2 = arith.constant 2 : index
    %9 = vector.load %arg1[%c0_8, %c0_9, %c2] : memref<1x8x896xf32, #tpu.memory_space<vmem>>, vector<1x8x768xf32>
    %10 = vector.shape_cast %9 : vector<1x8x768xf32> to vector<8x768xf32>
    %c16 = arith.constant 16 : index
    %c0_10 = arith.constant 0 : index
    %11 = vector.load %arg8[%c16, %c0_10] : memref<72x768xf32, #tpu.memory_space<vmem>>, vector<8x768xf32>
    tpu.vector_store %arg8[%c16, %c0_10], %10 {strides = array<i32>} : memref<72x768xf32, #tpu.memory_space<vmem>>, vector<8x768xf32>,
    %c0_11 = arith.constant 0 : index
    %c0_12 = arith.constant 0 : index
    %c18 = arith.constant 18 : index
    %12 = vector.load %arg1[%c0_11, %c0_12, %c18] : memref<1x8x896xf32, #tpu.memory_space<vmem>>, vector<1x8x768xf32>
    %13 = vector.shape_cast %12 : vector<1x8x768xf32> to vector<8x768xf32>
    %c24 = arith.constant 24 : index
    %c0_13 = arith.constant 0 : index
    %14 = vector.load %arg8[%c24, %c0_13] : memref<72x768xf32, #tpu.memory_space<vmem>>, vector<8x768xf32>
    tpu.vector_store %arg8[%c24, %c0_13], %13 {strides = array<i32>} : memref<72x768xf32, #tpu.memory_space<vmem>>, vector<8x768xf32>,
    %c0_14 = arith.constant 0 : index
    %c0_15 = arith.constant 0 : index
    %c19 = arith.constant 19 : index
    %15 = vector.load %arg1[%c0_14, %c0_15, %c19] : memref<1x8x896xf32, #tpu.memory_space<vmem>>, vector<1x8x768xf32>
    %16 = vector.shape_cast %15 : vector<1x8x768xf32> to vector<8x768xf32>
    %c32 = arith.constant 32 : index
    %c0_16 = arith.constant 0 : index
    %17 = vector.load %arg8[%c32, %c0_16] : memref<72x768xf32, #tpu.memory_space<vmem>>, vector<8x768xf32>
    tpu.vector_store %arg8[%c32, %c0_16], %16 {strides = array<i32>} : memref<72x768xf32, #tpu.memory_space<vmem>>, vector<8x768xf32>,
    %c0_17 = arith.constant 0 : index
    %c0_18 = arith.constant 0 : index
    %c20 = arith.constant 20 : index
    %18 = vector.load %arg1[%c0_17, %c0_18, %c20] : memref<1x8x896xf32, #tpu.memory_space<vmem>>, vector<1x8x768xf32>
    %19 = vector.shape_cast %18 : vector<1x8x768xf32> to vector<8x768xf32>
    %c40 = arith.constant 40 : index
    %c0_19 = arith.constant 0 : index
    %20 = vector.load %arg8[%c40, %c0_19] : memref<72x768xf32, #tpu.memory_space<vmem>>, vector<8x768xf32>
    tpu.vector_store %arg8[%c40, %c0_19], %19 {strides = array<i32>} : memref<72x768xf32, #tpu.memory_space<vmem>>, vector<8x768xf32>,
    %c0_20 = arith.constant 0 : index
    %c0_21 = arith.constant 0 : index
    %c36 = arith.constant 36 : index
    %21 = vector.load %arg1[%c0_20, %c0_21, %c36] : memref<1x8x896xf32, #tpu.memory_space<vmem>>, vector<1x8x768xf32>
    %22 = vector.shape_cast %21 : vector<1x8x768xf32> to vector<8x768xf32>
    %c48 = arith.constant 48 : index
    %c0_22 = arith.constant 0 : index
    %23 = vector.load %arg8[%c48, %c0_22] : memref<72x768xf32, #tpu.memory_space<vmem>>, vector<8x768xf32>
    tpu.vector_store %arg8[%c48, %c0_22], %22 {strides = array<i32>} : memref<72x768xf32, #tpu.memory_space<vmem>>, vector<8x768xf32>,
    %c0_23 = arith.constant 0 : index
    %c0_24 = arith.constant 0 : index
    %c37 = arith.constant 37 : index
    %24 = vector.load %arg1[%c0_23, %c0_24, %c37] : memref<1x8x896xf32, #tpu.memory_space<vmem>>, vector<1x8x768xf32>
    %25 = vector.shape_cast %24 : vector<1x8x768xf32> to vector<8x768xf32>
    %c56 = arith.constant 56 : index
    %c0_25 = arith.constant 0 : index
    %26 = vector.load %arg8[%c56, %c0_25] : memref<72x768xf32, #tpu.memory_space<vmem>>, vector<8x768xf32>
    tpu.vector_store %arg8[%c56, %c0_25], %25 {strides = array<i32>} : memref<72x768xf32, #tpu.memory_space<vmem>>, vector<8x768xf32>,
    %c0_26 = arith.constant 0 : index
    %c0_27 = arith.constant 0 : index
    %c38 = arith.constant 38 : index
    %27 = vector.load %arg1[%c0_26, %c0_27, %c38] : memref<1x8x896xf32, #tpu.memory_space<vmem>>, vector<1x8x768xf32>
    %28 = vector.shape_cast %27 : vector<1x8x768xf32> to vector<8x768xf32>
    %c64 = arith.constant 64 : index
    %c0_28 = arith.constant 0 : index
    %29 = vector.load %arg8[%c64, %c0_28] : memref<72x768xf32, #tpu.memory_space<vmem>>, vector<8x768xf32>
    tpu.vector_store %arg8[%c64, %c0_28], %28 {strides = array<i32>} : memref<72x768xf32, #tpu.memory_space<vmem>>, vector<8x768xf32>,
    %c0_29 = arith.constant 0 : index
    %c0_30 = arith.constant 0 : index
    %30 = vector.load %arg3[%c0_29, %c0_30] : memref<32x72xf32, #tpu.memory_space<vmem>>, vector<32x72xf32>
    %c0_31 = arith.constant 0 : index
    %c0_32 = arith.constant 0 : index
    %31 = vector.load %arg8[%c0_31, %c0_32] : memref<72x768xf32, #tpu.memory_space<vmem>>, vector<72x768xf32>
    %cst = arith.constant dense<0.000000e+00> : vector<32x768xf32>
    %32 = tpu.matmul %30, %31, %cst {dimension_numbers = #tpu.dot_dimension_numbers<[1], [0], [0], [1], [0, 0, 1, 1], [], []>} : vector<32x72xf32>, vector<72x768xf32>, vector<32x768xf32> -> vector<32x768xf32>
    %c0_33 = arith.constant 0 : index
    %c0_34 = arith.constant 0 : index
    %33 = vector.load %arg4[%c0_33, %c0_34] : memref<32x1xf32, #tpu.memory_space<vmem>>, vector<32x1xf32>
    %34 = vector.broadcast %33 : vector<32x1xf32> to vector<32x768xf32>
    %35 = arith.addf %32, %34 : vector<32x768xf32>
    %cst_35 = arith.constant 0.000000e+00 : f32
    %36 = vector.broadcast %cst_35 : f32 to vector<32x768xf32>
    %37 = arith.maximumf %35, %36 : vector<32x768xf32>
    %c0_36 = arith.constant 0 : index
    %c0_37 = arith.constant 0 : index
    %38 = vector.load %arg2[%c0_36, %c0_37] : memref<1x768xf32, #tpu.memory_space<vmem>>, vector<1x768xf32>
    %39 = vector.broadcast %38 : vector<1x768xf32> to vector<32x768xf32>
    %40 = arith.mulf %37, %39 : vector<32x768xf32>
    %c0_38 = arith.constant 0 : index
    %c128 = arith.constant 128 : index
    %41 = vector.load %arg10[%c0_38, %c128] : memref<32x1024xf32, #tpu.memory_space<vmem>>, vector<32x768xf32>
    tpu.vector_store %arg10[%c0_38, %c128], %40 {strides = array<i32>} : memref<32x1024xf32, #tpu.memory_space<vmem>>, vector<32x768xf32>,
    %c0_39 = arith.constant 0 : index
    %c109 = arith.constant 109 : index
    %42 = vector.load %arg10[%c0_39, %c109] : memref<32x1024xf32, #tpu.memory_space<vmem>>, vector<32x768xf32>
    %c0_40 = arith.constant 0 : index
    %c0_41 = arith.constant 0 : index
    %43 = vector.load %arg9[%c0_40, %c0_41] : memref<288x768xf32, #tpu.memory_space<vmem>>, vector<32x768xf32>
    tpu.vector_store %arg9[%c0_40, %c0_41], %42 {strides = array<i32>} : memref<288x768xf32, #tpu.memory_space<vmem>>, vector<32x768xf32>,
    %c0_42 = arith.constant 0 : index
    %c110 = arith.constant 110 : index
    %44 = vector.load %arg10[%c0_42, %c110] : memref<32x1024xf32, #tpu.memory_space<vmem>>, vector<32x768xf32>
    %c32_43 = arith.constant 32 : index
    %c0_44 = arith.constant 0 : index
    %45 = vector.load %arg9[%c32_43, %c0_44] : memref<288x768xf32, #tpu.memory_space<vmem>>, vector<32x768xf32>
    tpu.vector_store %arg9[%c32_43, %c0_44], %44 {strides = array<i32>} : memref<288x768xf32, #tpu.memory_space<vmem>>, vector<32x768xf32>,
    %c0_45 = arith.constant 0 : index
    %c111 = arith.constant 111 : index
    %46 = vector.load %arg10[%c0_45, %c111] : memref<32x1024xf32, #tpu.memory_space<vmem>>, vector<32x768xf32>
    %c64_46 = arith.constant 64 : index
    %c0_47 = arith.constant 0 : index
    %47 = vector.load %arg9[%c64_46, %c0_47] : memref<288x768xf32, #tpu.memory_space<vmem>>, vector<32x768xf32>
    tpu.vector_store %arg9[%c64_46, %c0_47], %46 {strides = array<i32>} : memref<288x768xf32, #tpu.memory_space<vmem>>, vector<32x768xf32>,
    %c0_48 = arith.constant 0 : index
    %c127 = arith.constant 127 : index
    %48 = vector.load %arg10[%c0_48, %c127] : memref<32x1024xf32, #tpu.memory_space<vmem>>, vector<32x768xf32>
    %c96 = arith.constant 96 : index
    %c0_49 = arith.constant 0 : index
    %49 = vector.load %arg9[%c96, %c0_49] : memref<288x768xf32, #tpu.memory_space<vmem>>, vector<32x768xf32>
    tpu.vector_store %arg9[%c96, %c0_49], %48 {strides = array<i32>} : memref<288x768xf32, #tpu.memory_space<vmem>>, vector<32x768xf32>,
    %c0_50 = arith.constant 0 : index
    %c128_51 = arith.constant 128 : index
    %50 = vector.load %arg10[%c0_50, %c128_51] : memref<32x1024xf32, #tpu.memory_space<vmem>>, vector<32x768xf32>
    %c128_52 = arith.constant 128 : index
    %c0_53 = arith.constant 0 : index
    %51 = vector.load %arg9[%c128_52, %c0_53] : memref<288x768xf32, #tpu.memory_space<vmem>>, vector<32x768xf32>
    tpu.vector_store %arg9[%c128_52, %c0_53], %50 {strides = array<i32>} : memref<288x768xf32, #tpu.memory_space<vmem>>, vector<32x768xf32>,
    %c0_54 = arith.constant 0 : index
    %c129 = arith.constant 129 : index
    %52 = vector.load %arg10[%c0_54, %c129] : memref<32x1024xf32, #tpu.memory_space<vmem>>, vector<32x768xf32>
    %c160 = arith.constant 160 : index
    %c0_55 = arith.constant 0 : index
    %53 = vector.load %arg9[%c160, %c0_55] : memref<288x768xf32, #tpu.memory_space<vmem>>, vector<32x768xf32>
    tpu.vector_store %arg9[%c160, %c0_55], %52 {strides = array<i32>} : memref<288x768xf32, #tpu.memory_space<vmem>>, vector<32x768xf32>,
    %c0_56 = arith.constant 0 : index
    %c145 = arith.constant 145 : index
    %54 = vector.load %arg10[%c0_56, %c145] : memref<32x1024xf32, #tpu.memory_space<vmem>>, vector<32x768xf32>
    %c192 = arith.constant 192 : index
    %c0_57 = arith.constant 0 : index
    %55 = vector.load %arg9[%c192, %c0_57] : memref<288x768xf32, #tpu.memory_space<vmem>>, vector<32x768xf32>
    tpu.vector_store %arg9[%c192, %c0_57], %54 {strides = array<i32>} : memref<288x768xf32, #tpu.memory_space<vmem>>, vector<32x768xf32>,
    %c0_58 = arith.constant 0 : index
    %c146 = arith.constant 146 : index
    %56 = vector.load %arg10[%c0_58, %c146] : memref<32x1024xf32, #tpu.memory_space<vmem>>, vector<32x768xf32>
    %c224 = arith.constant 224 : index
    %c0_59 = arith.constant 0 : index
    %57 = vector.load %arg9[%c224, %c0_59] : memref<288x768xf32, #tpu.memory_space<vmem>>, vector<32x768xf32>
    tpu.vector_store %arg9[%c224, %c0_59], %56 {strides = array<i32>} : memref<288x768xf32, #tpu.memory_space<vmem>>, vector<32x768xf32>,
    %c0_60 = arith.constant 0 : index
    %c147 = arith.constant 147 : index
    %58 = vector.load %arg10[%c0_60, %c147] : memref<32x1024xf32, #tpu.memory_space<vmem>>, vector<32x768xf32>
    %c256 = arith.constant 256 : index
    %c0_61 = arith.constant 0 : index
    %59 = vector.load %arg9[%c256, %c0_61] : memref<288x768xf32, #tpu.memory_space<vmem>>, vector<32x768xf32>
    tpu.vector_store %arg9[%c256, %c0_61], %58 {strides = array<i32>} : memref<288x768xf32, #tpu.memory_space<vmem>>, vector<32x768xf32>,
    %c0_62 = arith.constant 0 : index
    %c0_63 = arith.constant 0 : index
    %60 = vector.load %arg5[%c0_62, %c0_63] : memref<32x288xf32, #tpu.memory_space<vmem>>, vector<32x288xf32>
    %c0_64 = arith.constant 0 : index
    %c0_65 = arith.constant 0 : index
    %61 = vector.load %arg9[%c0_64, %c0_65] : memref<288x768xf32, #tpu.memory_space<vmem>>, vector<288x768xf32>
    %cst_66 = arith.constant dense<0.000000e+00> : vector<32x768xf32>
    %62 = tpu.matmul %60, %61, %cst_66 {dimension_numbers = #tpu.dot_dimension_numbers<[1], [0], [0], [1], [0, 0, 1, 1], [], []>} : vector<32x288xf32>, vector<288x768xf32>, vector<32x768xf32> -> vector<32x768xf32>
    %c0_67 = arith.constant 0 : index
    %c0_68 = arith.constant 0 : index
    %63 = vector.load %arg6[%c0_67, %c0_68] : memref<32x1xf32, #tpu.memory_space<vmem>>, vector<32x1xf32>
    %64 = vector.broadcast %63 : vector<32x1xf32> to vector<32x768xf32>
    %65 = arith.addf %62, %64 : vector<32x768xf32>
    %cst_69 = arith.constant 0.000000e+00 : f32
    %66 = vector.broadcast %cst_69 : f32 to vector<32x768xf32>
    %67 = arith.maximumf %65, %66 : vector<32x768xf32>
    %c0_70 = arith.constant 0 : index
    %c0_71 = arith.constant 0 : index
    %c0_72 = arith.constant 0 : index
    %68 = vector.load %arg7[%c0_70, %c0_71, %c0_72] : memref<1x32x768xf32, #tpu.memory_space<vmem>>, vector<1x32x768xf32>
    %69 = vector.shape_cast %68 : vector<1x32x768xf32> to vector<32x768xf32>
    %70 = vector.shape_cast %67 : vector<32x768xf32> to vector<1x32x768xf32>
    tpu.vector_store %arg7[%c0_70, %c0_71, %c0_72], %70 {strides = array<i32>} : memref<1x32x768xf32, #tpu.memory_space<vmem>>, vector<1x32x768xf32>,
    return
  }
  func.func @transform_0(%arg0: i32) -> (i32, i32, i32) {
    %c0_i32 = arith.constant 0 : i32
    %c0_i32_0 = arith.constant 0 : i32
    %c0_i32_1 = arith.constant 0 : i32
    return %arg0, %c0_i32, %c0_i32_0 : i32, i32, i32
  }
  func.func @transform_1(%arg0: i32) -> (i32, i32) {
    %c0_i32 = arith.constant 0 : i32
    %c0_i32_0 = arith.constant 0 : i32
    %c0_i32_1 = arith.constant 0 : i32
    return %c0_i32, %c0_i32_0 : i32, i32
  }
  func.func @transform_2(%arg0: i32) -> (i32, i32) {
    %c0_i32 = arith.constant 0 : i32
    %c0_i32_0 = arith.constant 0 : i32
    %c0_i32_1 = arith.constant 0 : i32
    return %c0_i32, %c0_i32_0 : i32, i32
  }
  func.func @transform_3(%arg0: i32) -> (i32, i32) {
    %c0_i32 = arith.constant 0 : i32
    %c0_i32_0 = arith.constant 0 : i32
    %c0_i32_1 = arith.constant 0 : i32
    return %c0_i32, %c0_i32_0 : i32, i32
  }
  func.func @transform_4(%arg0: i32) -> (i32, i32) {
    %c0_i32 = arith.constant 0 : i32
    %c0_i32_0 = arith.constant 0 : i32
    %c0_i32_1 = arith.constant 0 : i32
    return %c0_i32, %c0_i32_0 : i32, i32
  }
  func.func @transform_5(%arg0: i32) -> (i32, i32) {
    %c0_i32 = arith.constant 0 : i32
    %c0_i32_0 = arith.constant 0 : i32
    %c0_i32_1 = arith.constant 0 : i32
    return %c0_i32, %c0_i32_0 : i32, i32
  }
  func.func @transform_6(%arg0: i32) -> (i32, i32, i32) {
    %c0_i32 = arith.constant 0 : i32
    %c0_i32_0 = arith.constant 0 : i32
    %c0_i32_1 = arith.constant 0 : i32
    return %arg0, %c0_i32, %c0_i32_0 : i32, i32, i32
  }
}

</mosaic_0001>

<llo_original>
// kernel: tpu_custom_call.1
$region0: #{tpu_custom_call.1}
  #allocation0 [shape = 'u32[]', space=smem, size = 0x4, offset = 0x4, fixed_abs, tag = 'smem constant byte address 0x4 - core index']
  #allocation1 [shape = 'u32[144,128]{1,0:T(1,128)}', space=vmem, size = 0x12000, scoped, tag = 'internal scratch']
  #allocation2 [shape = 'f32[72,768]{1,0:T(8,128)}', space=vmem, size = 0x36000, scoped, tag = 'scratch operand']
  #allocation3 [shape = 'f32[288,768]{1,0:T(8,128)}', space=vmem, size = 0xd8000, scoped, tag = 'scratch operand']
  #allocation4 [shape = 'f32[32,1024]{1,0:T(8,128)}', space=vmem, size = 0x20000, scoped, tag = 'scratch operand']
  %s0 = inlined_call_operand.hbm [shape: f32[1,8,896], index: 0, kind: input, shape index: {}]
  %s1 = inlined_call_operand.hbm [shape: f32[1,768], index: 1, kind: input, shape index: {}]
  %s2 = inlined_call_operand.hbm [shape: f32[32,72], index: 2, kind: input, shape index: {}]
  %s3 = inlined_call_operand.hbm [shape: f32[32,1], index: 3, kind: input, shape index: {}]
  %s4 = inlined_call_operand.hbm [shape: f32[32,288], index: 4, kind: input, shape index: {}]
  %s5 = inlined_call_operand.hbm [shape: f32[32,1], index: 5, kind: input, shape index: {}]
  %s6 = inlined_call_operand.hbm [shape: f32[1,32,768], index: 6, kind: output, shape index: {}]
  %s7 = sld [smem:[#allocation0]]
  $region62: #{tpu_custom_call.1} parent=0
    _
  %s9 = ssub.s32 1, %s7
  %s10 = scalar_select 0, %s9, %s7
  $region1: #{tpu_custom_call.1} parent=0
    #allocation5 [shape = 'u8[28672]{0}', space=vmem, size = 0x7000, scoped, tag = 'input window, operand 0, single buffered']
    #allocation6 [shape = 's32[1]{0}', space=sflag, size = 0x4, scoped, tag = 'scoped memory for tpu_custom_call.1']
    #allocation7 [shape = 's32[1]{0}', space=sflag, size = 0x4, scoped, tag = 'scoped memory for tpu_custom_call.1']
    #allocation8 [shape = 'u8[3072]{0}', space=vmem, size = 0xc00, scoped, tag = 'input window, operand 1, single buffered']
    #allocation9 [shape = 's32[1]{0}', space=sflag, size = 0x4, scoped, tag = 'scoped memory for tpu_custom_call.1']
    #allocation10 [shape = 'u8[16384]{0}', space=vmem, size = 0x4000, scoped, tag = 'input window, operand 2, single buffered']
    #allocation11 [shape = 'u8[16384]{0}', space=vmem, size = 0x4000, scoped, tag = 'input window, operand 3, single buffered']
    #allocation12 [shape = 's32[1]{0}', space=sflag, size = 0x4, scoped, tag = 'scoped memory for tpu_custom_call.1']
    #allocation13 [shape = 'u8[49152]{0}', space=vmem, size = 0xc000, scoped, tag = 'input window, operand 4, single buffered']
    #allocation14 [shape = 'u8[16384]{0}', space=vmem, size = 0x4000, scoped, tag = 'input window, operand 5, single buffered']
    #allocation15 [shape = 's32[1]{0}', space=sflag, size = 0x4, scoped, tag = 'scoped memory for tpu_custom_call.1']
    #allocation16 [shape = 'u8[98304]{0}', space=vmem, size = 0x18000, scoped, tag = 'output window, operand 0, single buffered']
    %11 = vsyncpa [#allocation6], 0
    %12 = vsyncpa [#allocation9], 0
    %13 = vsyncpa [#allocation12], 0
    %14 = vsyncpa [#allocation15], 0
    %15 = vsyncpa [#allocation7], 0
    // Predicated region
    $region2: #{tpu_custom_call.1} parent=1 // pred_check
      _
    $region3: #{tpu_custom_call.1} parent=1 // pred_check_branch
      %17 = sbr.rel (0) target = $region5
    $region4: #{tpu_custom_call.1} parent=1 // pred_region
      %s19 = ssub.s32 896, 896
      %20 = vsyncadd [#allocation6], %s19
      %s22 = sshll.u32 [#allocation5], 4
      %s23 = int_to_ptr.vmem [resolvable:$true] %s22
      %25 = dma.hbm_to_vmem [thread:$0]  %s0, 896, %s23, [#allocation6]
    $region5: #{tpu_custom_call.1} parent=1 // pred_fallthru
      _
    // Predicated region
    $region6: #{tpu_custom_call.1} parent=1 // pred_check
      _
    $region7: #{tpu_custom_call.1} parent=1 // pred_check_branch
      %27 = sbr.rel (0) target = $region9
    $region8: #{tpu_custom_call.1} parent=1 // pred_region
      %s29 = ssub.s32 96, 96
      %30 = vsyncadd [#allocation9], %s29
      %s32 = sshll.u32 [#allocation8], 4
      %s33 = int_to_ptr.vmem [resolvable:$true] %s32
      %35 = dma.hbm_to_vmem [thread:$0]  %s1, 96, %s33, [#allocation9]
    $region9: #{tpu_custom_call.1} parent=1 // pred_fallthru
      _
    // Predicated region
    $region10: #{tpu_custom_call.1} parent=1 // pred_check
      _
    $region11: #{tpu_custom_call.1} parent=1 // pred_check_branch
      %37 = sbr.rel (0) target = $region13
    $region12: #{tpu_custom_call.1} parent=1 // pred_region
      %s39 = ssub.s32 512, 512
      %40 = vsyncadd [#allocation9], %s39
      %s41 = sshll.u32 [#allocation10], 4
      %s42 = int_to_ptr.vmem [resolvable:$true] %s41
      %47 = dma.hbm_to_vmem [thread:$0]  %s2, 512, %s42, [#allocation9], 128, 128, 8
    $region13: #{tpu_custom_call.1} parent=1 // pred_fallthru
      _
    // Predicated region
    $region14: #{tpu_custom_call.1} parent=1 // pred_check
      _
    $region15: #{tpu_custom_call.1} parent=1 // pred_check_branch
      %49 = sbr.rel (0) target = $region17
    $region16: #{tpu_custom_call.1} parent=1 // pred_region
      %s51 = ssub.s32 512, 512
      %52 = vsyncadd [#allocation12], %s51
      %s53 = sshll.u32 [#allocation11], 4
      %s54 = int_to_ptr.vmem [resolvable:$true] %s53
      %59 = dma.hbm_to_vmem [thread:$0]  %s3, 512, %s54, [#allocation12], 128, 128, 8
    $region17: #{tpu_custom_call.1} parent=1 // pred_fallthru
      _
    // Predicated region
    $region18: #{tpu_custom_call.1} parent=1 // pred_check
      _
    $region19: #{tpu_custom_call.1} parent=1 // pred_check_branch
      %61 = sbr.rel (0) target = $region21
    $region20: #{tpu_custom_call.1} parent=1 // pred_region
      %s63 = ssub.s32 1536, 1536
      %64 = vsyncadd [#allocation12], %s63
      %s65 = sshll.u32 [#allocation13], 4
      %s66 = int_to_ptr.vmem [resolvable:$true] %s65
      %71 = dma.hbm_to_vmem [thread:$0]  %s4, 1536, %s66, [#allocation12], 384, 384, 24
    $region21: #{tpu_custom_call.1} parent=1 // pred_fallthru
      _
    // Predicated region
    $region22: #{tpu_custom_call.1} parent=1 // pred_check
      _
    $region23: #{tpu_custom_call.1} parent=1 // pred_check_branch
      %73 = sbr.rel (0) target = $region25
    $region24: #{tpu_custom_call.1} parent=1 // pred_region
      %s75 = ssub.s32 512, 512
      %76 = vsyncadd [#allocation15], %s75
      %s77 = sshll.u32 [#allocation14], 4
      %s78 = int_to_ptr.vmem [resolvable:$true] %s77
      %83 = dma.hbm_to_vmem [thread:$0]  %s5, 512, %s78, [#allocation15], 128, 128, 8
    $region25: #{tpu_custom_call.1} parent=1 // pred_fallthru
      _
    // Predicated region
    $region26: #{tpu_custom_call.1} parent=1 // pred_check
      _
    $region27: #{tpu_custom_call.1} parent=1 // pred_check_branch
      %85 = sbr.rel (0) target = $region29
    $region28: #{tpu_custom_call.1} parent=1 // pred_region
      %86 = dma.done [#allocation6], 896
    $region29: #{tpu_custom_call.1} parent=1 // pred_fallthru
      _
    // Predicated region
    $region30: #{tpu_custom_call.1} parent=1 // pred_check
      _
    $region31: #{tpu_custom_call.1} parent=1 // pred_check_branch
      %88 = sbr.rel (0) target = $region33
    $region32: #{tpu_custom_call.1} parent=1 // pred_region
      %89 = dma.done [#allocation9], 96
    $region33: #{tpu_custom_call.1} parent=1 // pred_fallthru
      _
    // Predicated region
    $region34: #{tpu_custom_call.1} parent=1 // pred_check
      _
    $region35: #{tpu_custom_call.1} parent=1 // pred_check_branch
      %91 = sbr.rel (0) target = $region37
    $region36: #{tpu_custom_call.1} parent=1 // pred_region
      %92 = dma.done [#allocation9], 512
    $region37: #{tpu_custom_call.1} parent=1 // pred_fallthru
      _
    // Predicated region
    $region38: #{tpu_custom_call.1} parent=1 // pred_check
      _
    $region39: #{tpu_custom_call.1} parent=1 // pred_check_branch
      %94 = sbr.rel (0) target = $region41
    $region40: #{tpu_custom_call.1} parent=1 // pred_region
      %95 = dma.done [#allocation12], 512
    $region41: #{tpu_custom_call.1} parent=1 // pred_fallthru
      _
    // Predicated region
    $region42: #{tpu_custom_call.1} parent=1 // pred_check
      _
    $region43: #{tpu_custom_call.1} parent=1 // pred_check_branch
      %97 = sbr.rel (0) target = $region45
    $region44: #{tpu_custom_call.1} parent=1 // pred_region
      %98 = dma.done [#allocation12], 1536
    $region45: #{tpu_custom_call.1} parent=1 // pred_fallthru
      _
    // Predicated region
    $region46: #{tpu_custom_call.1} parent=1 // pred_check
      _
    $region47: #{tpu_custom_call.1} parent=1 // pred_check_branch
      %100 = sbr.rel (0) target = $region49
    $region48: #{tpu_custom_call.1} parent=1 // pred_region
      %101 = dma.done [#allocation15], 512
    $region49: #{tpu_custom_call.1} parent=1 // pred_fallthru
      _
    %p102 = scmp.eq.s32.totalorder 0, 0
    // Predicated region
    $region50: #{tpu_custom_call.1} parent=1 // pred_check
      %p103 = pneg %p102
    $region51: #{tpu_custom_call.1} parent=1 // pred_check_branch
      %105 = sbr.rel (%p103) target = $region53
    $region52: #{tpu_custom_call.1} parent=1 // pred_region
      %106 = vst [vmem:[#allocation4] sm:$0xff] 0.0
      %107 = vst [vmem:[#allocation4 + $0x8] sm:$0xff] 0.0
      %108 = vst [vmem:[#allocation4 + $0x10] sm:$0xff] 0.0
      %109 = vst [vmem:[#allocation4 + $0x18] sm:$0xff] 0.0
      %110 = vst [vmem:[#allocation4 + $0x20] sm:$0xff] 0.0
      %111 = vst [vmem:[#allocation4 + $0x28] sm:$0xff] 0.0
      %112 = vst [vmem:[#allocation4 + $0x30] sm:$0xff] 0.0
      %113 = vst [vmem:[#allocation4 + $0x38] sm:$0xff] 0.0
      %114 = vst [vmem:[#allocation4 + $0x40] sm:$0xff] 0.0
      %115 = vst [vmem:[#allocation4 + $0x48] sm:$0xff] 0.0
      %116 = vst [vmem:[#allocation4 + $0x50] sm:$0xff] 0.0
      %117 = vst [vmem:[#allocation4 + $0x58] sm:$0xff] 0.0
      %118 = vst [vmem:[#allocation4 + $0x60] sm:$0xff] 0.0
      %119 = vst [vmem:[#allocation4 + $0x68] sm:$0xff] 0.0
      %120 = vst [vmem:[#allocation4 + $0x70] sm:$0xff] 0.0
      %121 = vst [vmem:[#allocation4 + $0x78] sm:$0xff] 0.0
      %122 = vst [vmem:[#allocation4 + $0x80] sm:$0xff] 0.0
      %123 = vst [vmem:[#allocation4 + $0x88] sm:$0xff] 0.0
      %124 = vst [vmem:[#allocation4 + $0x90] sm:$0xff] 0.0
      %125 = vst [vmem:[#allocation4 + $0x98] sm:$0xff] 0.0
      %126 = vst [vmem:[#allocation4 + $0xa0] sm:$0xff] 0.0
      %127 = vst [vmem:[#allocation4 + $0xa8] sm:$0xff] 0.0
      %128 = vst [vmem:[#allocation4 + $0xb0] sm:$0xff] 0.0
      %129 = vst [vmem:[#allocation4 + $0xb8] sm:$0xff] 0.0
      %130 = vst [vmem:[#allocation4 + $0xc0] sm:$0xff] 0.0
      %131 = vst [vmem:[#allocation4 + $0xc8] sm:$0xff] 0.0
      %132 = vst [vmem:[#allocation4 + $0xd0] sm:$0xff] 0.0
      %133 = vst [vmem:[#allocation4 + $0xd8] sm:$0xff] 0.0
      %134 = vst [vmem:[#allocation4 + $0xe0] sm:$0xff] 0.0
      %135 = vst [vmem:[#allocation4 + $0xe8] sm:$0xff] 0.0
      %136 = vst [vmem:[#allocation4 + $0xf0] sm:$0xff] 0.0
      %137 = vst [vmem:[#allocation4 + $0xf8] sm:$0xff] 0.0
    $region53: #{tpu_custom_call.1} parent=1 // pred_fallthru
      _
    %v138 = vld [vmem:[#allocation5] sm:$0xff]
    %v139 = vld [vmem:[#allocation5 + $0x8] sm:$0xff]
    %v140 = vld [vmem:[#allocation5 + $0x10] sm:$0xff]
    %v141 = vld [vmem:[#allocation5 + $0x18] sm:$0xff]
    %v142 = vld [vmem:[#allocation5 + $0x20] sm:$0xff]
    %v143 = vld [vmem:[#allocation5 + $0x28] sm:$0xff]
    %144 = vst [vmem:[#allocation2] sm:$0xff] %v138
    %145 = vst [vmem:[#allocation2 + $0x8] sm:$0xff] %v139
    %146 = vst [vmem:[#allocation2 + $0x10] sm:$0xff] %v140
    %147 = vst [vmem:[#allocation2 + $0x18] sm:$0xff] %v141
    %148 = vst [vmem:[#allocation2 + $0x20] sm:$0xff] %v142
    %149 = vst [vmem:[#allocation2 + $0x28] sm:$0xff] %v143
    %v150 = vld [vmem:[#allocation5] sm:$0xff]
    %v151 = vld [vmem:[#allocation5 + $0x8] sm:$0xff]
    %v152 = vld [vmem:[#allocation5 + $0x10] sm:$0xff]
    %v153 = vld [vmem:[#allocation5 + $0x18] sm:$0xff]
    %v154 = vld [vmem:[#allocation5 + $0x20] sm:$0xff]
    %v155 = vld [vmem:[#allocation5 + $0x28] sm:$0xff]
    %v156 = vld [vmem:[#allocation5 + $0x30] sm:$0xff]
    %164 = vrot.lane.b32.xlu0 %v150, 127
    %v165 = vpop.permute.xlu0 %164
    %166 = vrot.lane.b32.xlu0 %v151, 127
    %v167 = vpop.permute.xlu0 %166
    %168 = vrot.lane.b32.xlu0 %v152, 127
    %v169 = vpop.permute.xlu0 %168
    %170 = vrot.lane.b32.xlu0 %v153, 127
    %v171 = vpop.permute.xlu0 %170
    %172 = vrot.lane.b32.xlu0 %v154, 127
    %v173 = vpop.permute.xlu0 %172
    %174 = vrot.lane.b32.xlu0 %v155, 127
    %v175 = vpop.permute.xlu0 %174
    %176 = vrot.lane.b32.xlu0 %v156, 127
    %v177 = vpop.permute.xlu0 %176
    %vm178 = vcmask 1039360
    %v179 = vsel %vm178, %v165, %v167
    %v180 = vsel %vm178, %v167, %v169
    %v181 = vsel %vm178, %v169, %v171
    %v182 = vsel %vm178, %v171, %v173
    %v183 = vsel %vm178, %v173, %v175
    %v184 = vsel %vm178, %v175, %v177
    %191 = vst [vmem:[#allocation2 + $0x30] sm:$0xff] %v179
    %192 = vst [vmem:[#allocation2 + $0x38] sm:$0xff] %v180
    %193 = vst [vmem:[#allocation2 + $0x40] sm:$0xff] %v181
    %194 = vst [vmem:[#allocation2 + $0x48] sm:$0xff] %v182
    %195 = vst [vmem:[#allocation2 + $0x50] sm:$0xff] %v183
    %196 = vst [vmem:[#allocation2 + $0x58] sm:$0xff] %v184
    %v197 = vld [vmem:[#allocation5] sm:$0xff]
    %v198 = vld [vmem:[#allocation5 + $0x8] sm:$0xff]
    %v199 = vld [vmem:[#allocation5 + $0x10] sm:$0xff]
    %v200 = vld [vmem:[#allocation5 + $0x18] sm:$0xff]
    %v201 = vld [vmem:[#allocation5 + $0x20] sm:$0xff]
    %v202 = vld [vmem:[#allocation5 + $0x28] sm:$0xff]
    %v203 = vld [vmem:[#allocation5 + $0x30] sm:$0xff]
    %211 = vrot.lane.b32.xlu0 %v197, 126
    %v212 = vpop.permute.xlu0 %211
    %213 = vrot.lane.b32.xlu0 %v198, 126
    %v214 = vpop.permute.xlu0 %213
    %215 = vrot.lane.b32.xlu0 %v199, 126
    %v216 = vpop.permute.xlu0 %215
    %217 = vrot.lane.b32.xlu0 %v200, 126
    %v218 = vpop.permute.xlu0 %217
    %219 = vrot.lane.b32.xlu0 %v201, 126
    %v220 = vpop.permute.xlu0 %219
    %221 = vrot.lane.b32.xlu0 %v202, 126
    %v222 = vpop.permute.xlu0 %221
    %223 = vrot.lane.b32.xlu0 %v203, 126
    %v224 = vpop.permute.xlu0 %223
    %vm225 = vcmask 1031168
    %v226 = vsel %vm225, %v212, %v214
    %v227 = vsel %vm225, %v214, %v216
    %v228 = vsel %vm225, %v216, %v218
    %v229 = vsel %vm225, %v218, %v220
    %v230 = vsel %vm225, %v220, %v222
    %v231 = vsel %vm225, %v222, %v224
    %238 = vst [vmem:[#allocation2 + $0x60] sm:$0xff] %v226
    %239 = vst [vmem:[#allocation2 + $0x68] sm:$0xff] %v227
    %240 = vst [vmem:[#allocation2 + $0x70] sm:$0xff] %v228
    %241 = vst [vmem:[#allocation2 + $0x78] sm:$0xff] %v229
    %242 = vst [vmem:[#allocation2 + $0x80] sm:$0xff] %v230
    %243 = vst [vmem:[#allocation2 + $0x88] sm:$0xff] %v231
    %v244 = vld [vmem:[#allocation5] sm:$0xff]
    %v245 = vld [vmem:[#allocation5 + $0x8] sm:$0xff]
    %v246 = vld [vmem:[#allocation5 + $0x10] sm:$0xff]
    %v247 = vld [vmem:[#allocation5 + $0x18] sm:$0xff]
    %v248 = vld [vmem:[#allocation5 + $0x20] sm:$0xff]
    %v249 = vld [vmem:[#allocation5 + $0x28] sm:$0xff]
    %v250 = vld [vmem:[#allocation5 + $0x30] sm:$0xff]
    %258 = vrot.lane.b32.xlu0 %v244, 110
    %v259 = vpop.permute.xlu0 %258
    %260 = vrot.lane.b32.xlu0 %v245, 110
    %v261 = vpop.permute.xlu0 %260
    %262 = vrot.lane.b32.xlu0 %v246, 110
    %v263 = vpop.permute.xlu0 %262
    %264 = vrot.lane.b32.xlu0 %v247, 110
    %v265 = vpop.permute.xlu0 %264
    %266 = vrot.lane.b32.xlu0 %v248, 110
    %v267 = vpop.permute.xlu0 %266
    %268 = vrot.lane.b32.xlu0 %v249, 110
    %v269 = vpop.permute.xlu0 %268
    %270 = vrot.lane.b32.xlu0 %v250, 110
    %v271 = vpop.permute.xlu0 %270
    %vm272 = vcmask 900096
    %v273 = vsel %vm272, %v259, %v261
    %v274 = vsel %vm272, %v261, %v263
    %v275 = vsel %vm272, %v263, %v265
    %v276 = vsel %vm272, %v265, %v267
    %v277 = vsel %vm272, %v267, %v269
    %v278 = vsel %vm272, %v269, %v271
    %285 = vst [vmem:[#allocation2 + $0x90] sm:$0xff] %v273
    %286 = vst [vmem:[#allocation2 + $0x98] sm:$0xff] %v274
    %287 = vst [vmem:[#allocation2 + $0xa0] sm:$0xff] %v275
    %288 = vst [vmem:[#allocation2 + $0xa8] sm:$0xff] %v276
    %289 = vst [vmem:[#allocation2 + $0xb0] sm:$0xff] %v277
    %290 = vst [vmem:[#allocation2 + $0xb8] sm:$0xff] %v278
    %v291 = vld [vmem:[#allocation5] sm:$0xff]
    %v292 = vld [vmem:[#allocation5 + $0x8] sm:$0xff]
    %v293 = vld [vmem:[#allocation5 + $0x10] sm:$0xff]
    %v294 = vld [vmem:[#allocation5 + $0x18] sm:$0xff]
    %v295 = vld [vmem:[#allocation5 + $0x20] sm:$0xff]
    %v296 = vld [vmem:[#allocation5 + $0x28] sm:$0xff]
    %v297 = vld [vmem:[#allocation5 + $0x30] sm:$0xff]
    %305 = vrot.lane.b32.xlu0 %v291, 109
    %v306 = vpop.permute.xlu0 %305
    %307 = vrot.lane.b32.xlu0 %v292, 109
    %v308 = vpop.permute.xlu0 %307
    %309 = vrot.lane.b32.xlu0 %v293, 109
    %v310 = vpop.permute.xlu0 %309
    %311 = vrot.lane.b32.xlu0 %v294, 109
    %v312 = vpop.permute.xlu0 %311
    %313 = vrot.lane.b32.xlu0 %v295, 109
    %v314 = vpop.permute.xlu0 %313
    %315 = vrot.lane.b32.xlu0 %v296, 109
    %v316 = vpop.permute.xlu0 %315
    %317 = vrot.lane.b32.xlu0 %v297, 109
    %v318 = vpop.permute.xlu0 %317
    %vm319 = vcmask 891904
    %v320 = vsel %vm319, %v306, %v308
    %v321 = vsel %vm319, %v308, %v310
    %v322 = vsel %vm319, %v310, %v312
    %v323 = vsel %vm319, %v312, %v314
    %v324 = vsel %vm319, %v314, %v316
    %v325 = vsel %vm319, %v316, %v318
    %332 = vst [vmem:[#allocation2 + $0xc0] sm:$0xff] %v320
    %333 = vst [vmem:[#allocation2 + $0xc8] sm:$0xff] %v321
    %334 = vst [vmem:[#allocation2 + $0xd0] sm:$0xff] %v322
    %335 = vst [vmem:[#allocation2 + $0xd8] sm:$0xff] %v323
    %336 = vst [vmem:[#allocation2 + $0xe0] sm:$0xff] %v324
    %337 = vst [vmem:[#allocation2 + $0xe8] sm:$0xff] %v325
    %v338 = vld [vmem:[#allocation5] sm:$0xff]
    %v339 = vld [vmem:[#allocation5 + $0x8] sm:$0xff]
    %v340 = vld [vmem:[#allocation5 + $0x10] sm:$0xff]
    %v341 = vld [vmem:[#allocation5 + $0x18] sm:$0xff]
    %v342 = vld [vmem:[#allocation5 + $0x20] sm:$0xff]
    %v343 = vld [vmem:[#allocation5 + $0x28] sm:$0xff]
    %v344 = vld [vmem:[#allocation5 + $0x30] sm:$0xff]
    %352 = vrot.lane.b32.xlu0 %v338, 108
    %v353 = vpop.permute.xlu0 %352
    %354 = vrot.lane.b32.xlu0 %v339, 108
    %v355 = vpop.permute.xlu0 %354
    %356 = vrot.lane.b32.xlu0 %v340, 108
    %v357 = vpop.permute.xlu0 %356
    %358 = vrot.lane.b32.xlu0 %v341, 108
    %v359 = vpop.permute.xlu0 %358
    %360 = vrot.lane.b32.xlu0 %v342, 108
    %v361 = vpop.permute.xlu0 %360
    %362 = vrot.lane.b32.xlu0 %v343, 108
    %v363 = vpop.permute.xlu0 %362
    %364 = vrot.lane.b32.xlu0 %v344, 108
    %v365 = vpop.permute.xlu0 %364
    %vm366 = vcmask 883712
    %v367 = vsel %vm366, %v353, %v355
    %v368 = vsel %vm366, %v355, %v357
    %v369 = vsel %vm366, %v357, %v359
    %v370 = vsel %vm366, %v359, %v361
    %v371 = vsel %vm366, %v361, %v363
    %v372 = vsel %vm366, %v363, %v365
    %379 = vst [vmem:[#allocation2 + $0xf0] sm:$0xff] %v367
    %380 = vst [vmem:[#allocation2 + $0xf8] sm:$0xff] %v368
    %381 = vst [vmem:[#allocation2 + $0x100] sm:$0xff] %v369
    %382 = vst [vmem:[#allocation2 + $0x108] sm:$0xff] %v370
    %383 = vst [vmem:[#allocation2 + $0x110] sm:$0xff] %v371
    %384 = vst [vmem:[#allocation2 + $0x118] sm:$0xff] %v372
    %v385 = vld [vmem:[#allocation5] sm:$0xff]
    %v386 = vld [vmem:[#allocation5 + $0x8] sm:$0xff]
    %v387 = vld [vmem:[#allocation5 + $0x10] sm:$0xff]
    %v388 = vld [vmem:[#allocation5 + $0x18] sm:$0xff]
    %v389 = vld [vmem:[#allocation5 + $0x20] sm:$0xff]
    %v390 = vld [vmem:[#allocation5 + $0x28] sm:$0xff]
    %v391 = vld [vmem:[#allocation5 + $0x30] sm:$0xff]
    %399 = vrot.lane.b32.xlu0 %v385, 92
    %v400 = vpop.permute.xlu0 %399
    %401 = vrot.lane.b32.xlu0 %v386, 92
    %v402 = vpop.permute.xlu0 %401
    %403 = vrot.lane.b32.xlu0 %v387, 92
    %v404 = vpop.permute.xlu0 %403
    %405 = vrot.lane.b32.xlu0 %v388, 92
    %v406 = vpop.permute.xlu0 %405
    %407 = vrot.lane.b32.xlu0 %v389, 92
    %v408 = vpop.permute.xlu0 %407
    %409 = vrot.lane.b32.xlu0 %v390, 92
    %v410 = vpop.permute.xlu0 %409
    %411 = vrot.lane.b32.xlu0 %v391, 92
    %v412 = vpop.permute.xlu0 %411
    %vm413 = vcmask 752640
    %v414 = vsel %vm413, %v400, %v402
    %v415 = vsel %vm413, %v402, %v404
    %v416 = vsel %vm413, %v404, %v406
    %v417 = vsel %vm413, %v406, %v408
    %v418 = vsel %vm413, %v408, %v410
    %v419 = vsel %vm413, %v410, %v412
    %426 = vst [vmem:[#allocation2 + $0x120] sm:$0xff] %v414
    %427 = vst [vmem:[#allocation2 + $0x128] sm:$0xff] %v415
    %428 = vst [vmem:[#allocation2 + $0x130] sm:$0xff] %v416
    %429 = vst [vmem:[#allocation2 + $0x138] sm:$0xff] %v417
    %430 = vst [vmem:[#allocation2 + $0x140] sm:$0xff] %v418
    %431 = vst [vmem:[#allocation2 + $0x148] sm:$0xff] %v419
    %v432 = vld [vmem:[#allocation5] sm:$0xff]
    %v433 = vld [vmem:[#allocation5 + $0x8] sm:$0xff]
    %v434 = vld [vmem:[#allocation5 + $0x10] sm:$0xff]
    %v435 = vld [vmem:[#allocation5 + $0x18] sm:$0xff]
    %v436 = vld [vmem:[#allocation5 + $0x20] sm:$0xff]
    %v437 = vld [vmem:[#allocation5 + $0x28] sm:$0xff]
    %v438 = vld [vmem:[#allocation5 + $0x30] sm:$0xff]
    %446 = vrot.lane.b32.xlu0 %v432, 91
    %v447 = vpop.permute.xlu0 %446
    %448 = vrot.lane.b32.xlu0 %v433, 91
    %v449 = vpop.permute.xlu0 %448
    %450 = vrot.lane.b32.xlu0 %v434, 91
    %v451 = vpop.permute.xlu0 %450
    %452 = vrot.lane.b32.xlu0 %v435, 91
    %v453 = vpop.permute.xlu0 %452
    %454 = vrot.lane.b32.xlu0 %v436, 91
    %v455 = vpop.permute.xlu0 %454
    %456 = vrot.lane.b32.xlu0 %v437, 91
    %v457 = vpop.permute.xlu0 %456
    %458 = vrot.lane.b32.xlu0 %v438, 91
    %v459 = vpop.permute.xlu0 %458
    %vm460 = vcmask 744448
    %v461 = vsel %vm460, %v447, %v449
    %v462 = vsel %vm460, %v449, %v451
    %v463 = vsel %vm460, %v451, %v453
    %v464 = vsel %vm460, %v453, %v455
    %v465 = vsel %vm460, %v455, %v457
    %v466 = vsel %vm460, %v457, %v459
    %473 = vst [vmem:[#allocation2 + $0x150] sm:$0xff] %v461
    %474 = vst [vmem:[#allocation2 + $0x158] sm:$0xff] %v462
    %475 = vst [vmem:[#allocation2 + $0x160] sm:$0xff] %v463
    %476 = vst [vmem:[#allocation2 + $0x168] sm:$0xff] %v464
    %477 = vst [vmem:[#allocation2 + $0x170] sm:$0xff] %v465
    %478 = vst [vmem:[#allocation2 + $0x178] sm:$0xff] %v466
    %v479 = vld [vmem:[#allocation5] sm:$0xff]
    %v480 = vld [vmem:[#allocation5 + $0x8] sm:$0xff]
    %v481 = vld [vmem:[#allocation5 + $0x10] sm:$0xff]
    %v482 = vld [vmem:[#allocation5 + $0x18] sm:$0xff]
    %v483 = vld [vmem:[#allocation5 + $0x20] sm:$0xff]
    %v484 = vld [vmem:[#allocation5 + $0x28] sm:$0xff]
    %v485 = vld [vmem:[#allocation5 + $0x30] sm:$0xff]
    %493 = vrot.lane.b32.xlu0 %v479, 90
    %v494 = vpop.permute.xlu0 %493
    %495 = vrot.lane.b32.xlu0 %v480, 90
    %v496 = vpop.permute.xlu0 %495
    %497 = vrot.lane.b32.xlu0 %v481, 90
    %v498 = vpop.permute.xlu0 %497
    %499 = vrot.lane.b32.xlu0 %v482, 90
    %v500 = vpop.permute.xlu0 %499
    %501 = vrot.lane.b32.xlu0 %v483, 90
    %v502 = vpop.permute.xlu0 %501
    %503 = vrot.lane.b32.xlu0 %v484, 90
    %v504 = vpop.permute.xlu0 %503
    %505 = vrot.lane.b32.xlu0 %v485, 90
    %v506 = vpop.permute.xlu0 %505
    %vm507 = vcmask 736256
    %v508 = vsel %vm507, %v494, %v496
    %v509 = vsel %vm507, %v496, %v498
    %v510 = vsel %vm507, %v498, %v500
    %v511 = vsel %vm507, %v500, %v502
    %v512 = vsel %vm507, %v502, %v504
    %v513 = vsel %vm507, %v504, %v506
    %520 = vst [vmem:[#allocation2 + $0x180] sm:$0xff] %v508
    %521 = vst [vmem:[#allocation2 + $0x188] sm:$0xff] %v509
    %522 = vst [vmem:[#allocation2 + $0x190] sm:$0xff] %v510
    %523 = vst [vmem:[#allocation2 + $0x198] sm:$0xff] %v511
    %524 = vst [vmem:[#allocation2 + $0x1a0] sm:$0xff] %v512
    %525 = vst [vmem:[#allocation2 + $0x1a8] sm:$0xff] %v513
    %v526 = vld [vmem:[#allocation10] sm:$0xff]
    %v527 = vld [vmem:[#allocation10 + $0x8] sm:$0xff]
    %v528 = vld [vmem:[#allocation10 + $0x10] sm:$0xff]
    %v529 = vld [vmem:[#allocation10 + $0x18] sm:$0xff]
    %v530 = vld [vmem:[#allocation2] sm:$0xff]
    %v531 = vld [vmem:[#allocation2 + $0x8] sm:$0xff]
    %v532 = vld [vmem:[#allocation2 + $0x10] sm:$0xff]
    %v533 = vld [vmem:[#allocation2 + $0x18] sm:$0xff]
    %v534 = vld [vmem:[#allocation2 + $0x20] sm:$0xff]
    %v535 = vld [vmem:[#allocation2 + $0x28] sm:$0xff]
    %v536 = vld [vmem:[#allocation2 + $0x30] sm:$0xff]
    %v537 = vld [vmem:[#allocation2 + $0x38] sm:$0xff]
    %v538 = vld [vmem:[#allocation2 + $0x40] sm:$0xff]
    %v539 = vld [vmem:[#allocation2 + $0x48] sm:$0xff]
    %v540 = vld [vmem:[#allocation2 + $0x50] sm:$0xff]
    %v541 = vld [vmem:[#allocation2 + $0x58] sm:$0xff]
    %v542 = vld [vmem:[#allocation2 + $0x60] sm:$0xff]
    %v543 = vld [vmem:[#allocation2 + $0x68] sm:$0xff]
    %v544 = vld [vmem:[#allocation2 + $0x70] sm:$0xff]
    %v545 = vld [vmem:[#allocation2 + $0x78] sm:$0xff]
    %v546 = vld [vmem:[#allocation2 + $0x80] sm:$0xff]
    %v547 = vld [vmem:[#allocation2 + $0x88] sm:$0xff]
    %v548 = vld [vmem:[#allocation2 + $0x90] sm:$0xff]
    %v549 = vld [vmem:[#allocation2 + $0x98] sm:$0xff]
    %v550 = vld [vmem:[#allocation2 + $0xa0] sm:$0xff]
    %v551 = vld [vmem:[#allocation2 + $0xa8] sm:$0xff]
    %v552 = vld [vmem:[#allocation2 + $0xb0] sm:$0xff]
    %v553 = vld [vmem:[#allocation2 + $0xb8] sm:$0xff]
    %v554 = vld [vmem:[#allocation2 + $0xc0] sm:$0xff]
    %v555 = vld [vmem:[#allocation2 + $0xc8] sm:$0xff]
    %v556 = vld [vmem:[#allocation2 + $0xd0] sm:$0xff]
    %v557 = vld [vmem:[#allocation2 + $0xd8] sm:$0xff]
    %v558 = vld [vmem:[#allocation2 + $0xe0] sm:$0xff]
    %v559 = vld [vmem:[#allocation2 + $0xe8] sm:$0xff]
    %v560 = vld [vmem:[#allocation2 + $0xf0] sm:$0xff]
    %v561 = vld [vmem:[#allocation2 + $0xf8] sm:$0xff]
    %v562 = vld [vmem:[#allocation2 + $0x100] sm:$0xff]
    %v563 = vld [vmem:[#allocation2 + $0x108] sm:$0xff]
    %v564 = vld [vmem:[#allocation2 + $0x110] sm:$0xff]
    %v565 = vld [vmem:[#allocation2 + $0x118] sm:$0xff]
    %v566 = vld [vmem:[#allocation2 + $0x120] sm:$0xff]
    %v567 = vld [vmem:[#allocation2 + $0x128] sm:$0xff]
    %v568 = vld [vmem:[#allocation2 + $0x130] sm:$0xff]
    %v569 = vld [vmem:[#allocation2 + $0x138] sm:$0xff]
    %v570 = vld [vmem:[#allocation2 + $0x140] sm:$0xff]
    %v571 = vld [vmem:[#allocation2 + $0x148] sm:$0xff]
    %v572 = vld [vmem:[#allocation2 + $0x150] sm:$0xff]
    %v573 = vld [vmem:[#allocation2 + $0x158] sm:$0xff]
    %v574 = vld [vmem:[#allocation2 + $0x160] sm:$0xff]
    %v575 = vld [vmem:[#allocation2 + $0x168] sm:$0xff]
    %v576 = vld [vmem:[#allocation2 + $0x170] sm:$0xff]
    %v577 = vld [vmem:[#allocation2 + $0x178] sm:$0xff]
    %v578 = vld [vmem:[#allocation2 + $0x180] sm:$0xff]
    %v579 = vld [vmem:[#allocation2 + $0x188] sm:$0xff]
    %v580 = vld [vmem:[#allocation2 + $0x190] sm:$0xff]
    %v581 = vld [vmem:[#allocation2 + $0x198] sm:$0xff]
    %v582 = vld [vmem:[#allocation2 + $0x1a0] sm:$0xff]
    %v583 = vld [vmem:[#allocation2 + $0x1a8] sm:$0xff]
    %v584 = vld [vmem:[#allocation11] sm:$0xff]
    %v585 = vld [vmem:[#allocation11 + $0x8] sm:$0xff]
    %v586 = vld [vmem:[#allocation11 + $0x10] sm:$0xff]
    %v587 = vld [vmem:[#allocation11 + $0x18] sm:$0xff]
    %589 = vset.pattern.permute.xlu0 0
    %590 = vperm.xlu0 %589, %v584
    %v591 = vpop.permute.xlu0 %590
    %594 = vset.pattern.permute.xlu0 0
    %595 = vperm.xlu0 %594, %v585
    %v596 = vpop.permute.xlu0 %595
    %599 = vset.pattern.permute.xlu0 0
    %600 = vperm.xlu0 %599, %v586
    %v601 = vpop.permute.xlu0 %600
    %604 = vset.pattern.permute.xlu0 0
    %605 = vperm.xlu0 %604, %v587
    %v606 = vpop.permute.xlu0 %605
    %vm608 = vcmask 588800
    %v610 = vsel %vm608, %v526, 0
    %v613 = vsel %vm608, %v527, 0
    %v616 = vsel %vm608, %v528, 0
    %v619 = vsel %vm608, %v529, 0
    %621 = vmatprep.subr.mxu0 %v531
    %622 = vmatpush1.msra.mxu0 %v530
    %623 = vmatprep.subr.mxu0 %v537
    %624 = vmatpush1.msra.mxu0 %v536
    %625 = vmatprep.subr.mxu0 %v543
    %626 = vmatpush1.msra.mxu0 %v542
    %627 = vmatprep.subr.mxu0 %v549
    %628 = vmatpush1.msra.mxu0 %v548
    %629 = vmatprep.subr.mxu0 %v555
    %630 = vmatpush1.msra.mxu0 %v554
    %631 = vmatprep.subr.mxu0 %v561
    %632 = vmatpush1.msra.mxu0 %v560
    %633 = vmatprep.subr.mxu0 %v567
    %634 = vmatpush1.msra.mxu0 %v566
    %635 = vmatprep.subr.mxu0 %v573
    %636 = vmatpush1.msra.mxu0 %v572
    %637 = vmatprep.subr.mxu0 %v579
    %638 = vmatpush1.msra.mxu0 %v578
    %639 = vmatprep.subr.mxu0 0.0
    %640 = vmatpush1.msra.mxu0 0.0
    %641 = vmatprep.subr.mxu0 0.0
    %642 = vmatpush1.msra.mxu0 0.0
    %643 = vmatprep.subr.mxu0 0.0
    %644 = vmatpush1.msra.mxu0 0.0
    %645 = vmatprep.subr.mxu0 0.0
    %646 = vmatpush1.msra.mxu0 0.0
    %647 = vmatprep.subr.mxu0 0.0
    %648 = vmatpush1.msra.mxu0 0.0
    %649 = vmatprep.subr.mxu0 0.0
    %650 = vmatpush1.msra.mxu0 0.0
    %651 = vmatprep.subr.mxu0 0.0
    %652 = vmatpush1.msra.mxu0 0.0
    %653 = vmatprep.subr.mxu0 0.0
    %654 = vmatpush1.msra.mxu0 0.0
    %655 = vmatprep.subr.mxu0 0.0
    %656 = vmatpush1.msra.mxu0 0.0
    %657 = vmatprep.subr.mxu0 0.0
    %658 = vmatpush1.msra.mxu0 0.0
    %659 = vmatprep.subr.mxu0 0.0
    %660 = vmatpush1.msra.mxu0 0.0
    %661 = vmatprep.subr.mxu0 0.0
    %662 = vmatpush1.msra.mxu0 0.0
    %663 = vmatprep.subr.mxu0 0.0
    %664 = vmatpush1.msra.mxu0 0.0
    %665 = vmatprep.subr.mxu0 0.0
    %666 = vmatpush1.msra.mxu0 0.0
    %667 = vmatprep.subr.mxu0 0.0
    %668 = vmatpush1.msra.mxu0 0.0
    %669 = vmatprep.subr.mxu0 0.0
    %670 = vmatpush1.msra.mxu0 0.0
    %671 = vmatprep.subr.mxu0 0.0
    %672 = vmatpush1.msra.mxu0 0.0
    %673 = vmatprep.subr.mxu0 0.0
    %674 = vmatpush1.msra.mxu0 0.0
    %675 = vmatprep.subr.mxu0 0.0
    %676 = vmatpush1.msra.mxu0 0.0
    %677 = vmatprep.subr.mxu0 0.0
    %678 = vmatpush1.msra.mxu0 0.0
    %679 = vmatprep.subr.mxu0 0.0
    %680 = vmatpush1.msra.mxu0 0.0
    %681 = vmatprep.subr.mxu0 0.0
    %682 = vmatpush1.msra.mxu0 0.0
    %683 = vmatprep.subr.mxu0 0.0
    %684 = vmatpush1.msra.mxu0 0.0
    %685 = vmatprep.mubr.f32.mxu0 0.0
    %686 = vmatmul.mubr.f32.gmra.mrb[0].mxu0 %v610
    %v687 = vpop.f32.mrb[0].mxu0
    %v688 = vadd.f32 %v591, %v687
    %v689 = vpop.f32.mrb[0].mxu0
    %v690 = vadd.f32 %v591, %v689
    %691 = vmatprep.mubr.f32.mxu0 0.0
    %692 = vmatmul.mubr.f32.gmra.mrb[0].mxu0 %v613
    %v693 = vpop.f32.mrb[0].mxu0
    %v694 = vadd.f32 %v596, %v693
    %v695 = vpop.f32.mrb[0].mxu0
    %v696 = vadd.f32 %v596, %v695
    %697 = vmatprep.mubr.f32.mxu0 0.0
    %698 = vmatmul.mubr.f32.gmra.mrb[0].mxu0 %v616
    %v699 = vpop.f32.mrb[0].mxu0
    %v700 = vadd.f32 %v601, %v699
    %v701 = vpop.f32.mrb[0].mxu0
    %v702 = vadd.f32 %v601, %v701
    %703 = vmatprep.mubr.f32.mxu0 0.0
    %704 = vmatmul.mubr.f32.gmra.mrb[0].mxu0 %v619
    %v705 = vpop.f32.mrb[0].mxu0
    %v706 = vadd.f32 %v606, %v705
    %v707 = vpop.f32.mrb[0].mxu0
    %v708 = vadd.f32 %v606, %v707
    %709 = vdwg.mxu0
    %710 = vmatprep.subr.mxu0 %v533
    %711 = vmatpush1.msra.mxu0 %v532
    %712 = vmatprep.subr.mxu0 %v539
    %713 = vmatpush1.msra.mxu0 %v538
    %714 = vmatprep.subr.mxu0 %v545
    %715 = vmatpush1.msra.mxu0 %v544
    %716 = vmatprep.subr.mxu0 %v551
    %717 = vmatpush1.msra.mxu0 %v550
    %718 = vmatprep.subr.mxu0 %v557
    %719 = vmatpush1.msra.mxu0 %v556
    %720 = vmatprep.subr.mxu0 %v563
    %721 = vmatpush1.msra.mxu0 %v562
    %722 = vmatprep.subr.mxu0 %v569
    %723 = vmatpush1.msra.mxu0 %v568
    %724 = vmatprep.subr.mxu0 %v575
    %725 = vmatpush1.msra.mxu0 %v574
    %726 = vmatprep.subr.mxu0 %v581
    %727 = vmatpush1.msra.mxu0 %v580
    %728 = vmatprep.subr.mxu0 0.0
    %729 = vmatpush1.msra.mxu0 0.0
    %730 = vmatprep.subr.mxu0 0.0
    %731 = vmatpush1.msra.mxu0 0.0
    %732 = vmatprep.subr.mxu0 0.0
    %733 = vmatpush1.msra.mxu0 0.0
    %734 = vmatprep.subr.mxu0 0.0
    %735 = vmatpush1.msra.mxu0 0.0
    %736 = vmatprep.subr.mxu0 0.0
    %737 = vmatpush1.msra.mxu0 0.0
    %738 = vmatprep.subr.mxu0 0.0
    %739 = vmatpush1.msra.mxu0 0.0
    %740 = vmatprep.subr.mxu0 0.0
    %741 = vmatpush1.msra.mxu0 0.0
    %742 = vmatprep.subr.mxu0 0.0
    %743 = vmatpush1.msra.mxu0 0.0
    %744 = vmatprep.subr.mxu0 0.0
    %745 = vmatpush1.msra.mxu0 0.0
    %746 = vmatprep.subr.mxu0 0.0
    %747 = vmatpush1.msra.mxu0 0.0
    %748 = vmatprep.subr.mxu0 0.0
    %749 = vmatpush1.msra.mxu0 0.0
    %750 = vmatprep.subr.mxu0 0.0
    %751 = vmatpush1.msra.mxu0 0.0
    %752 = vmatprep.subr.mxu0 0.0
    %753 = vmatpush1.msra.mxu0 0.0
    %754 = vmatprep.subr.mxu0 0.0
    %755 = vmatpush1.msra.mxu0 0.0
    %756 = vmatprep.subr.mxu0 0.0
    %757 = vmatpush1.msra.mxu0 0.0
    %758 = vmatprep.subr.mxu0 0.0
    %759 = vmatpush1.msra.mxu0 0.0
    %760 = vmatprep.subr.mxu0 0.0
    %761 = vmatpush1.msra.mxu0 0.0
    %762 = vmatprep.subr.mxu0 0.0
    %763 = vmatpush1.msra.mxu0 0.0
    %764 = vmatprep.subr.mxu0 0.0
    %765 = vmatpush1.msra.mxu0 0.0
    %766 = vmatprep.subr.mxu0 0.0
    %767 = vmatpush1.msra.mxu0 0.0
    %768 = vmatprep.subr.mxu0 0.0
    %769 = vmatpush1.msra.mxu0 0.0
    %770 = vmatprep.subr.mxu0 0.0
    %771 = vmatpush1.msra.mxu0 0.0
    %772 = vmatprep.subr.mxu0 0.0
    %773 = vmatpush1.msra.mxu0 0.0
    %774 = vmatprep.mubr.f32.mxu0 0.0
    %775 = vmatmul.mubr.f32.gmra.mrb[0].mxu0 %v610
    %v776 = vpop.f32.mrb[0].mxu0
    %v777 = vadd.f32 %v591, %v776
    %v778 = vpop.f32.mrb[0].mxu0
    %v779 = vadd.f32 %v591, %v778
    %780 = vmatprep.mubr.f32.mxu0 0.0
    %781 = vmatmul.mubr.f32.gmra.mrb[0].mxu0 %v613
    %v782 = vpop.f32.mrb[0].mxu0
    %v783 = vadd.f32 %v596, %v782
    %v784 = vpop.f32.mrb[0].mxu0
    %v785 = vadd.f32 %v596, %v784
    %786 = vmatprep.mubr.f32.mxu0 0.0
    %787 = vmatmul.mubr.f32.gmra.mrb[0].mxu0 %v616
    %v788 = vpop.f32.mrb[0].mxu0
    %v789 = vadd.f32 %v601, %v788
    %v790 = vpop.f32.mrb[0].mxu0
    %v791 = vadd.f32 %v601, %v790
    %792 = vmatprep.mubr.f32.mxu0 0.0
    %793 = vmatmul.mubr.f32.gmra.mrb[0].mxu0 %v619
    %v794 = vpop.f32.mrb[0].mxu0
    %v795 = vadd.f32 %v606, %v794
    %v796 = vpop.f32.mrb[0].mxu0
    %v797 = vadd.f32 %v606, %v796
    %798 = vdwg.mxu0
    %799 = vmatprep.subr.mxu0 %v535
    %800 = vmatpush1.msra.mxu0 %v534
    %801 = vmatprep.subr.mxu0 %v541
    %802 = vmatpush1.msra.mxu0 %v540
    %803 = vmatprep.subr.mxu0 %v547
    %804 = vmatpush1.msra.mxu0 %v546
    %805 = vmatprep.subr.mxu0 %v553
    %806 = vmatpush1.msra.mxu0 %v552
    %807 = vmatprep.subr.mxu0 %v559
    %808 = vmatpush1.msra.mxu0 %v558
    %809 = vmatprep.subr.mxu0 %v565
    %810 = vmatpush1.msra.mxu0 %v564
    %811 = vmatprep.subr.mxu0 %v571
    %812 = vmatpush1.msra.mxu0 %v570
    %813 = vmatprep.subr.mxu0 %v577
    %814 = vmatpush1.msra.mxu0 %v576
    %815 = vmatprep.subr.mxu0 %v583
    %816 = vmatpush1.msra.mxu0 %v582
    %817 = vmatprep.subr.mxu0 0.0
    %818 = vmatpush1.msra.mxu0 0.0
    %819 = vmatprep.subr.mxu0 0.0
    %820 = vmatpush1.msra.mxu0 0.0
    %821 = vmatprep.subr.mxu0 0.0
    %822 = vmatpush1.msra.mxu0 0.0
    %823 = vmatprep.subr.mxu0 0.0
    %824 = vmatpush1.msra.mxu0 0.0
    %825 = vmatprep.subr.mxu0 0.0
    %826 = vmatpush1.msra.mxu0 0.0
    %827 = vmatprep.subr.mxu0 0.0
    %828 = vmatpush1.msra.mxu0 0.0
    %829 = vmatprep.subr.mxu0 0.0
    %830 = vmatpush1.msra.mxu0 0.0
    %831 = vmatprep.subr.mxu0 0.0
    %832 = vmatpush1.msra.mxu0 0.0
    %833 = vmatprep.subr.mxu0 0.0
    %834 = vmatpush1.msra.mxu0 0.0
    %835 = vmatprep.subr.mxu0 0.0
    %836 = vmatpush1.msra.mxu0 0.0
    %837 = vmatprep.subr.mxu0 0.0
    %838 = vmatpush1.msra.mxu0 0.0
    %839 = vmatprep.subr.mxu0 0.0
    %840 = vmatpush1.msra.mxu0 0.0
    %841 = vmatprep.subr.mxu0 0.0
    %842 = vmatpush1.msra.mxu0 0.0
    %843 = vmatprep.subr.mxu0 0.0
    %844 = vmatpush1.msra.mxu0 0.0
    %845 = vmatprep.subr.mxu0 0.0
    %846 = vmatpush1.msra.mxu0 0.0
    %847 = vmatprep.subr.mxu0 0.0
    %848 = vmatpush1.msra.mxu0 0.0
    %849 = vmatprep.subr.mxu0 0.0
    %850 = vmatpush1.msra.mxu0 0.0
    %851 = vmatprep.subr.mxu0 0.0
    %852 = vmatpush1.msra.mxu0 0.0
    %853 = vmatprep.subr.mxu0 0.0
    %854 = vmatpush1.msra.mxu0 0.0
    %855 = vmatprep.subr.mxu0 0.0
    %856 = vmatpush1.msra.mxu0 0.0
    %857 = vmatprep.subr.mxu0 0.0
    %858 = vmatpush1.msra.mxu0 0.0
    %859 = vmatprep.subr.mxu0 0.0
    %860 = vmatpush1.msra.mxu0 0.0
    %861 = vmatprep.subr.mxu0 0.0
    %862 = vmatpush1.msra.mxu0 0.0
    %863 = vmatprep.mubr.f32.mxu0 0.0
    %864 = vmatmul.mubr.f32.gmra.mrb[0].mxu0 %v610
    %v865 = vpop.f32.mrb[0].mxu0
    %v866 = vadd.f32 %v591, %v865
    %v867 = vpop.f32.mrb[0].mxu0
    %v868 = vadd.f32 %v591, %v867
    %869 = vmatprep.mubr.f32.mxu0 0.0
    %870 = vmatmul.mubr.f32.gmra.mrb[0].mxu0 %v613
    %v871 = vpop.f32.mrb[0].mxu0
    %v872 = vadd.f32 %v596, %v871
    %v873 = vpop.f32.mrb[0].mxu0
    %v874 = vadd.f32 %v596, %v873
    %875 = vmatprep.mubr.f32.mxu0 0.0
    %876 = vmatmul.mubr.f32.gmra.mrb[0].mxu0 %v616
    %v877 = vpop.f32.mrb[0].mxu0
    %v878 = vadd.f32 %v601, %v877
    %v879 = vpop.f32.mrb[0].mxu0
    %v880 = vadd.f32 %v601, %v879
    %881 = vmatprep.mubr.f32.mxu0 0.0
    %882 = vmatmul.mubr.f32.gmra.mrb[0].mxu0 %v619
    %v883 = vpop.f32.mrb[0].mxu0
    %v884 = vadd.f32 %v606, %v883
    %v885 = vpop.f32.mrb[0].mxu0
    %v886 = vadd.f32 %v606, %v885
    %887 = vdwg.mxu0
    %v888 = vmax.f32 %v688, 0.0
    %v889 = vmax.f32 %v690, 0.0
    %v890 = vmax.f32 %v777, 0.0
    %v891 = vmax.f32 %v779, 0.0
    %v892 = vmax.f32 %v866, 0.0
    %v893 = vmax.f32 %v868, 0.0
    %v894 = vmax.f32 %v694, 0.0
    %v895 = vmax.f32 %v696, 0.0
    %v896 = vmax.f32 %v783, 0.0
    %v897 = vmax.f32 %v785, 0.0
    %v898 = vmax.f32 %v872, 0.0
    %v899 = vmax.f32 %v874, 0.0
    %v900 = vmax.f32 %v700, 0.0
    %v901 = vmax.f32 %v702, 0.0
    %v902 = vmax.f32 %v789, 0.0
    %v903 = vmax.f32 %v791, 0.0
    %v904 = vmax.f32 %v878, 0.0
    %v905 = vmax.f32 %v880, 0.0
    %v906 = vmax.f32 %v706, 0.0
    %v907 = vmax.f32 %v708, 0.0
    %v908 = vmax.f32 %v795, 0.0
    %v909 = vmax.f32 %v797, 0.0
    %v910 = vmax.f32 %v884, 0.0
    %v911 = vmax.f32 %v886, 0.0
    %v912 = vld [vmem:[#allocation8] sm:$0x3f]
    %v914 = vlaneseq
    %v915 = vshrl.u32 %v914, 7
    %v916 = vsub.s32 0, %v915
    %v917 = vrot.slane %v912, %v916
    %v918 = vlaneseq
    %v919 = vshrl.u32 %v918, 7
    %v920 = vsub.s32 1, %v919
    %v921 = vrot.slane %v912, %v920
    %v922 = vlaneseq
    %v923 = vshrl.u32 %v922, 7
    %v924 = vsub.s32 2, %v923
    %v925 = vrot.slane %v912, %v924
    %v926 = vlaneseq
    %v927 = vshrl.u32 %v926, 7
    %v928 = vsub.s32 3, %v927
    %v929 = vrot.slane %v912, %v928
    %v930 = vlaneseq
    %v931 = vshrl.u32 %v930, 7
    %v932 = vsub.s32 4, %v931
    %v933 = vrot.slane %v912, %v932
    %v934 = vlaneseq
    %v935 = vshrl.u32 %v934, 7
    %v936 = vsub.s32 5, %v935
    %v937 = vrot.slane %v912, %v936
    %v944 = vmul.f32 %v888, %v917
    %v945 = vmul.f32 %v889, %v921
    %v946 = vmul.f32 %v890, %v925
    %v947 = vmul.f32 %v891, %v929
    %v948 = vmul.f32 %v892, %v933
    %v949 = vmul.f32 %v893, %v937
    %v950 = vmul.f32 %v894, %v917
    %v951 = vmul.f32 %v895, %v921
    %v952 = vmul.f32 %v896, %v925
    %v953 = vmul.f32 %v897, %v929
    %v954 = vmul.f32 %v898, %v933
    %v955 = vmul.f32 %v899, %v937
    %v956 = vmul.f32 %v900, %v917
    %v957 = vmul.f32 %v901, %v921
    %v958 = vmul.f32 %v902, %v925
    %v959 = vmul.f32 %v903, %v929
    %v960 = vmul.f32 %v904, %v933
    %v961 = vmul.f32 %v905, %v937
    %v962 = vmul.f32 %v906, %v917
    %v963 = vmul.f32 %v907, %v921
    %v964 = vmul.f32 %v908, %v925
    %v965 = vmul.f32 %v909, %v929
    %v966 = vmul.f32 %v910, %v933
    %v967 = vmul.f32 %v911, %v937
    %968 = vst [vmem:[#allocation4 + $0x8] sm:$0xff] %v944
    %969 = vst [vmem:[#allocation4 + $0x10] sm:$0xff] %v945
    %970 = vst [vmem:[#allocation4 + $0x18] sm:$0xff] %v946
    %971 = vst [vmem:[#allocation4 + $0x20] sm:$0xff] %v947
    %972 = vst [vmem:[#allocation4 + $0x28] sm:$0xff] %v948
    %973 = vst [vmem:[#allocation4 + $0x30] sm:$0xff] %v949
    %974 = vst [vmem:[#allocation4 + $0x48] sm:$0xff] %v950
    %975 = vst [vmem:[#allocation4 + $0x50] sm:$0xff] %v951
    %976 = vst [vmem:[#allocation4 + $0x58] sm:$0xff] %v952
    %977 = vst [vmem:[#allocation4 + $0x60] sm:$0xff] %v953
    %978 = vst [vmem:[#allocation4 + $0x68] sm:$0xff] %v954
    %979 = vst [vmem:[#allocation4 + $0x70] sm:$0xff] %v955
    %980 = vst [vmem:[#allocation4 + $0x88] sm:$0xff] %v956
    %981 = vst [vmem:[#allocation4 + $0x90] sm:$0xff] %v957
    %982 = vst [vmem:[#allocation4 + $0x98] sm:$0xff] %v958
    %983 = vst [vmem:[#allocation4 + $0xa0] sm:$0xff] %v959
    %984 = vst [vmem:[#allocation4 + $0xa8] sm:$0xff] %v960
    %985 = vst [vmem:[#allocation4 + $0xb0] sm:$0xff] %v961
    %986 = vst [vmem:[#allocation4 + $0xc8] sm:$0xff] %v962
    %987 = vst [vmem:[#allocation4 + $0xd0] sm:$0xff] %v963
    %988 = vst [vmem:[#allocation4 + $0xd8] sm:$0xff] %v964
    %989 = vst [vmem:[#allocation4 + $0xe0] sm:$0xff] %v965
    %990 = vst [vmem:[#allocation4 + $0xe8] sm:$0xff] %v966
    %991 = vst [vmem:[#allocation4 + $0xf0] sm:$0xff] %v967
    %v992 = vld [vmem:[#allocation4] sm:$0xff]
    %v993 = vld [vmem:[#allocation4 + $0x8] sm:$0xff]
    %v994 = vld [vmem:[#allocation4 + $0x10] sm:$0xff]
    %v995 = vld [vmem:[#allocation4 + $0x18] sm:$0xff]
    %v996 = vld [vmem:[#allocation4 + $0x20] sm:$0xff]
    %v997 = vld [vmem:[#allocation4 + $0x28] sm:$0xff]
    %v998 = vld [vmem:[#allocation4 + $0x30] sm:$0xff]
    %v999 = vld [vmem:[#allocation4 + $0x40] sm:$0xff]
    %v1000 = vld [vmem:[#allocation4 + $0x48] sm:$0xff]
    %v1001 = vld [vmem:[#allocation4 + $0x50] sm:$0xff]
    %v1002 = vld [vmem:[#allocation4 + $0x58] sm:$0xff]
    %v1003 = vld [vmem:[#allocation4 + $0x60] sm:$0xff]
    %v1004 = vld [vmem:[#allocation4 + $0x68] sm:$0xff]
    %v1005 = vld [vmem:[#allocation4 + $0x70] sm:$0xff]
    %v1006 = vld [vmem:[#allocation4 + $0x80] sm:$0xff]
    %v1007 = vld [vmem:[#allocation4 + $0x88] sm:$0xff]
    %v1008 = vld [vmem:[#allocation4 + $0x90] sm:$0xff]
    %v1009 = vld [vmem:[#allocation4 + $0x98] sm:$0xff]
    %v1010 = vld [vmem:[#allocation4 + $0xa0] sm:$0xff]
    %v1011 = vld [vmem:[#allocation4 + $0xa8] sm:$0xff]
    %v1012 = vld [vmem:[#allocation4 + $0xb0] sm:$0xff]
    %v1013 = vld [vmem:[#allocation4 + $0xc0] sm:$0xff]
    %v1014 = vld [vmem:[#allocation4 + $0xc8] sm:$0xff]
    %v1015 = vld [vmem:[#allocation4 + $0xd0] sm:$0xff]
    %v1016 = vld [vmem:[#allocation4 + $0xd8] sm:$0xff]
    %v1017 = vld [vmem:[#allocation4 + $0xe0] sm:$0xff]
    %v1018 = vld [vmem:[#allocation4 + $0xe8] sm:$0xff]
    %v1019 = vld [vmem:[#allocation4 + $0xf0] sm:$0xff]
    %1048 = vrot.lane.b32.xlu0 %v992, 19
    %v1049 = vpop.permute.xlu0 %1048
    %1050 = vrot.lane.b32.xlu0 %v993, 19
    %v1051 = vpop.permute.xlu0 %1050
    %1052 = vrot.lane.b32.xlu0 %v994, 19
    %v1053 = vpop.permute.xlu0 %1052
    %1054 = vrot.lane.b32.xlu0 %v995, 19
    %v1055 = vpop.permute.xlu0 %1054
    %1056 = vrot.lane.b32.xlu0 %v996, 19
    %v1057 = vpop.permute.xlu0 %1056
    %1058 = vrot.lane.b32.xlu0 %v997, 19
    %v1059 = vpop.permute.xlu0 %1058
    %1060 = vrot.lane.b32.xlu0 %v998, 19
    %v1061 = vpop.permute.xlu0 %1060
    %1062 = vrot.lane.b32.xlu0 %v999, 19
    %v1063 = vpop.permute.xlu0 %1062
    %1064 = vrot.lane.b32.xlu0 %v1000, 19
    %v1065 = vpop.permute.xlu0 %1064
    %1066 = vrot.lane.b32.xlu0 %v1001, 19
    %v1067 = vpop.permute.xlu0 %1066
    %1068 = vrot.lane.b32.xlu0 %v1002, 19
    %v1069 = vpop.permute.xlu0 %1068
    %1070 = vrot.lane.b32.xlu0 %v1003, 19
    %v1071 = vpop.permute.xlu0 %1070
    %1072 = vrot.lane.b32.xlu0 %v1004, 19
    %v1073 = vpop.permute.xlu0 %1072
    %1074 = vrot.lane.b32.xlu0 %v1005, 19
    %v1075 = vpop.permute.xlu0 %1074
    %1076 = vrot.lane.b32.xlu0 %v1006, 19
    %v1077 = vpop.permute.xlu0 %1076
    %1078 = vrot.lane.b32.xlu0 %v1007, 19
    %v1079 = vpop.permute.xlu0 %1078
    %1080 = vrot.lane.b32.xlu0 %v1008, 19
    %v1081 = vpop.permute.xlu0 %1080
    %1082 = vrot.lane.b32.xlu0 %v1009, 19
    %v1083 = vpop.permute.xlu0 %1082
    %1084 = vrot.lane.b32.xlu0 %v1010, 19
    %v1085 = vpop.permute.xlu0 %1084
    %1086 = vrot.lane.b32.xlu0 %v1011, 19
    %v1087 = vpop.permute.xlu0 %1086
    %1088 = vrot.lane.b32.xlu0 %v1012, 19
    %v1089 = vpop.permute.xlu0 %1088
    %1090 = vrot.lane.b32.xlu0 %v1013, 19
    %v1091 = vpop.permute.xlu0 %1090
    %1092 = vrot.lane.b32.xlu0 %v1014, 19
    %v1093 = vpop.permute.xlu0 %1092
    %1094 = vrot.lane.b32.xlu0 %v1015, 19
    %v1095 = vpop.permute.xlu0 %1094
    %1096 = vrot.lane.b32.xlu0 %v1016, 19
    %v1097 = vpop.permute.xlu0 %1096
    %1098 = vrot.lane.b32.xlu0 %v1017, 19
    %v1099 = vpop.permute.xlu0 %1098
    %1100 = vrot.lane.b32.xlu0 %v1018, 19
    %v1101 = vpop.permute.xlu0 %1100
    %1102 = vrot.lane.b32.xlu0 %v1019, 19
    %v1103 = vpop.permute.xlu0 %1102
    %vm1104 = vcmask 154624
    %v1105 = vsel %vm1104, %v1049, %v1051
    %v1106 = vsel %vm1104, %v1051, %v1053
    %v1107 = vsel %vm1104, %v1053, %v1055
    %v1108 = vsel %vm1104, %v1055, %v1057
    %v1109 = vsel %vm1104, %v1057, %v1059
    %v1110 = vsel %vm1104, %v1059, %v1061
    %v1111 = vsel %vm1104, %v1063, %v1065
    %v1112 = vsel %vm1104, %v1065, %v1067
    %v1113 = vsel %vm1104, %v1067, %v1069
    %v1114 = vsel %vm1104, %v1069, %v1071
    %v1115 = vsel %vm1104, %v1071, %v1073
    %v1116 = vsel %vm1104, %v1073, %v1075
    %v1117 = vsel %vm1104, %v1077, %v1079
    %v1118 = vsel %vm1104, %v1079, %v1081
    %v1119 = vsel %vm1104, %v1081, %v1083
    %v1120 = vsel %vm1104, %v1083, %v1085
    %v1121 = vsel %vm1104, %v1085, %v1087
    %v1122 = vsel %vm1104, %v1087, %v1089
    %v1123 = vsel %vm1104, %v1091, %v1093
    %v1124 = vsel %vm1104, %v1093, %v1095
    %v1125 = vsel %vm1104, %v1095, %v1097
    %v1126 = vsel %vm1104, %v1097, %v1099
    %v1127 = vsel %vm1104, %v1099, %v1101
    %v1128 = vsel %vm1104, %v1101, %v1103
    %1153 = vst [vmem:[#allocation3] sm:$0xff] %v1105
    %1154 = vst [vmem:[#allocation3 + $0x8] sm:$0xff] %v1106
    %1155 = vst [vmem:[#allocation3 + $0x10] sm:$0xff] %v1107
    %1156 = vst [vmem:[#allocation3 + $0x18] sm:$0xff] %v1108
    %1157 = vst [vmem:[#allocation3 + $0x20] sm:$0xff] %v1109
    %1158 = vst [vmem:[#allocation3 + $0x28] sm:$0xff] %v1110
    %1159 = vst [vmem:[#allocation3 + $0x30] sm:$0xff] %v1111
    %1160 = vst [vmem:[#allocation3 + $0x38] sm:$0xff] %v1112
    %1161 = vst [vmem:[#allocation3 + $0x40] sm:$0xff] %v1113
    %1162 = vst [vmem:[#allocation3 + $0x48] sm:$0xff] %v1114
    %1163 = vst [vmem:[#allocation3 + $0x50] sm:$0xff] %v1115
    %1164 = vst [vmem:[#allocation3 + $0x58] sm:$0xff] %v1116
    %1165 = vst [vmem:[#allocation3 + $0x60] sm:$0xff] %v1117
    %1166 = vst [vmem:[#allocation3 + $0x68] sm:$0xff] %v1118
    %1167 = vst [vmem:[#allocation3 + $0x70] sm:$0xff] %v1119
    %1168 = vst [vmem:[#allocation3 + $0x78] sm:$0xff] %v1120
    %1169 = vst [vmem:[#allocation3 + $0x80] sm:$0xff] %v1121
    %1170 = vst [vmem:[#allocation3 + $0x88] sm:$0xff] %v1122
    %1171 = vst [vmem:[#allocation3 + $0x90] sm:$0xff] %v1123
    %1172 = vst [vmem:[#allocation3 + $0x98] sm:$0xff] %v1124
    %1173 = vst [vmem:[#allocation3 + $0xa0] sm:$0xff] %v1125
    %1174 = vst [vmem:[#allocation3 + $0xa8] sm:$0xff] %v1126
    %1175 = vst [vmem:[#allocation3 + $0xb0] sm:$0xff] %v1127
    %1176 = vst [vmem:[#allocation3 + $0xb8] sm:$0xff] %v1128
    %v1177 = vld [vmem:[#allocation4] sm:$0xff]
    %v1178 = vld [vmem:[#allocation4 + $0x8] sm:$0xff]
    %v1179 = vld [vmem:[#allocation4 + $0x10] sm:$0xff]
    %v1180 = vld [vmem:[#allocation4 + $0x18] sm:$0xff]
    %v1181 = vld [vmem:[#allocation4 + $0x20] sm:$0xff]
    %v1182 = vld [vmem:[#allocation4 + $0x28] sm:$0xff]
    %v1183 = vld [vmem:[#allocation4 + $0x30] sm:$0xff]
    %v1184 = vld [vmem:[#allocation4 + $0x40] sm:$0xff]
    %v1185 = vld [vmem:[#allocation4 + $0x48] sm:$0xff]
    %v1186 = vld [vmem:[#allocation4 + $0x50] sm:$0xff]
    %v1187 = vld [vmem:[#allocation4 + $0x58] sm:$0xff]
    %v1188 = vld [vmem:[#allocation4 + $0x60] sm:$0xff]
    %v1189 = vld [vmem:[#allocation4 + $0x68] sm:$0xff]
    %v1190 = vld [vmem:[#allocation4 + $0x70] sm:$0xff]
    %v1191 = vld [vmem:[#allocation4 + $0x80] sm:$0xff]
    %v1192 = vld [vmem:[#allocation4 + $0x88] sm:$0xff]
    %v1193 = vld [vmem:[#allocation4 + $0x90] sm:$0xff]
    %v1194 = vld [vmem:[#allocation4 + $0x98] sm:$0xff]
    %v1195 = vld [vmem:[#allocation4 + $0xa0] sm:$0xff]
    %v1196 = vld [vmem:[#allocation4 + $0xa8] sm:$0xff]
    %v1197 = vld [vmem:[#allocation4 + $0xb0] sm:$0xff]
    %v1198 = vld [vmem:[#allocation4 + $0xc0] sm:$0xff]
    %v1199 = vld [vmem:[#allocation4 + $0xc8] sm:$0xff]
    %v1200 = vld [vmem:[#allocation4 + $0xd0] sm:$0xff]
    %v1201 = vld [vmem:[#allocation4 + $0xd8] sm:$0xff]
    %v1202 = vld [vmem:[#allocation4 + $0xe0] sm:$0xff]
    %v1203 = vld [vmem:[#allocation4 + $0xe8] sm:$0xff]
    %v1204 = vld [vmem:[#allocation4 + $0xf0] sm:$0xff]
    %1233 = vrot.lane.b32.xlu0 %v1177, 18
    %v1234 = vpop.permute.xlu0 %1233
    %1235 = vrot.lane.b32.xlu0 %v1178, 18
    %v1236 = vpop.permute.xlu0 %1235
    %1237 = vrot.lane.b32.xlu0 %v1179, 18
    %v1238 = vpop.permute.xlu0 %1237
    %1239 = vrot.lane.b32.xlu0 %v1180, 18
    %v1240 = vpop.permute.xlu0 %1239
    %1241 = vrot.lane.b32.xlu0 %v1181, 18
    %v1242 = vpop.permute.xlu0 %1241
    %1243 = vrot.lane.b32.xlu0 %v1182, 18
    %v1244 = vpop.permute.xlu0 %1243
    %1245 = vrot.lane.b32.xlu0 %v1183, 18
    %v1246 = vpop.permute.xlu0 %1245
    %1247 = vrot.lane.b32.xlu0 %v1184, 18
    %v1248 = vpop.permute.xlu0 %1247
    %1249 = vrot.lane.b32.xlu0 %v1185, 18
    %v1250 = vpop.permute.xlu0 %1249
    %1251 = vrot.lane.b32.xlu0 %v1186, 18
    %v1252 = vpop.permute.xlu0 %1251
    %1253 = vrot.lane.b32.xlu0 %v1187, 18
    %v1254 = vpop.permute.xlu0 %1253
    %1255 = vrot.lane.b32.xlu0 %v1188, 18
    %v1256 = vpop.permute.xlu0 %1255
    %1257 = vrot.lane.b32.xlu0 %v1189, 18
    %v1258 = vpop.permute.xlu0 %1257
    %1259 = vrot.lane.b32.xlu0 %v1190, 18
    %v1260 = vpop.permute.xlu0 %1259
    %1261 = vrot.lane.b32.xlu0 %v1191, 18
    %v1262 = vpop.permute.xlu0 %1261
    %1263 = vrot.lane.b32.xlu0 %v1192, 18
    %v1264 = vpop.permute.xlu0 %1263
    %1265 = vrot.lane.b32.xlu0 %v1193, 18
    %v1266 = vpop.permute.xlu0 %1265
    %1267 = vrot.lane.b32.xlu0 %v1194, 18
    %v1268 = vpop.permute.xlu0 %1267
    %1269 = vrot.lane.b32.xlu0 %v1195, 18
    %v1270 = vpop.permute.xlu0 %1269
    %1271 = vrot.lane.b32.xlu0 %v1196, 18
    %v1272 = vpop.permute.xlu0 %1271
    %1273 = vrot.lane.b32.xlu0 %v1197, 18
    %v1274 = vpop.permute.xlu0 %1273
    %1275 = vrot.lane.b32.xlu0 %v1198, 18
    %v1276 = vpop.permute.xlu0 %1275
    %1277 = vrot.lane.b32.xlu0 %v1199, 18
    %v1278 = vpop.permute.xlu0 %1277
    %1279 = vrot.lane.b32.xlu0 %v1200, 18
    %v1280 = vpop.permute.xlu0 %1279
    %1281 = vrot.lane.b32.xlu0 %v1201, 18
    %v1282 = vpop.permute.xlu0 %1281
    %1283 = vrot.lane.b32.xlu0 %v1202, 18
    %v1284 = vpop.permute.xlu0 %1283
    %1285 = vrot.lane.b32.xlu0 %v1203, 18
    %v1286 = vpop.permute.xlu0 %1285
    %1287 = vrot.lane.b32.xlu0 %v1204, 18
    %v1288 = vpop.permute.xlu0 %1287
    %vm1289 = vcmask 146432
    %v1290 = vsel %vm1289, %v1234, %v1236
    %v1291 = vsel %vm1289, %v1236, %v1238
    %v1292 = vsel %vm1289, %v1238, %v1240
    %v1293 = vsel %vm1289, %v1240, %v1242
    %v1294 = vsel %vm1289, %v1242, %v1244
    %v1295 = vsel %vm1289, %v1244, %v1246
    %v1296 = vsel %vm1289, %v1248, %v1250
    %v1297 = vsel %vm1289, %v1250, %v1252
    %v1298 = vsel %vm1289, %v1252, %v1254
    %v1299 = vsel %vm1289, %v1254, %v1256
    %v1300 = vsel %vm1289, %v1256, %v1258
    %v1301 = vsel %vm1289, %v1258, %v1260
    %v1302 = vsel %vm1289, %v1262, %v1264
    %v1303 = vsel %vm1289, %v1264, %v1266
    %v1304 = vsel %vm1289, %v1266, %v1268
    %v1305 = vsel %vm1289, %v1268, %v1270
    %v1306 = vsel %vm1289, %v1270, %v1272
    %v1307 = vsel %vm1289, %v1272, %v1274
    %v1308 = vsel %vm1289, %v1276, %v1278
    %v1309 = vsel %vm1289, %v1278, %v1280
    %v1310 = vsel %vm1289, %v1280, %v1282
    %v1311 = vsel %vm1289, %v1282, %v1284
    %v1312 = vsel %vm1289, %v1284, %v1286
    %v1313 = vsel %vm1289, %v1286, %v1288
    %1338 = vst [vmem:[#allocation3 + $0xc0] sm:$0xff] %v1290
    %1339 = vst [vmem:[#allocation3 + $0xc8] sm:$0xff] %v1291
    %1340 = vst [vmem:[#allocation3 + $0xd0] sm:$0xff] %v1292
    %1341 = vst [vmem:[#allocation3 + $0xd8] sm:$0xff] %v1293
    %1342 = vst [vmem:[#allocation3 + $0xe0] sm:$0xff] %v1294
    %1343 = vst [vmem:[#allocation3 + $0xe8] sm:$0xff] %v1295
    %1344 = vst [vmem:[#allocation3 + $0xf0] sm:$0xff] %v1296
    %1345 = vst [vmem:[#allocation3 + $0xf8] sm:$0xff] %v1297
    %1346 = vst [vmem:[#allocation3 + $0x100] sm:$0xff] %v1298
    %1347 = vst [vmem:[#allocation3 + $0x108] sm:$0xff] %v1299
    %1348 = vst [vmem:[#allocation3 + $0x110] sm:$0xff] %v1300
    %1349 = vst [vmem:[#allocation3 + $0x118] sm:$0xff] %v1301
    %1350 = vst [vmem:[#allocation3 + $0x120] sm:$0xff] %v1302
    %1351 = vst [vmem:[#allocation3 + $0x128] sm:$0xff] %v1303
    %1352 = vst [vmem:[#allocation3 + $0x130] sm:$0xff] %v1304
    %1353 = vst [vmem:[#allocation3 + $0x138] sm:$0xff] %v1305
    %1354 = vst [vmem:[#allocation3 + $0x140] sm:$0xff] %v1306
    %1355 = vst [vmem:[#allocation3 + $0x148] sm:$0xff] %v1307
    %1356 = vst [vmem:[#allocation3 + $0x150] sm:$0xff] %v1308
    %1357 = vst [vmem:[#allocation3 + $0x158] sm:$0xff] %v1309
    %1358 = vst [vmem:[#allocation3 + $0x160] sm:$0xff] %v1310
    %1359 = vst [vmem:[#allocation3 + $0x168] sm:$0xff] %v1311
    %1360 = vst [vmem:[#allocation3 + $0x170] sm:$0xff] %v1312
    %1361 = vst [vmem:[#allocation3 + $0x178] sm:$0xff] %v1313
    %v1362 = vld [vmem:[#allocation4] sm:$0xff]
    %v1363 = vld [vmem:[#allocation4 + $0x8] sm:$0xff]
    %v1364 = vld [vmem:[#allocation4 + $0x10] sm:$0xff]
    %v1365 = vld [vmem:[#allocation4 + $0x18] sm:$0xff]
    %v1366 = vld [vmem:[#allocation4 + $0x20] sm:$0xff]
    %v1367 = vld [vmem:[#allocation4 + $0x28] sm:$0xff]
    %v1368 = vld [vmem:[#allocation4 + $0x30] sm:$0xff]
    %v1369 = vld [vmem:[#allocation4 + $0x40] sm:$0xff]
    %v1370 = vld [vmem:[#allocation4 + $0x48] sm:$0xff]
    %v1371 = vld [vmem:[#allocation4 + $0x50] sm:$0xff]
    %v1372 = vld [vmem:[#allocation4 + $0x58] sm:$0xff]
    %v1373 = vld [vmem:[#allocation4 + $0x60] sm:$0xff]
    %v1374 = vld [vmem:[#allocation4 + $0x68] sm:$0xff]
    %v1375 = vld [vmem:[#allocation4 + $0x70] sm:$0xff]
    %v1376 = vld [vmem:[#allocation4 + $0x80] sm:$0xff]
    %v1377 = vld [vmem:[#allocation4 + $0x88] sm:$0xff]
    %v1378 = vld [vmem:[#allocation4 + $0x90] sm:$0xff]
    %v1379 = vld [vmem:[#allocation4 + $0x98] sm:$0xff]
    %v1380 = vld [vmem:[#allocation4 + $0xa0] sm:$0xff]
    %v1381 = vld [vmem:[#allocation4 + $0xa8] sm:$0xff]
    %v1382 = vld [vmem:[#allocation4 + $0xb0] sm:$0xff]
    %v1383 = vld [vmem:[#allocation4 + $0xc0] sm:$0xff]
    %v1384 = vld [vmem:[#allocation4 + $0xc8] sm:$0xff]
    %v1385 = vld [vmem:[#allocation4 + $0xd0] sm:$0xff]
    %v1386 = vld [vmem:[#allocation4 + $0xd8] sm:$0xff]
    %v1387 = vld [vmem:[#allocation4 + $0xe0] sm:$0xff]
    %v1388 = vld [vmem:[#allocation4 + $0xe8] sm:$0xff]
    %v1389 = vld [vmem:[#allocation4 + $0xf0] sm:$0xff]
    %1418 = vrot.lane.b32.xlu0 %v1362, 17
    %v1419 = vpop.permute.xlu0 %1418
    %1420 = vrot.lane.b32.xlu0 %v1363, 17
    %v1421 = vpop.permute.xlu0 %1420
    %1422 = vrot.lane.b32.xlu0 %v1364, 17
    %v1423 = vpop.permute.xlu0 %1422
    %1424 = vrot.lane.b32.xlu0 %v1365, 17
    %v1425 = vpop.permute.xlu0 %1424
    %1426 = vrot.lane.b32.xlu0 %v1366, 17
    %v1427 = vpop.permute.xlu0 %1426
    %1428 = vrot.lane.b32.xlu0 %v1367, 17
    %v1429 = vpop.permute.xlu0 %1428
    %1430 = vrot.lane.b32.xlu0 %v1368, 17
    %v1431 = vpop.permute.xlu0 %1430
    %1432 = vrot.lane.b32.xlu0 %v1369, 17
    %v1433 = vpop.permute.xlu0 %1432
    %1434 = vrot.lane.b32.xlu0 %v1370, 17
    %v1435 = vpop.permute.xlu0 %1434
    %1436 = vrot.lane.b32.xlu0 %v1371, 17
    %v1437 = vpop.permute.xlu0 %1436
    %1438 = vrot.lane.b32.xlu0 %v1372, 17
    %v1439 = vpop.permute.xlu0 %1438
    %1440 = vrot.lane.b32.xlu0 %v1373, 17
    %v1441 = vpop.permute.xlu0 %1440
    %1442 = vrot.lane.b32.xlu0 %v1374, 17
    %v1443 = vpop.permute.xlu0 %1442
    %1444 = vrot.lane.b32.xlu0 %v1375, 17
    %v1445 = vpop.permute.xlu0 %1444
    %1446 = vrot.lane.b32.xlu0 %v1376, 17
    %v1447 = vpop.permute.xlu0 %1446
    %1448 = vrot.lane.b32.xlu0 %v1377, 17
    %v1449 = vpop.permute.xlu0 %1448
    %1450 = vrot.lane.b32.xlu0 %v1378, 17
    %v1451 = vpop.permute.xlu0 %1450
    %1452 = vrot.lane.b32.xlu0 %v1379, 17
    %v1453 = vpop.permute.xlu0 %1452
    %1454 = vrot.lane.b32.xlu0 %v1380, 17
    %v1455 = vpop.permute.xlu0 %1454
    %1456 = vrot.lane.b32.xlu0 %v1381, 17
    %v1457 = vpop.permute.xlu0 %1456
    %1458 = vrot.lane.b32.xlu0 %v1382, 17
    %v1459 = vpop.permute.xlu0 %1458
    %1460 = vrot.lane.b32.xlu0 %v1383, 17
    %v1461 = vpop.permute.xlu0 %1460
    %1462 = vrot.lane.b32.xlu0 %v1384, 17
    %v1463 = vpop.permute.xlu0 %1462
    %1464 = vrot.lane.b32.xlu0 %v1385, 17
    %v1465 = vpop.permute.xlu0 %1464
    %1466 = vrot.lane.b32.xlu0 %v1386, 17
    %v1467 = vpop.permute.xlu0 %1466
    %1468 = vrot.lane.b32.xlu0 %v1387, 17
    %v1469 = vpop.permute.xlu0 %1468
    %1470 = vrot.lane.b32.xlu0 %v1388, 17
    %v1471 = vpop.permute.xlu0 %1470
    %1472 = vrot.lane.b32.xlu0 %v1389, 17
    %v1473 = vpop.permute.xlu0 %1472
    %vm1474 = vcmask 138240
    %v1475 = vsel %vm1474, %v1419, %v1421
    %v1476 = vsel %vm1474, %v1421, %v1423
    %v1477 = vsel %vm1474, %v1423, %v1425
    %v1478 = vsel %vm1474, %v1425, %v1427
    %v1479 = vsel %vm1474, %v1427, %v1429
    %v1480 = vsel %vm1474, %v1429, %v1431
    %v1481 = vsel %vm1474, %v1433, %v1435
    %v1482 = vsel %vm1474, %v1435, %v1437
    %v1483 = vsel %vm1474, %v1437, %v1439
    %v1484 = vsel %vm1474, %v1439, %v1441
    %v1485 = vsel %vm1474, %v1441, %v1443
    %v1486 = vsel %vm1474, %v1443, %v1445
    %v1487 = vsel %vm1474, %v1447, %v1449
    %v1488 = vsel %vm1474, %v1449, %v1451
    %v1489 = vsel %vm1474, %v1451, %v1453
    %v1490 = vsel %vm1474, %v1453, %v1455
    %v1491 = vsel %vm1474, %v1455, %v1457
    %v1492 = vsel %vm1474, %v1457, %v1459
    %v1493 = vsel %vm1474, %v1461, %v1463
    %v1494 = vsel %vm1474, %v1463, %v1465
    %v1495 = vsel %vm1474, %v1465, %v1467
    %v1496 = vsel %vm1474, %v1467, %v1469
    %v1497 = vsel %vm1474, %v1469, %v1471
    %v1498 = vsel %vm1474, %v1471, %v1473
    %1523 = vst [vmem:[#allocation3 + $0x180] sm:$0xff] %v1475
    %1524 = vst [vmem:[#allocation3 + $0x188] sm:$0xff] %v1476
    %1525 = vst [vmem:[#allocation3 + $0x190] sm:$0xff] %v1477
    %1526 = vst [vmem:[#allocation3 + $0x198] sm:$0xff] %v1478
    %1527 = vst [vmem:[#allocation3 + $0x1a0] sm:$0xff] %v1479
    %1528 = vst [vmem:[#allocation3 + $0x1a8] sm:$0xff] %v1480
    %1529 = vst [vmem:[#allocation3 + $0x1b0] sm:$0xff] %v1481
    %1530 = vst [vmem:[#allocation3 + $0x1b8] sm:$0xff] %v1482
    %1531 = vst [vmem:[#allocation3 + $0x1c0] sm:$0xff] %v1483
    %1532 = vst [vmem:[#allocation3 + $0x1c8] sm:$0xff] %v1484
    %1533 = vst [vmem:[#allocation3 + $0x1d0] sm:$0xff] %v1485
    %1534 = vst [vmem:[#allocation3 + $0x1d8] sm:$0xff] %v1486
    %1535 = vst [vmem:[#allocation3 + $0x1e0] sm:$0xff] %v1487
    %1536 = vst [vmem:[#allocation3 + $0x1e8] sm:$0xff] %v1488
    %1537 = vst [vmem:[#allocation3 + $0x1f0] sm:$0xff] %v1489
    %1538 = vst [vmem:[#allocation3 + $0x1f8] sm:$0xff] %v1490
    %1539 = vst [vmem:[#allocation3 + $0x200] sm:$0xff] %v1491
    %1540 = vst [vmem:[#allocation3 + $0x208] sm:$0xff] %v1492
    %1541 = vst [vmem:[#allocation3 + $0x210] sm:$0xff] %v1493
    %1542 = vst [vmem:[#allocation3 + $0x218] sm:$0xff] %v1494
    %1543 = vst [vmem:[#allocation3 + $0x220] sm:$0xff] %v1495
    %1544 = vst [vmem:[#allocation3 + $0x228] sm:$0xff] %v1496
    %1545 = vst [vmem:[#allocation3 + $0x230] sm:$0xff] %v1497
    %1546 = vst [vmem:[#allocation3 + $0x238] sm:$0xff] %v1498
    %v1547 = vld [vmem:[#allocation4] sm:$0xff]
    %v1548 = vld [vmem:[#allocation4 + $0x8] sm:$0xff]
    %v1549 = vld [vmem:[#allocation4 + $0x10] sm:$0xff]
    %v1550 = vld [vmem:[#allocation4 + $0x18] sm:$0xff]
    %v1551 = vld [vmem:[#allocation4 + $0x20] sm:$0xff]
    %v1552 = vld [vmem:[#allocation4 + $0x28] sm:$0xff]
    %v1553 = vld [vmem:[#allocation4 + $0x30] sm:$0xff]
    %v1554 = vld [vmem:[#allocation4 + $0x40] sm:$0xff]
    %v1555 = vld [vmem:[#allocation4 + $0x48] sm:$0xff]
    %v1556 = vld [vmem:[#allocation4 + $0x50] sm:$0xff]
    %v1557 = vld [vmem:[#allocation4 + $0x58] sm:$0xff]
    %v1558 = vld [vmem:[#allocation4 + $0x60] sm:$0xff]
    %v1559 = vld [vmem:[#allocation4 + $0x68] sm:$0xff]
    %v1560 = vld [vmem:[#allocation4 + $0x70] sm:$0xff]
    %v1561 = vld [vmem:[#allocation4 + $0x80] sm:$0xff]
    %v1562 = vld [vmem:[#allocation4 + $0x88] sm:$0xff]
    %v1563 = vld [vmem:[#allocation4 + $0x90] sm:$0xff]
    %v1564 = vld [vmem:[#allocation4 + $0x98] sm:$0xff]
    %v1565 = vld [vmem:[#allocation4 + $0xa0] sm:$0xff]
    %v1566 = vld [vmem:[#allocation4 + $0xa8] sm:$0xff]
    %v1567 = vld [vmem:[#allocation4 + $0xb0] sm:$0xff]
    %v1568 = vld [vmem:[#allocation4 + $0xc0] sm:$0xff]
    %v1569 = vld [vmem:[#allocation4 + $0xc8] sm:$0xff]
    %v1570 = vld [vmem:[#allocation4 + $0xd0] sm:$0xff]
    %v1571 = vld [vmem:[#allocation4 + $0xd8] sm:$0xff]
    %v1572 = vld [vmem:[#allocation4 + $0xe0] sm:$0xff]
    %v1573 = vld [vmem:[#allocation4 + $0xe8] sm:$0xff]
    %v1574 = vld [vmem:[#allocation4 + $0xf0] sm:$0xff]
    %1603 = vrot.lane.b32.xlu0 %v1547, 1
    %v1604 = vpop.permute.xlu0 %1603
    %1605 = vrot.lane.b32.xlu0 %v1548, 1
    %v1606 = vpop.permute.xlu0 %1605
    %1607 = vrot.lane.b32.xlu0 %v1549, 1
    %v1608 = vpop.permute.xlu0 %1607
    %1609 = vrot.lane.b32.xlu0 %v1550, 1
    %v1610 = vpop.permute.xlu0 %1609
    %1611 = vrot.lane.b32.xlu0 %v1551, 1
    %v1612 = vpop.permute.xlu0 %1611
    %1613 = vrot.lane.b32.xlu0 %v1552, 1
    %v1614 = vpop.permute.xlu0 %1613
    %1615 = vrot.lane.b32.xlu0 %v1553, 1
    %v1616 = vpop.permute.xlu0 %1615
    %1617 = vrot.lane.b32.xlu0 %v1554, 1
    %v1618 = vpop.permute.xlu0 %1617
    %1619 = vrot.lane.b32.xlu0 %v1555, 1
    %v1620 = vpop.permute.xlu0 %1619
    %1621 = vrot.lane.b32.xlu0 %v1556, 1
    %v1622 = vpop.permute.xlu0 %1621
    %1623 = vrot.lane.b32.xlu0 %v1557, 1
    %v1624 = vpop.permute.xlu0 %1623
    %1625 = vrot.lane.b32.xlu0 %v1558, 1
    %v1626 = vpop.permute.xlu0 %1625
    %1627 = vrot.lane.b32.xlu0 %v1559, 1
    %v1628 = vpop.permute.xlu0 %1627
    %1629 = vrot.lane.b32.xlu0 %v1560, 1
    %v1630 = vpop.permute.xlu0 %1629
    %1631 = vrot.lane.b32.xlu0 %v1561, 1
    %v1632 = vpop.permute.xlu0 %1631
    %1633 = vrot.lane.b32.xlu0 %v1562, 1
    %v1634 = vpop.permute.xlu0 %1633
    %1635 = vrot.lane.b32.xlu0 %v1563, 1
    %v1636 = vpop.permute.xlu0 %1635
    %1637 = vrot.lane.b32.xlu0 %v1564, 1
    %v1638 = vpop.permute.xlu0 %1637
    %1639 = vrot.lane.b32.xlu0 %v1565, 1
    %v1640 = vpop.permute.xlu0 %1639
    %1641 = vrot.lane.b32.xlu0 %v1566, 1
    %v1642 = vpop.permute.xlu0 %1641
    %1643 = vrot.lane.b32.xlu0 %v1567, 1
    %v1644 = vpop.permute.xlu0 %1643
    %1645 = vrot.lane.b32.xlu0 %v1568, 1
    %v1646 = vpop.permute.xlu0 %1645
    %1647 = vrot.lane.b32.xlu0 %v1569, 1
    %v1648 = vpop.permute.xlu0 %1647
    %1649 = vrot.lane.b32.xlu0 %v1570, 1
    %v1650 = vpop.permute.xlu0 %1649
    %1651 = vrot.lane.b32.xlu0 %v1571, 1
    %v1652 = vpop.permute.xlu0 %1651
    %1653 = vrot.lane.b32.xlu0 %v1572, 1
    %v1654 = vpop.permute.xlu0 %1653
    %1655 = vrot.lane.b32.xlu0 %v1573, 1
    %v1656 = vpop.permute.xlu0 %1655
    %1657 = vrot.lane.b32.xlu0 %v1574, 1
    %v1658 = vpop.permute.xlu0 %1657
    %vm1659 = vcmask 7168
    %v1660 = vsel %vm1659, %v1604, %v1606
    %v1661 = vsel %vm1659, %v1606, %v1608
    %v1662 = vsel %vm1659, %v1608, %v1610
    %v1663 = vsel %vm1659, %v1610, %v1612
    %v1664 = vsel %vm1659, %v1612, %v1614
    %v1665 = vsel %vm1659, %v1614, %v1616
    %v1666 = vsel %vm1659, %v1618, %v1620
    %v1667 = vsel %vm1659, %v1620, %v1622
    %v1668 = vsel %vm1659, %v1622, %v1624
    %v1669 = vsel %vm1659, %v1624, %v1626
    %v1670 = vsel %vm1659, %v1626, %v1628
    %v1671 = vsel %vm1659, %v1628, %v1630
    %v1672 = vsel %vm1659, %v1632, %v1634
    %v1673 = vsel %vm1659, %v1634, %v1636
    %v1674 = vsel %vm1659, %v1636, %v1638
    %v1675 = vsel %vm1659, %v1638, %v1640
    %v1676 = vsel %vm1659, %v1640, %v1642
    %v1677 = vsel %vm1659, %v1642, %v1644
    %v1678 = vsel %vm1659, %v1646, %v1648
    %v1679 = vsel %vm1659, %v1648, %v1650
    %v1680 = vsel %vm1659, %v1650, %v1652
    %v1681 = vsel %vm1659, %v1652, %v1654
    %v1682 = vsel %vm1659, %v1654, %v1656
    %v1683 = vsel %vm1659, %v1656, %v1658
    %1708 = vst [vmem:[#allocation3 + $0x240] sm:$0xff] %v1660
    %1709 = vst [vmem:[#allocation3 + $0x248] sm:$0xff] %v1661
    %1710 = vst [vmem:[#allocation3 + $0x250] sm:$0xff] %v1662
    %1711 = vst [vmem:[#allocation3 + $0x258] sm:$0xff] %v1663
    %1712 = vst [vmem:[#allocation3 + $0x260] sm:$0xff] %v1664
    %1713 = vst [vmem:[#allocation3 + $0x268] sm:$0xff] %v1665
    %1714 = vst [vmem:[#allocation3 + $0x270] sm:$0xff] %v1666
    %1715 = vst [vmem:[#allocation3 + $0x278] sm:$0xff] %v1667
    %1716 = vst [vmem:[#allocation3 + $0x280] sm:$0xff] %v1668
    %1717 = vst [vmem:[#allocation3 + $0x288] sm:$0xff] %v1669
    %1718 = vst [vmem:[#allocation3 + $0x290] sm:$0xff] %v1670
    %1719 = vst [vmem:[#allocation3 + $0x298] sm:$0xff] %v1671
    %1720 = vst [vmem:[#allocation3 + $0x2a0] sm:$0xff] %v1672
    %1721 = vst [vmem:[#allocation3 + $0x2a8] sm:$0xff] %v1673
    %1722 = vst [vmem:[#allocation3 + $0x2b0] sm:$0xff] %v1674
    %1723 = vst [vmem:[#allocation3 + $0x2b8] sm:$0xff] %v1675
    %1724 = vst [vmem:[#allocation3 + $0x2c0] sm:$0xff] %v1676
    %1725 = vst [vmem:[#allocation3 + $0x2c8] sm:$0xff] %v1677
    %1726 = vst [vmem:[#allocation3 + $0x2d0] sm:$0xff] %v1678
    %1727 = vst [vmem:[#allocation3 + $0x2d8] sm:$0xff] %v1679
    %1728 = vst [vmem:[#allocation3 + $0x2e0] sm:$0xff] %v1680
    %1729 = vst [vmem:[#allocation3 + $0x2e8] sm:$0xff] %v1681
    %1730 = vst [vmem:[#allocation3 + $0x2f0] sm:$0xff] %v1682
    %1731 = vst [vmem:[#allocation3 + $0x2f8] sm:$0xff] %v1683
    %v1732 = vld [vmem:[#allocation4 + $0x8] sm:$0xff]
    %v1733 = vld [vmem:[#allocation4 + $0x10] sm:$0xff]
    %v1734 = vld [vmem:[#allocation4 + $0x18] sm:$0xff]
    %v1735 = vld [vmem:[#allocation4 + $0x20] sm:$0xff]
    %v1736 = vld [vmem:[#allocation4 + $0x28] sm:$0xff]
    %v1737 = vld [vmem:[#allocation4 + $0x30] sm:$0xff]
    %v1738 = vld [vmem:[#allocation4 + $0x48] sm:$0xff]
    %v1739 = vld [vmem:[#allocation4 + $0x50] sm:$0xff]
    %v1740 = vld [vmem:[#allocation4 + $0x58] sm:$0xff]
    %v1741 = vld [vmem:[#allocation4 + $0x60] sm:$0xff]
    %v1742 = vld [vmem:[#allocation4 + $0x68] sm:$0xff]
    %v1743 = vld [vmem:[#allocation4 + $0x70] sm:$0xff]
    %v1744 = vld [vmem:[#allocation4 + $0x88] sm:$0xff]
    %v1745 = vld [vmem:[#allocation4 + $0x90] sm:$0xff]
    %v1746 = vld [vmem:[#allocation4 + $0x98] sm:$0xff]
    %v1747 = vld [vmem:[#allocation4 + $0xa0] sm:$0xff]
    %v1748 = vld [vmem:[#allocation4 + $0xa8] sm:$0xff]
    %v1749 = vld [vmem:[#allocation4 + $0xb0] sm:$0xff]
    %v1750 = vld [vmem:[#allocation4 + $0xc8] sm:$0xff]
    %v1751 = vld [vmem:[#allocation4 + $0xd0] sm:$0xff]
    %v1752 = vld [vmem:[#allocation4 + $0xd8] sm:$0xff]
    %v1753 = vld [vmem:[#allocation4 + $0xe0] sm:$0xff]
    %v1754 = vld [vmem:[#allocation4 + $0xe8] sm:$0xff]
    %v1755 = vld [vmem:[#allocation4 + $0xf0] sm:$0xff]
    %1756 = vst [vmem:[#allocation3 + $0x300] sm:$0xff] %v1732
    %1757 = vst [vmem:[#allocation3 + $0x308] sm:$0xff] %v1733
    %1758 = vst [vmem:[#allocation3 + $0x310] sm:$0xff] %v1734
    %1759 = vst [vmem:[#allocation3 + $0x318] sm:$0xff] %v1735
    %1760 = vst [vmem:[#allocation3 + $0x320] sm:$0xff] %v1736
    %1761 = vst [vmem:[#allocation3 + $0x328] sm:$0xff] %v1737
    %1762 = vst [vmem:[#allocation3 + $0x330] sm:$0xff] %v1738
    %1763 = vst [vmem:[#allocation3 + $0x338] sm:$0xff] %v1739
    %1764 = vst [vmem:[#allocation3 + $0x340] sm:$0xff] %v1740
    %1765 = vst [vmem:[#allocation3 + $0x348] sm:$0xff] %v1741
    %1766 = vst [vmem:[#allocation3 + $0x350] sm:$0xff] %v1742
    %1767 = vst [vmem:[#allocation3 + $0x358] sm:$0xff] %v1743
    %1768 = vst [vmem:[#allocation3 + $0x360] sm:$0xff] %v1744
    %1769 = vst [vmem:[#allocation3 + $0x368] sm:$0xff] %v1745
    %1770 = vst [vmem:[#allocation3 + $0x370] sm:$0xff] %v1746
    %1771 = vst [vmem:[#allocation3 + $0x378] sm:$0xff] %v1747
    %1772 = vst [vmem:[#allocation3 + $0x380] sm:$0xff] %v1748
    %1773 = vst [vmem:[#allocation3 + $0x388] sm:$0xff] %v1749
    %1774 = vst [vmem:[#allocation3 + $0x390] sm:$0xff] %v1750
    %1775 = vst [vmem:[#allocation3 + $0x398] sm:$0xff] %v1751
    %1776 = vst [vmem:[#allocation3 + $0x3a0] sm:$0xff] %v1752
    %1777 = vst [vmem:[#allocation3 + $0x3a8] sm:$0xff] %v1753
    %1778 = vst [vmem:[#allocation3 + $0x3b0] sm:$0xff] %v1754
    %1779 = vst [vmem:[#allocation3 + $0x3b8] sm:$0xff] %v1755
    %v1780 = vld [vmem:[#allocation4 + $0x8] sm:$0xff]
    %v1781 = vld [vmem:[#allocation4 + $0x10] sm:$0xff]
    %v1782 = vld [vmem:[#allocation4 + $0x18] sm:$0xff]
    %v1783 = vld [vmem:[#allocation4 + $0x20] sm:$0xff]
    %v1784 = vld [vmem:[#allocation4 + $0x28] sm:$0xff]
    %v1785 = vld [vmem:[#allocation4 + $0x30] sm:$0xff]
    %v1786 = vld [vmem:[#allocation4 + $0x38] sm:$0xff]
    %v1787 = vld [vmem:[#allocation4 + $0x48] sm:$0xff]
    %v1788 = vld [vmem:[#allocation4 + $0x50] sm:$0xff]
    %v1789 = vld [vmem:[#allocation4 + $0x58] sm:$0xff]
    %v1790 = vld [vmem:[#allocation4 + $0x60] sm:$0xff]
    %v1791 = vld [vmem:[#allocation4 + $0x68] sm:$0xff]
    %v1792 = vld [vmem:[#allocation4 + $0x70] sm:$0xff]
    %v1793 = vld [vmem:[#allocation4 + $0x78] sm:$0xff]
    %v1794 = vld [vmem:[#allocation4 + $0x88] sm:$0xff]
    %v1795 = vld [vmem:[#allocation4 + $0x90] sm:$0xff]
    %v1796 = vld [vmem:[#allocation4 + $0x98] sm:$0xff]
    %v1797 = vld [vmem:[#allocation4 + $0xa0] sm:$0xff]
    %v1798 = vld [vmem:[#allocation4 + $0xa8] sm:$0xff]
    %v1799 = vld [vmem:[#allocation4 + $0xb0] sm:$0xff]
    %v1800 = vld [vmem:[#allocation4 + $0xb8] sm:$0xff]
    %v1801 = vld [vmem:[#allocation4 + $0xc8] sm:$0xff]
    %v1802 = vld [vmem:[#allocation4 + $0xd0] sm:$0xff]
    %v1803 = vld [vmem:[#allocation4 + $0xd8] sm:$0xff]
    %v1804 = vld [vmem:[#allocation4 + $0xe0] sm:$0xff]
    %v1805 = vld [vmem:[#allocation4 + $0xe8] sm:$0xff]
    %v1806 = vld [vmem:[#allocation4 + $0xf0] sm:$0xff]
    %v1807 = vld [vmem:[#allocation4 + $0xf8] sm:$0xff]
    %1836 = vrot.lane.b32.xlu0 %v1780, 127
    %v1837 = vpop.permute.xlu0 %1836
    %1838 = vrot.lane.b32.xlu0 %v1781, 127
    %v1839 = vpop.permute.xlu0 %1838
    %1840 = vrot.lane.b32.xlu0 %v1782, 127
    %v1841 = vpop.permute.xlu0 %1840
    %1842 = vrot.lane.b32.xlu0 %v1783, 127
    %v1843 = vpop.permute.xlu0 %1842
    %1844 = vrot.lane.b32.xlu0 %v1784, 127
    %v1845 = vpop.permute.xlu0 %1844
    %1846 = vrot.lane.b32.xlu0 %v1785, 127
    %v1847 = vpop.permute.xlu0 %1846
    %1848 = vrot.lane.b32.xlu0 %v1786, 127
    %v1849 = vpop.permute.xlu0 %1848
    %1850 = vrot.lane.b32.xlu0 %v1787, 127
    %v1851 = vpop.permute.xlu0 %1850
    %1852 = vrot.lane.b32.xlu0 %v1788, 127
    %v1853 = vpop.permute.xlu0 %1852
    %1854 = vrot.lane.b32.xlu0 %v1789, 127
    %v1855 = vpop.permute.xlu0 %1854
    %1856 = vrot.lane.b32.xlu0 %v1790, 127
    %v1857 = vpop.permute.xlu0 %1856
    %1858 = vrot.lane.b32.xlu0 %v1791, 127
    %v1859 = vpop.permute.xlu0 %1858
    %1860 = vrot.lane.b32.xlu0 %v1792, 127
    %v1861 = vpop.permute.xlu0 %1860
    %1862 = vrot.lane.b32.xlu0 %v1793, 127
    %v1863 = vpop.permute.xlu0 %1862
    %1864 = vrot.lane.b32.xlu0 %v1794, 127
    %v1865 = vpop.permute.xlu0 %1864
    %1866 = vrot.lane.b32.xlu0 %v1795, 127
    %v1867 = vpop.permute.xlu0 %1866
    %1868 = vrot.lane.b32.xlu0 %v1796, 127
    %v1869 = vpop.permute.xlu0 %1868
    %1870 = vrot.lane.b32.xlu0 %v1797, 127
    %v1871 = vpop.permute.xlu0 %1870
    %1872 = vrot.lane.b32.xlu0 %v1798, 127
    %v1873 = vpop.permute.xlu0 %1872
    %1874 = vrot.lane.b32.xlu0 %v1799, 127
    %v1875 = vpop.permute.xlu0 %1874
    %1876 = vrot.lane.b32.xlu0 %v1800, 127
    %v1877 = vpop.permute.xlu0 %1876
    %1878 = vrot.lane.b32.xlu0 %v1801, 127
    %v1879 = vpop.permute.xlu0 %1878
    %1880 = vrot.lane.b32.xlu0 %v1802, 127
    %v1881 = vpop.permute.xlu0 %1880
    %1882 = vrot.lane.b32.xlu0 %v1803, 127
    %v1883 = vpop.permute.xlu0 %1882
    %1884 = vrot.lane.b32.xlu0 %v1804, 127
    %v1885 = vpop.permute.xlu0 %1884
    %1886 = vrot.lane.b32.xlu0 %v1805, 127
    %v1887 = vpop.permute.xlu0 %1886
    %1888 = vrot.lane.b32.xlu0 %v1806, 127
    %v1889 = vpop.permute.xlu0 %1888
    %1890 = vrot.lane.b32.xlu0 %v1807, 127
    %v1891 = vpop.permute.xlu0 %1890
    %v1892 = vsel %vm178, %v1837, %v1839
    %v1893 = vsel %vm178, %v1839, %v1841
    %v1894 = vsel %vm178, %v1841, %v1843
    %v1895 = vsel %vm178, %v1843, %v1845
    %v1896 = vsel %vm178, %v1845, %v1847
    %v1897 = vsel %vm178, %v1847, %v1849
    %v1898 = vsel %vm178, %v1851, %v1853
    %v1899 = vsel %vm178, %v1853, %v1855
    %v1900 = vsel %vm178, %v1855, %v1857
    %v1901 = vsel %vm178, %v1857, %v1859
    %v1902 = vsel %vm178, %v1859, %v1861
    %v1903 = vsel %vm178, %v1861, %v1863
    %v1904 = vsel %vm178, %v1865, %v1867
    %v1905 = vsel %vm178, %v1867, %v1869
    %v1906 = vsel %vm178, %v1869, %v1871
    %v1907 = vsel %vm178, %v1871, %v1873
    %v1908 = vsel %vm178, %v1873, %v1875
    %v1909 = vsel %vm178, %v1875, %v1877
    %v1910 = vsel %vm178, %v1879, %v1881
    %v1911 = vsel %vm178, %v1881, %v1883
    %v1912 = vsel %vm178, %v1883, %v1885
    %v1913 = vsel %vm178, %v1885, %v1887
    %v1914 = vsel %vm178, %v1887, %v1889
    %v1915 = vsel %vm178, %v1889, %v1891
    %1940 = vst [vmem:[#allocation3 + $0x3c0] sm:$0xff] %v1892
    %1941 = vst [vmem:[#allocation3 + $0x3c8] sm:$0xff] %v1893
    %1942 = vst [vmem:[#allocation3 + $0x3d0] sm:$0xff] %v1894
    %1943 = vst [vmem:[#allocation3 + $0x3d8] sm:$0xff] %v1895
    %1944 = vst [vmem:[#allocation3 + $0x3e0] sm:$0xff] %v1896
    %1945 = vst [vmem:[#allocation3 + $0x3e8] sm:$0xff] %v1897
    %1946 = vst [vmem:[#allocation3 + $0x3f0] sm:$0xff] %v1898
    %1947 = vst [vmem:[#allocation3 + $0x3f8] sm:$0xff] %v1899
    %1948 = vst [vmem:[#allocation3 + $0x400] sm:$0xff] %v1900
    %1949 = vst [vmem:[#allocation3 + $0x408] sm:$0xff] %v1901
    %1950 = vst [vmem:[#allocation3 + $0x410] sm:$0xff] %v1902
    %1951 = vst [vmem:[#allocation3 + $0x418] sm:$0xff] %v1903
    %1952 = vst [vmem:[#allocation3 + $0x420] sm:$0xff] %v1904
    %1953 = vst [vmem:[#allocation3 + $0x428] sm:$0xff] %v1905
    %1954 = vst [vmem:[#allocation3 + $0x430] sm:$0xff] %v1906
    %1955 = vst [vmem:[#allocation3 + $0x438] sm:$0xff] %v1907
    %1956 = vst [vmem:[#allocation3 + $0x440] sm:$0xff] %v1908
    %1957 = vst [vmem:[#allocation3 + $0x448] sm:$0xff] %v1909
    %1958 = vst [vmem:[#allocation3 + $0x450] sm:$0xff] %v1910
    %1959 = vst [vmem:[#allocation3 + $0x458] sm:$0xff] %v1911
    %1960 = vst [vmem:[#allocation3 + $0x460] sm:$0xff] %v1912
    %1961 = vst [vmem:[#allocation3 + $0x468] sm:$0xff] %v1913
    %1962 = vst [vmem:[#allocation3 + $0x470] sm:$0xff] %v1914
    %1963 = vst [vmem:[#allocation3 + $0x478] sm:$0xff] %v1915
    %v1964 = vld [vmem:[#allocation4 + $0x8] sm:$0xff]
    %v1965 = vld [vmem:[#allocation4 + $0x10] sm:$0xff]
    %v1966 = vld [vmem:[#allocation4 + $0x18] sm:$0xff]
    %v1967 = vld [vmem:[#allocation4 + $0x20] sm:$0xff]
    %v1968 = vld [vmem:[#allocation4 + $0x28] sm:$0xff]
    %v1969 = vld [vmem:[#allocation4 + $0x30] sm:$0xff]
    %v1970 = vld [vmem:[#allocation4 + $0x38] sm:$0xff]
    %v1971 = vld [vmem:[#allocation4 + $0x48] sm:$0xff]
    %v1972 = vld [vmem:[#allocation4 + $0x50] sm:$0xff]
    %v1973 = vld [vmem:[#allocation4 + $0x58] sm:$0xff]
    %v1974 = vld [vmem:[#allocation4 + $0x60] sm:$0xff]
    %v1975 = vld [vmem:[#allocation4 + $0x68] sm:$0xff]
    %v1976 = vld [vmem:[#allocation4 + $0x70] sm:$0xff]
    %v1977 = vld [vmem:[#allocation4 + $0x78] sm:$0xff]
    %v1978 = vld [vmem:[#allocation4 + $0x88] sm:$0xff]
    %v1979 = vld [vmem:[#allocation4 + $0x90] sm:$0xff]
    %v1980 = vld [vmem:[#allocation4 + $0x98] sm:$0xff]
    %v1981 = vld [vmem:[#allocation4 + $0xa0] sm:$0xff]
    %v1982 = vld [vmem:[#allocation4 + $0xa8] sm:$0xff]
    %v1983 = vld [vmem:[#allocation4 + $0xb0] sm:$0xff]
    %v1984 = vld [vmem:[#allocation4 + $0xb8] sm:$0xff]
    %v1985 = vld [vmem:[#allocation4 + $0xc8] sm:$0xff]
    %v1986 = vld [vmem:[#allocation4 + $0xd0] sm:$0xff]
    %v1987 = vld [vmem:[#allocation4 + $0xd8] sm:$0xff]
    %v1988 = vld [vmem:[#allocation4 + $0xe0] sm:$0xff]
    %v1989 = vld [vmem:[#allocation4 + $0xe8] sm:$0xff]
    %v1990 = vld [vmem:[#allocation4 + $0xf0] sm:$0xff]
    %v1991 = vld [vmem:[#allocation4 + $0xf8] sm:$0xff]
    %2020 = vrot.lane.b32.xlu0 %v1964, 111
    %v2021 = vpop.permute.xlu0 %2020
    %2022 = vrot.lane.b32.xlu0 %v1965, 111
    %v2023 = vpop.permute.xlu0 %2022
    %2024 = vrot.lane.b32.xlu0 %v1966, 111
    %v2025 = vpop.permute.xlu0 %2024
    %2026 = vrot.lane.b32.xlu0 %v1967, 111
    %v2027 = vpop.permute.xlu0 %2026
    %2028 = vrot.lane.b32.xlu0 %v1968, 111
    %v2029 = vpop.permute.xlu0 %2028
    %2030 = vrot.lane.b32.xlu0 %v1969, 111
    %v2031 = vpop.permute.xlu0 %2030
    %2032 = vrot.lane.b32.xlu0 %v1970, 111
    %v2033 = vpop.permute.xlu0 %2032
    %2034 = vrot.lane.b32.xlu0 %v1971, 111
    %v2035 = vpop.permute.xlu0 %2034
    %2036 = vrot.lane.b32.xlu0 %v1972, 111
    %v2037 = vpop.permute.xlu0 %2036
    %2038 = vrot.lane.b32.xlu0 %v1973, 111
    %v2039 = vpop.permute.xlu0 %2038
    %2040 = vrot.lane.b32.xlu0 %v1974, 111
    %v2041 = vpop.permute.xlu0 %2040
    %2042 = vrot.lane.b32.xlu0 %v1975, 111
    %v2043 = vpop.permute.xlu0 %2042
    %2044 = vrot.lane.b32.xlu0 %v1976, 111
    %v2045 = vpop.permute.xlu0 %2044
    %2046 = vrot.lane.b32.xlu0 %v1977, 111
    %v2047 = vpop.permute.xlu0 %2046
    %2048 = vrot.lane.b32.xlu0 %v1978, 111
    %v2049 = vpop.permute.xlu0 %2048
    %2050 = vrot.lane.b32.xlu0 %v1979, 111
    %v2051 = vpop.permute.xlu0 %2050
    %2052 = vrot.lane.b32.xlu0 %v1980, 111
    %v2053 = vpop.permute.xlu0 %2052
    %2054 = vrot.lane.b32.xlu0 %v1981, 111
    %v2055 = vpop.permute.xlu0 %2054
    %2056 = vrot.lane.b32.xlu0 %v1982, 111
    %v2057 = vpop.permute.xlu0 %2056
    %2058 = vrot.lane.b32.xlu0 %v1983, 111
    %v2059 = vpop.permute.xlu0 %2058
    %2060 = vrot.lane.b32.xlu0 %v1984, 111
    %v2061 = vpop.permute.xlu0 %2060
    %2062 = vrot.lane.b32.xlu0 %v1985, 111
    %v2063 = vpop.permute.xlu0 %2062
    %2064 = vrot.lane.b32.xlu0 %v1986, 111
    %v2065 = vpop.permute.xlu0 %2064
    %2066 = vrot.lane.b32.xlu0 %v1987, 111
    %v2067 = vpop.permute.xlu0 %2066
    %2068 = vrot.lane.b32.xlu0 %v1988, 111
    %v2069 = vpop.permute.xlu0 %2068
    %2070 = vrot.lane.b32.xlu0 %v1989, 111
    %v2071 = vpop.permute.xlu0 %2070
    %2072 = vrot.lane.b32.xlu0 %v1990, 111
    %v2073 = vpop.permute.xlu0 %2072
    %2074 = vrot.lane.b32.xlu0 %v1991, 111
    %v2075 = vpop.permute.xlu0 %2074
    %vm2076 = vcmask 908288
    %v2077 = vsel %vm2076, %v2021, %v2023
    %v2078 = vsel %vm2076, %v2023, %v2025
    %v2079 = vsel %vm2076, %v2025, %v2027
    %v2080 = vsel %vm2076, %v2027, %v2029
    %v2081 = vsel %vm2076, %v2029, %v2031
    %v2082 = vsel %vm2076, %v2031, %v2033
    %v2083 = vsel %vm2076, %v2035, %v2037
    %v2084 = vsel %vm2076, %v2037, %v2039
    %v2085 = vsel %vm2076, %v2039, %v2041
    %v2086 = vsel %vm2076, %v2041, %v2043
    %v2087 = vsel %vm2076, %v2043, %v2045
    %v2088 = vsel %vm2076, %v2045, %v2047
    %v2089 = vsel %vm2076, %v2049, %v2051
    %v2090 = vsel %vm2076, %v2051, %v2053
    %v2091 = vsel %vm2076, %v2053, %v2055
    %v2092 = vsel %vm2076, %v2055, %v2057
    %v2093 = vsel %vm2076, %v2057, %v2059
    %v2094 = vsel %vm2076, %v2059, %v2061
    %v2095 = vsel %vm2076, %v2063, %v2065
    %v2096 = vsel %vm2076, %v2065, %v2067
    %v2097 = vsel %vm2076, %v2067, %v2069
    %v2098 = vsel %vm2076, %v2069, %v2071
    %v2099 = vsel %vm2076, %v2071, %v2073
    %v2100 = vsel %vm2076, %v2073, %v2075
    %2125 = vst [vmem:[#allocation3 + $0x480] sm:$0xff] %v2077
    %2126 = vst [vmem:[#allocation3 + $0x488] sm:$0xff] %v2078
    %2127 = vst [vmem:[#allocation3 + $0x490] sm:$0xff] %v2079
    %2128 = vst [vmem:[#allocation3 + $0x498] sm:$0xff] %v2080
    %2129 = vst [vmem:[#allocation3 + $0x4a0] sm:$0xff] %v2081
    %2130 = vst [vmem:[#allocation3 + $0x4a8] sm:$0xff] %v2082
    %2131 = vst [vmem:[#allocation3 + $0x4b0] sm:$0xff] %v2083
    %2132 = vst [vmem:[#allocation3 + $0x4b8] sm:$0xff] %v2084
    %2133 = vst [vmem:[#allocation3 + $0x4c0] sm:$0xff] %v2085
    %2134 = vst [vmem:[#allocation3 + $0x4c8] sm:$0xff] %v2086
    %2135 = vst [vmem:[#allocation3 + $0x4d0] sm:$0xff] %v2087
    %2136 = vst [vmem:[#allocation3 + $0x4d8] sm:$0xff] %v2088
    %2137 = vst [vmem:[#allocation3 + $0x4e0] sm:$0xff] %v2089
    %2138 = vst [vmem:[#allocation3 + $0x4e8] sm:$0xff] %v2090
    %2139 = vst [vmem:[#allocation3 + $0x4f0] sm:$0xff] %v2091
    %2140 = vst [vmem:[#allocation3 + $0x4f8] sm:$0xff] %v2092
    %2141 = vst [vmem:[#allocation3 + $0x500] sm:$0xff] %v2093
    %2142 = vst [vmem:[#allocation3 + $0x508] sm:$0xff] %v2094
    %2143 = vst [vmem:[#allocation3 + $0x510] sm:$0xff] %v2095
    %2144 = vst [vmem:[#allocation3 + $0x518] sm:$0xff] %v2096
    %2145 = vst [vmem:[#allocation3 + $0x520] sm:$0xff] %v2097
    %2146 = vst [vmem:[#allocation3 + $0x528] sm:$0xff] %v2098
    %2147 = vst [vmem:[#allocation3 + $0x530] sm:$0xff] %v2099
    %2148 = vst [vmem:[#allocation3 + $0x538] sm:$0xff] %v2100
    %v2149 = vld [vmem:[#allocation4 + $0x8] sm:$0xff]
    %v2150 = vld [vmem:[#allocation4 + $0x10] sm:$0xff]
    %v2151 = vld [vmem:[#allocation4 + $0x18] sm:$0xff]
    %v2152 = vld [vmem:[#allocation4 + $0x20] sm:$0xff]
    %v2153 = vld [vmem:[#allocation4 + $0x28] sm:$0xff]
    %v2154 = vld [vmem:[#allocation4 + $0x30] sm:$0xff]
    %v2155 = vld [vmem:[#allocation4 + $0x38] sm:$0xff]
    %v2156 = vld [vmem:[#allocation4 + $0x48] sm:$0xff]
    %v2157 = vld [vmem:[#allocation4 + $0x50] sm:$0xff]
    %v2158 = vld [vmem:[#allocation4 + $0x58] sm:$0xff]
    %v2159 = vld [vmem:[#allocation4 + $0x60] sm:$0xff]
    %v2160 = vld [vmem:[#allocation4 + $0x68] sm:$0xff]
    %v2161 = vld [vmem:[#allocation4 + $0x70] sm:$0xff]
    %v2162 = vld [vmem:[#allocation4 + $0x78] sm:$0xff]
    %v2163 = vld [vmem:[#allocation4 + $0x88] sm:$0xff]
    %v2164 = vld [vmem:[#allocation4 + $0x90] sm:$0xff]
    %v2165 = vld [vmem:[#allocation4 + $0x98] sm:$0xff]
    %v2166 = vld [vmem:[#allocation4 + $0xa0] sm:$0xff]
    %v2167 = vld [vmem:[#allocation4 + $0xa8] sm:$0xff]
    %v2168 = vld [vmem:[#allocation4 + $0xb0] sm:$0xff]
    %v2169 = vld [vmem:[#allocation4 + $0xb8] sm:$0xff]
    %v2170 = vld [vmem:[#allocation4 + $0xc8] sm:$0xff]
    %v2171 = vld [vmem:[#allocation4 + $0xd0] sm:$0xff]
    %v2172 = vld [vmem:[#allocation4 + $0xd8] sm:$0xff]
    %v2173 = vld [vmem:[#allocation4 + $0xe0] sm:$0xff]
    %v2174 = vld [vmem:[#allocation4 + $0xe8] sm:$0xff]
    %v2175 = vld [vmem:[#allocation4 + $0xf0] sm:$0xff]
    %v2176 = vld [vmem:[#allocation4 + $0xf8] sm:$0xff]
    %2205 = vrot.lane.b32.xlu0 %v2149, 110
    %v2206 = vpop.permute.xlu0 %2205
    %2207 = vrot.lane.b32.xlu0 %v2150, 110
    %v2208 = vpop.permute.xlu0 %2207
    %2209 = vrot.lane.b32.xlu0 %v2151, 110
    %v2210 = vpop.permute.xlu0 %2209
    %2211 = vrot.lane.b32.xlu0 %v2152, 110
    %v2212 = vpop.permute.xlu0 %2211
    %2213 = vrot.lane.b32.xlu0 %v2153, 110
    %v2214 = vpop.permute.xlu0 %2213
    %2215 = vrot.lane.b32.xlu0 %v2154, 110
    %v2216 = vpop.permute.xlu0 %2215
    %2217 = vrot.lane.b32.xlu0 %v2155, 110
    %v2218 = vpop.permute.xlu0 %2217
    %2219 = vrot.lane.b32.xlu0 %v2156, 110
    %v2220 = vpop.permute.xlu0 %2219
    %2221 = vrot.lane.b32.xlu0 %v2157, 110
    %v2222 = vpop.permute.xlu0 %2221
    %2223 = vrot.lane.b32.xlu0 %v2158, 110
    %v2224 = vpop.permute.xlu0 %2223
    %2225 = vrot.lane.b32.xlu0 %v2159, 110
    %v2226 = vpop.permute.xlu0 %2225
    %2227 = vrot.lane.b32.xlu0 %v2160, 110
    %v2228 = vpop.permute.xlu0 %2227
    %2229 = vrot.lane.b32.xlu0 %v2161, 110
    %v2230 = vpop.permute.xlu0 %2229
    %2231 = vrot.lane.b32.xlu0 %v2162, 110
    %v2232 = vpop.permute.xlu0 %2231
    %2233 = vrot.lane.b32.xlu0 %v2163, 110
    %v2234 = vpop.permute.xlu0 %2233
    %2235 = vrot.lane.b32.xlu0 %v2164, 110
    %v2236 = vpop.permute.xlu0 %2235
    %2237 = vrot.lane.b32.xlu0 %v2165, 110
    %v2238 = vpop.permute.xlu0 %2237
    %2239 = vrot.lane.b32.xlu0 %v2166, 110
    %v2240 = vpop.permute.xlu0 %2239
    %2241 = vrot.lane.b32.xlu0 %v2167, 110
    %v2242 = vpop.permute.xlu0 %2241
    %2243 = vrot.lane.b32.xlu0 %v2168, 110
    %v2244 = vpop.permute.xlu0 %2243
    %2245 = vrot.lane.b32.xlu0 %v2169, 110
    %v2246 = vpop.permute.xlu0 %2245
    %2247 = vrot.lane.b32.xlu0 %v2170, 110
    %v2248 = vpop.permute.xlu0 %2247
    %2249 = vrot.lane.b32.xlu0 %v2171, 110
    %v2250 = vpop.permute.xlu0 %2249
    %2251 = vrot.lane.b32.xlu0 %v2172, 110
    %v2252 = vpop.permute.xlu0 %2251
    %2253 = vrot.lane.b32.xlu0 %v2173, 110
    %v2254 = vpop.permute.xlu0 %2253
    %2255 = vrot.lane.b32.xlu0 %v2174, 110
    %v2256 = vpop.permute.xlu0 %2255
    %2257 = vrot.lane.b32.xlu0 %v2175, 110
    %v2258 = vpop.permute.xlu0 %2257
    %2259 = vrot.lane.b32.xlu0 %v2176, 110
    %v2260 = vpop.permute.xlu0 %2259
    %v2261 = vsel %vm272, %v2206, %v2208
    %v2262 = vsel %vm272, %v2208, %v2210
    %v2263 = vsel %vm272, %v2210, %v2212
    %v2264 = vsel %vm272, %v2212, %v2214
    %v2265 = vsel %vm272, %v2214, %v2216
    %v2266 = vsel %vm272, %v2216, %v2218
    %v2267 = vsel %vm272, %v2220, %v2222
    %v2268 = vsel %vm272, %v2222, %v2224
    %v2269 = vsel %vm272, %v2224, %v2226
    %v2270 = vsel %vm272, %v2226, %v2228
    %v2271 = vsel %vm272, %v2228, %v2230
    %v2272 = vsel %vm272, %v2230, %v2232
    %v2273 = vsel %vm272, %v2234, %v2236
    %v2274 = vsel %vm272, %v2236, %v2238
    %v2275 = vsel %vm272, %v2238, %v2240
    %v2276 = vsel %vm272, %v2240, %v2242
    %v2277 = vsel %vm272, %v2242, %v2244
    %v2278 = vsel %vm272, %v2244, %v2246
    %v2279 = vsel %vm272, %v2248, %v2250
    %v2280 = vsel %vm272, %v2250, %v2252
    %v2281 = vsel %vm272, %v2252, %v2254
    %v2282 = vsel %vm272, %v2254, %v2256
    %v2283 = vsel %vm272, %v2256, %v2258
    %v2284 = vsel %vm272, %v2258, %v2260
    %2309 = vst [vmem:[#allocation3 + $0x540] sm:$0xff] %v2261
    %2310 = vst [vmem:[#allocation3 + $0x548] sm:$0xff] %v2262
    %2311 = vst [vmem:[#allocation3 + $0x550] sm:$0xff] %v2263
    %2312 = vst [vmem:[#allocation3 + $0x558] sm:$0xff] %v2264
    %2313 = vst [vmem:[#allocation3 + $0x560] sm:$0xff] %v2265
    %2314 = vst [vmem:[#allocation3 + $0x568] sm:$0xff] %v2266
    %2315 = vst [vmem:[#allocation3 + $0x570] sm:$0xff] %v2267
    %2316 = vst [vmem:[#allocation3 + $0x578] sm:$0xff] %v2268
    %2317 = vst [vmem:[#allocation3 + $0x580] sm:$0xff] %v2269
    %2318 = vst [vmem:[#allocation3 + $0x588] sm:$0xff] %v2270
    %2319 = vst [vmem:[#allocation3 + $0x590] sm:$0xff] %v2271
    %2320 = vst [vmem:[#allocation3 + $0x598] sm:$0xff] %v2272
    %2321 = vst [vmem:[#allocation3 + $0x5a0] sm:$0xff] %v2273
    %2322 = vst [vmem:[#allocation3 + $0x5a8] sm:$0xff] %v2274
    %2323 = vst [vmem:[#allocation3 + $0x5b0] sm:$0xff] %v2275
    %2324 = vst [vmem:[#allocation3 + $0x5b8] sm:$0xff] %v2276
    %2325 = vst [vmem:[#allocation3 + $0x5c0] sm:$0xff] %v2277
    %2326 = vst [vmem:[#allocation3 + $0x5c8] sm:$0xff] %v2278
    %2327 = vst [vmem:[#allocation3 + $0x5d0] sm:$0xff] %v2279
    %2328 = vst [vmem:[#allocation3 + $0x5d8] sm:$0xff] %v2280
    %2329 = vst [vmem:[#allocation3 + $0x5e0] sm:$0xff] %v2281
    %2330 = vst [vmem:[#allocation3 + $0x5e8] sm:$0xff] %v2282
    %2331 = vst [vmem:[#allocation3 + $0x5f0] sm:$0xff] %v2283
    %2332 = vst [vmem:[#allocation3 + $0x5f8] sm:$0xff] %v2284
    %v2333 = vld [vmem:[#allocation4 + $0x8] sm:$0xff]
    %v2334 = vld [vmem:[#allocation4 + $0x10] sm:$0xff]
    %v2335 = vld [vmem:[#allocation4 + $0x18] sm:$0xff]
    %v2336 = vld [vmem:[#allocation4 + $0x20] sm:$0xff]
    %v2337 = vld [vmem:[#allocation4 + $0x28] sm:$0xff]
    %v2338 = vld [vmem:[#allocation4 + $0x30] sm:$0xff]
    %v2339 = vld [vmem:[#allocation4 + $0x38] sm:$0xff]
    %v2340 = vld [vmem:[#allocation4 + $0x48] sm:$0xff]
    %v2341 = vld [vmem:[#allocation4 + $0x50] sm:$0xff]
    %v2342 = vld [vmem:[#allocation4 + $0x58] sm:$0xff]
    %v2343 = vld [vmem:[#allocation4 + $0x60] sm:$0xff]
    %v2344 = vld [vmem:[#allocation4 + $0x68] sm:$0xff]
    %v2345 = vld [vmem:[#allocation4 + $0x70] sm:$0xff]
    %v2346 = vld [vmem:[#allocation4 + $0x78] sm:$0xff]
    %v2347 = vld [vmem:[#allocation4 + $0x88] sm:$0xff]
    %v2348 = vld [vmem:[#allocation4 + $0x90] sm:$0xff]
    %v2349 = vld [vmem:[#allocation4 + $0x98] sm:$0xff]
    %v2350 = vld [vmem:[#allocation4 + $0xa0] sm:$0xff]
    %v2351 = vld [vmem:[#allocation4 + $0xa8] sm:$0xff]
    %v2352 = vld [vmem:[#allocation4 + $0xb0] sm:$0xff]
    %v2353 = vld [vmem:[#allocation4 + $0xb8] sm:$0xff]
    %v2354 = vld [vmem:[#allocation4 + $0xc8] sm:$0xff]
    %v2355 = vld [vmem:[#allocation4 + $0xd0] sm:$0xff]
    %v2356 = vld [vmem:[#allocation4 + $0xd8] sm:$0xff]
    %v2357 = vld [vmem:[#allocation4 + $0xe0] sm:$0xff]
    %v2358 = vld [vmem:[#allocation4 + $0xe8] sm:$0xff]
    %v2359 = vld [vmem:[#allocation4 + $0xf0] sm:$0xff]
    %v2360 = vld [vmem:[#allocation4 + $0xf8] sm:$0xff]
    %2389 = vrot.lane.b32.xlu0 %v2333, 109
    %v2390 = vpop.permute.xlu0 %2389
    %2391 = vrot.lane.b32.xlu0 %v2334, 109
    %v2392 = vpop.permute.xlu0 %2391
    %2393 = vrot.lane.b32.xlu0 %v2335, 109
    %v2394 = vpop.permute.xlu0 %2393
    %2395 = vrot.lane.b32.xlu0 %v2336, 109
    %v2396 = vpop.permute.xlu0 %2395
    %2397 = vrot.lane.b32.xlu0 %v2337, 109
    %v2398 = vpop.permute.xlu0 %2397
    %2399 = vrot.lane.b32.xlu0 %v2338, 109
    %v2400 = vpop.permute.xlu0 %2399
    %2401 = vrot.lane.b32.xlu0 %v2339, 109
    %v2402 = vpop.permute.xlu0 %2401
    %2403 = vrot.lane.b32.xlu0 %v2340, 109
    %v2404 = vpop.permute.xlu0 %2403
    %2405 = vrot.lane.b32.xlu0 %v2341, 109
    %v2406 = vpop.permute.xlu0 %2405
    %2407 = vrot.lane.b32.xlu0 %v2342, 109
    %v2408 = vpop.permute.xlu0 %2407
    %2409 = vrot.lane.b32.xlu0 %v2343, 109
    %v2410 = vpop.permute.xlu0 %2409
    %2411 = vrot.lane.b32.xlu0 %v2344, 109
    %v2412 = vpop.permute.xlu0 %2411
    %2413 = vrot.lane.b32.xlu0 %v2345, 109
    %v2414 = vpop.permute.xlu0 %2413
    %2415 = vrot.lane.b32.xlu0 %v2346, 109
    %v2416 = vpop.permute.xlu0 %2415
    %2417 = vrot.lane.b32.xlu0 %v2347, 109
    %v2418 = vpop.permute.xlu0 %2417
    %2419 = vrot.lane.b32.xlu0 %v2348, 109
    %v2420 = vpop.permute.xlu0 %2419
    %2421 = vrot.lane.b32.xlu0 %v2349, 109
    %v2422 = vpop.permute.xlu0 %2421
    %2423 = vrot.lane.b32.xlu0 %v2350, 109
    %v2424 = vpop.permute.xlu0 %2423
    %2425 = vrot.lane.b32.xlu0 %v2351, 109
    %v2426 = vpop.permute.xlu0 %2425
    %2427 = vrot.lane.b32.xlu0 %v2352, 109
    %v2428 = vpop.permute.xlu0 %2427
    %2429 = vrot.lane.b32.xlu0 %v2353, 109
    %v2430 = vpop.permute.xlu0 %2429
    %2431 = vrot.lane.b32.xlu0 %v2354, 109
    %v2432 = vpop.permute.xlu0 %2431
    %2433 = vrot.lane.b32.xlu0 %v2355, 109
    %v2434 = vpop.permute.xlu0 %2433
    %2435 = vrot.lane.b32.xlu0 %v2356, 109
    %v2436 = vpop.permute.xlu0 %2435
    %2437 = vrot.lane.b32.xlu0 %v2357, 109
    %v2438 = vpop.permute.xlu0 %2437
    %2439 = vrot.lane.b32.xlu0 %v2358, 109
    %v2440 = vpop.permute.xlu0 %2439
    %2441 = vrot.lane.b32.xlu0 %v2359, 109
    %v2442 = vpop.permute.xlu0 %2441
    %2443 = vrot.lane.b32.xlu0 %v2360, 109
    %v2444 = vpop.permute.xlu0 %2443
    %v2445 = vsel %vm319, %v2390, %v2392
    %v2446 = vsel %vm319, %v2392, %v2394
    %v2447 = vsel %vm319, %v2394, %v2396
    %v2448 = vsel %vm319, %v2396, %v2398
    %v2449 = vsel %vm319, %v2398, %v2400
    %v2450 = vsel %vm319, %v2400, %v2402
    %v2451 = vsel %vm319, %v2404, %v2406
    %v2452 = vsel %vm319, %v2406, %v2408
    %v2453 = vsel %vm319, %v2408, %v2410
    %v2454 = vsel %vm319, %v2410, %v2412
    %v2455 = vsel %vm319, %v2412, %v2414
    %v2456 = vsel %vm319, %v2414, %v2416
    %v2457 = vsel %vm319, %v2418, %v2420
    %v2458 = vsel %vm319, %v2420, %v2422
    %v2459 = vsel %vm319, %v2422, %v2424
    %v2460 = vsel %vm319, %v2424, %v2426
    %v2461 = vsel %vm319, %v2426, %v2428
    %v2462 = vsel %vm319, %v2428, %v2430
    %v2463 = vsel %vm319, %v2432, %v2434
    %v2464 = vsel %vm319, %v2434, %v2436
    %v2465 = vsel %vm319, %v2436, %v2438
    %v2466 = vsel %vm319, %v2438, %v2440
    %v2467 = vsel %vm319, %v2440, %v2442
    %v2468 = vsel %vm319, %v2442, %v2444
    %2493 = vst [vmem:[#allocation3 + $0x600] sm:$0xff] %v2445
    %2494 = vst [vmem:[#allocation3 + $0x608] sm:$0xff] %v2446
    %2495 = vst [vmem:[#allocation3 + $0x610] sm:$0xff] %v2447
    %2496 = vst [vmem:[#allocation3 + $0x618] sm:$0xff] %v2448
    %2497 = vst [vmem:[#allocation3 + $0x620] sm:$0xff] %v2449
    %2498 = vst [vmem:[#allocation3 + $0x628] sm:$0xff] %v2450
    %2499 = vst [vmem:[#allocation3 + $0x630] sm:$0xff] %v2451
    %2500 = vst [vmem:[#allocation3 + $0x638] sm:$0xff] %v2452
    %2501 = vst [vmem:[#allocation3 + $0x640] sm:$0xff] %v2453
    %2502 = vst [vmem:[#allocation3 + $0x648] sm:$0xff] %v2454
    %2503 = vst [vmem:[#allocation3 + $0x650] sm:$0xff] %v2455
    %2504 = vst [vmem:[#allocation3 + $0x658] sm:$0xff] %v2456
    %2505 = vst [vmem:[#allocation3 + $0x660] sm:$0xff] %v2457
    %2506 = vst [vmem:[#allocation3 + $0x668] sm:$0xff] %v2458
    %2507 = vst [vmem:[#allocation3 + $0x670] sm:$0xff] %v2459
    %2508 = vst [vmem:[#allocation3 + $0x678] sm:$0xff] %v2460
    %2509 = vst [vmem:[#allocation3 + $0x680] sm:$0xff] %v2461
    %2510 = vst [vmem:[#allocation3 + $0x688] sm:$0xff] %v2462
    %2511 = vst [vmem:[#allocation3 + $0x690] sm:$0xff] %v2463
    %2512 = vst [vmem:[#allocation3 + $0x698] sm:$0xff] %v2464
    %2513 = vst [vmem:[#allocation3 + $0x6a0] sm:$0xff] %v2465
    %2514 = vst [vmem:[#allocation3 + $0x6a8] sm:$0xff] %v2466
    %2515 = vst [vmem:[#allocation3 + $0x6b0] sm:$0xff] %v2467
    %2516 = vst [vmem:[#allocation3 + $0x6b8] sm:$0xff] %v2468
    %v2517 = vld [vmem:[#allocation13] sm:$0xff]
    %v2518 = vld [vmem:[#allocation13 + $0x8] sm:$0xff]
    %v2519 = vld [vmem:[#allocation13 + $0x10] sm:$0xff]
    %v2520 = vld [vmem:[#allocation13 + $0x18] sm:$0xff]
    %v2521 = vld [vmem:[#allocation13 + $0x20] sm:$0xff]
    %v2522 = vld [vmem:[#allocation13 + $0x28] sm:$0xff]
    %v2523 = vld [vmem:[#allocation13 + $0x30] sm:$0xff]
    %v2524 = vld [vmem:[#allocation13 + $0x38] sm:$0xff]
    %v2525 = vld [vmem:[#allocation13 + $0x40] sm:$0xff]
    %v2526 = vld [vmem:[#allocation13 + $0x48] sm:$0xff]
    %v2527 = vld [vmem:[#allocation13 + $0x50] sm:$0xff]
    %v2528 = vld [vmem:[#allocation13 + $0x58] sm:$0xff]
    %v2529 = vld [vmem:[#allocation3] sm:$0xff]
    %v2530 = vld [vmem:[#allocation3 + $0x8] sm:$0xff]
    %v2531 = vld [vmem:[#allocation3 + $0x10] sm:$0xff]
    %v2532 = vld [vmem:[#allocation3 + $0x18] sm:$0xff]
    %v2533 = vld [vmem:[#allocation3 + $0x20] sm:$0xff]
    %v2534 = vld [vmem:[#allocation3 + $0x28] sm:$0xff]
    %v2535 = vld [vmem:[#allocation3 + $0x30] sm:$0xff]
    %v2536 = vld [vmem:[#allocation3 + $0x38] sm:$0xff]
    %v2537 = vld [vmem:[#allocation3 + $0x40] sm:$0xff]
    %v2538 = vld [vmem:[#allocation3 + $0x48] sm:$0xff]
    %v2539 = vld [vmem:[#allocation3 + $0x50] sm:$0xff]
    %v2540 = vld [vmem:[#allocation3 + $0x58] sm:$0xff]
    %v2541 = vld [vmem:[#allocation3 + $0x60] sm:$0xff]
    %v2542 = vld [vmem:[#allocation3 + $0x68] sm:$0xff]
    %v2543 = vld [vmem:[#allocation3 + $0x70] sm:$0xff]
    %v2544 = vld [vmem:[#allocation3 + $0x78] sm:$0xff]
    %v2545 = vld [vmem:[#allocation3 + $0x80] sm:$0xff]
    %v2546 = vld [vmem:[#allocation3 + $0x88] sm:$0xff]
    %v2547 = vld [vmem:[#allocation3 + $0x90] sm:$0xff]
    %v2548 = vld [vmem:[#allocation3 + $0x98] sm:$0xff]
    %v2549 = vld [vmem:[#allocation3 + $0xa0] sm:$0xff]
    %v2550 = vld [vmem:[#allocation3 + $0xa8] sm:$0xff]
    %v2551 = vld [vmem:[#allocation3 + $0xb0] sm:$0xff]
    %v2552 = vld [vmem:[#allocation3 + $0xb8] sm:$0xff]
    %v2553 = vld [vmem:[#allocation3 + $0xc0] sm:$0xff]
    %v2554 = vld [vmem:[#allocation3 + $0xc8] sm:$0xff]
    %v2555 = vld [vmem:[#allocation3 + $0xd0] sm:$0xff]
    %v2556 = vld [vmem:[#allocation3 + $0xd8] sm:$0xff]
    %v2557 = vld [vmem:[#allocation3 + $0xe0] sm:$0xff]
    %v2558 = vld [vmem:[#allocation3 + $0xe8] sm:$0xff]
    %v2559 = vld [vmem:[#allocation3 + $0xf0] sm:$0xff]
    %v2560 = vld [vmem:[#allocation3 + $0xf8] sm:$0xff]
    %v2561 = vld [vmem:[#allocation3 + $0x100] sm:$0xff]
    %v2562 = vld [vmem:[#allocation3 + $0x108] sm:$0xff]
    %v2563 = vld [vmem:[#allocation3 + $0x110] sm:$0xff]
    %v2564 = vld [vmem:[#allocation3 + $0x118] sm:$0xff]
    %v2565 = vld [vmem:[#allocation3 + $0x120] sm:$0xff]
    %v2566 = vld [vmem:[#allocation3 + $0x128] sm:$0xff]
    %v2567 = vld [vmem:[#allocation3 + $0x130] sm:$0xff]
    %v2568 = vld [vmem:[#allocation3 + $0x138] sm:$0xff]
    %v2569 = vld [vmem:[#allocation3 + $0x140] sm:$0xff]
    %v2570 = vld [vmem:[#allocation3 + $0x148] sm:$0xff]
    %v2571 = vld [vmem:[#allocation3 + $0x150] sm:$0xff]
    %v2572 = vld [vmem:[#allocation3 + $0x158] sm:$0xff]
    %v2573 = vld [vmem:[#allocation3 + $0x160] sm:$0xff]
    %v2574 = vld [vmem:[#allocation3 + $0x168] sm:$0xff]
    %v2575 = vld [vmem:[#allocation3 + $0x170] sm:$0xff]
    %v2576 = vld [vmem:[#allocation3 + $0x178] sm:$0xff]
    %v2577 = vld [vmem:[#allocation3 + $0x180] sm:$0xff]
    %v2578 = vld [vmem:[#allocation3 + $0x188] sm:$0xff]
    %v2579 = vld [vmem:[#allocation3 + $0x190] sm:$0xff]
    %v2580 = vld [vmem:[#allocation3 + $0x198] sm:$0xff]
    %v2581 = vld [vmem:[#allocation3 + $0x1a0] sm:$0xff]
    %v2582 = vld [vmem:[#allocation3 + $0x1a8] sm:$0xff]
    %v2583 = vld [vmem:[#allocation3 + $0x1b0] sm:$0xff]
    %v2584 = vld [vmem:[#allocation3 + $0x1b8] sm:$0xff]
    %v2585 = vld [vmem:[#allocation3 + $0x1c0] sm:$0xff]
    %v2586 = vld [vmem:[#allocation3 + $0x1c8] sm:$0xff]
    %v2587 = vld [vmem:[#allocation3 + $0x1d0] sm:$0xff]
    %v2588 = vld [vmem:[#allocation3 + $0x1d8] sm:$0xff]
    %v2589 = vld [vmem:[#allocation3 + $0x1e0] sm:$0xff]
    %v2590 = vld [vmem:[#allocation3 + $0x1e8] sm:$0xff]
    %v2591 = vld [vmem:[#allocation3 + $0x1f0] sm:$0xff]
    %v2592 = vld [vmem:[#allocation3 + $0x1f8] sm:$0xff]
    %v2593 = vld [vmem:[#allocation3 + $0x200] sm:$0xff]
    %v2594 = vld [vmem:[#allocation3 + $0x208] sm:$0xff]
    %v2595 = vld [vmem:[#allocation3 + $0x210] sm:$0xff]
    %v2596 = vld [vmem:[#allocation3 + $0x218] sm:$0xff]
    %v2597 = vld [vmem:[#allocation3 + $0x220] sm:$0xff]
    %v2598 = vld [vmem:[#allocation3 + $0x228] sm:$0xff]
    %v2599 = vld [vmem:[#allocation3 + $0x230] sm:$0xff]
    %v2600 = vld [vmem:[#allocation3 + $0x238] sm:$0xff]
    %v2601 = vld [vmem:[#allocation3 + $0x240] sm:$0xff]
    %v2602 = vld [vmem:[#allocation3 + $0x248] sm:$0xff]
    %v2603 = vld [vmem:[#allocation3 + $0x250] sm:$0xff]
    %v2604 = vld [vmem:[#allocation3 + $0x258] sm:$0xff]
    %v2605 = vld [vmem:[#allocation3 + $0x260] sm:$0xff]
    %v2606 = vld [vmem:[#allocation3 + $0x268] sm:$0xff]
    %v2607 = vld [vmem:[#allocation3 + $0x270] sm:$0xff]
    %v2608 = vld [vmem:[#allocation3 + $0x278] sm:$0xff]
    %v2609 = vld [vmem:[#allocation3 + $0x280] sm:$0xff]
    %v2610 = vld [vmem:[#allocation3 + $0x288] sm:$0xff]
    %v2611 = vld [vmem:[#allocation3 + $0x290] sm:$0xff]
    %v2612 = vld [vmem:[#allocation3 + $0x298] sm:$0xff]
    %v2613 = vld [vmem:[#allocation3 + $0x2a0] sm:$0xff]
    %v2614 = vld [vmem:[#allocation3 + $0x2a8] sm:$0xff]
    %v2615 = vld [vmem:[#allocation3 + $0x2b0] sm:$0xff]
    %v2616 = vld [vmem:[#allocation3 + $0x2b8] sm:$0xff]
    %v2617 = vld [vmem:[#allocation3 + $0x2c0] sm:$0xff]
    %v2618 = vld [vmem:[#allocation3 + $0x2c8] sm:$0xff]
    %v2619 = vld [vmem:[#allocation3 + $0x2d0] sm:$0xff]
    %v2620 = vld [vmem:[#allocation3 + $0x2d8] sm:$0xff]
    %v2621 = vld [vmem:[#allocation3 + $0x2e0] sm:$0xff]
    %v2622 = vld [vmem:[#allocation3 + $0x2e8] sm:$0xff]
    %v2623 = vld [vmem:[#allocation3 + $0x2f0] sm:$0xff]
    %v2624 = vld [vmem:[#allocation3 + $0x2f8] sm:$0xff]
    %v2625 = vld [vmem:[#allocation3 + $0x300] sm:$0xff]
    %v2626 = vld [vmem:[#allocation3 + $0x308] sm:$0xff]
    %v2627 = vld [vmem:[#allocation3 + $0x310] sm:$0xff]
    %v2628 = vld [vmem:[#allocation3 + $0x318] sm:$0xff]
    %v2629 = vld [vmem:[#allocation3 + $0x320] sm:$0xff]
    %v2630 = vld [vmem:[#allocation3 + $0x328] sm:$0xff]
    %v2631 = vld [vmem:[#allocation3 + $0x330] sm:$0xff]
    %v2632 = vld [vmem:[#allocation3 + $0x338] sm:$0xff]
    %v2633 = vld [vmem:[#allocation3 + $0x340] sm:$0xff]
    %v2634 = vld [vmem:[#allocation3 + $0x348] sm:$0xff]
    %v2635 = vld [vmem:[#allocation3 + $0x350] sm:$0xff]
    %v2636 = vld [vmem:[#allocation3 + $0x358] sm:$0xff]
    %v2637 = vld [vmem:[#allocation3 + $0x360] sm:$0xff]
    %v2638 = vld [vmem:[#allocation3 + $0x368] sm:$0xff]
    %v2639 = vld [vmem:[#allocation3 + $0x370] sm:$0xff]
    %v2640 = vld [vmem:[#allocation3 + $0x378] sm:$0xff]
    %v2641 = vld [vmem:[#allocation3 + $0x380] sm:$0xff]
    %v2642 = vld [vmem:[#allocation3 + $0x388] sm:$0xff]
    %v2643 = vld [vmem:[#allocation3 + $0x390] sm:$0xff]
    %v2644 = vld [vmem:[#allocation3 + $0x398] sm:$0xff]
    %v2645 = vld [vmem:[#allocation3 + $0x3a0] sm:$0xff]
    %v2646 = vld [vmem:[#allocation3 + $0x3a8] sm:$0xff]
    %v2647 = vld [vmem:[#allocation3 + $0x3b0] sm:$0xff]
    %v2648 = vld [vmem:[#allocation3 + $0x3b8] sm:$0xff]
    %v2649 = vld [vmem:[#allocation3 + $0x3c0] sm:$0xff]
    %v2650 = vld [vmem:[#allocation3 + $0x3c8] sm:$0xff]
    %v2651 = vld [vmem:[#allocation3 + $0x3d0] sm:$0xff]
    %v2652 = vld [vmem:[#allocation3 + $0x3d8] sm:$0xff]
    %v2653 = vld [vmem:[#allocation3 + $0x3e0] sm:$0xff]
    %v2654 = vld [vmem:[#allocation3 + $0x3e8] sm:$0xff]
    %v2655 = vld [vmem:[#allocation3 + $0x3f0] sm:$0xff]
    %v2656 = vld [vmem:[#allocation3 + $0x3f8] sm:$0xff]
    %v2657 = vld [vmem:[#allocation3 + $0x400] sm:$0xff]
    %v2658 = vld [vmem:[#allocation3 + $0x408] sm:$0xff]
    %v2659 = vld [vmem:[#allocation3 + $0x410] sm:$0xff]
    %v2660 = vld [vmem:[#allocation3 + $0x418] sm:$0xff]
    %v2661 = vld [vmem:[#allocation3 + $0x420] sm:$0xff]
    %v2662 = vld [vmem:[#allocation3 + $0x428] sm:$0xff]
    %v2663 = vld [vmem:[#allocation3 + $0x430] sm:$0xff]
    %v2664 = vld [vmem:[#allocation3 + $0x438] sm:$0xff]
    %v2665 = vld [vmem:[#allocation3 + $0x440] sm:$0xff]
    %v2666 = vld [vmem:[#allocation3 + $0x448] sm:$0xff]
    %v2667 = vld [vmem:[#allocation3 + $0x450] sm:$0xff]
    %v2668 = vld [vmem:[#allocation3 + $0x458] sm:$0xff]
    %v2669 = vld [vmem:[#allocation3 + $0x460] sm:$0xff]
    %v2670 = vld [vmem:[#allocation3 + $0x468] sm:$0xff]
    %v2671 = vld [vmem:[#allocation3 + $0x470] sm:$0xff]
    %v2672 = vld [vmem:[#allocation3 + $0x478] sm:$0xff]
    %v2673 = vld [vmem:[#allocation3 + $0x480] sm:$0xff]
    %v2674 = vld [vmem:[#allocation3 + $0x488] sm:$0xff]
    %v2675 = vld [vmem:[#allocation3 + $0x490] sm:$0xff]
    %v2676 = vld [vmem:[#allocation3 + $0x498] sm:$0xff]
    %v2677 = vld [vmem:[#allocation3 + $0x4a0] sm:$0xff]
    %v2678 = vld [vmem:[#allocation3 + $0x4a8] sm:$0xff]
    %v2679 = vld [vmem:[#allocation3 + $0x4b0] sm:$0xff]
    %v2680 = vld [vmem:[#allocation3 + $0x4b8] sm:$0xff]
    %v2681 = vld [vmem:[#allocation3 + $0x4c0] sm:$0xff]
    %v2682 = vld [vmem:[#allocation3 + $0x4c8] sm:$0xff]
    %v2683 = vld [vmem:[#allocation3 + $0x4d0] sm:$0xff]
    %v2684 = vld [vmem:[#allocation3 + $0x4d8] sm:$0xff]
    %v2685 = vld [vmem:[#allocation3 + $0x4e0] sm:$0xff]
    %v2686 = vld [vmem:[#allocation3 + $0x4e8] sm:$0xff]
    %v2687 = vld [vmem:[#allocation3 + $0x4f0] sm:$0xff]
    %v2688 = vld [vmem:[#allocation3 + $0x4f8] sm:$0xff]
    %v2689 = vld [vmem:[#allocation3 + $0x500] sm:$0xff]
    %v2690 = vld [vmem:[#allocation3 + $0x508] sm:$0xff]
    %v2691 = vld [vmem:[#allocation3 + $0x510] sm:$0xff]
    %v2692 = vld [vmem:[#allocation3 + $0x518] sm:$0xff]
    %v2693 = vld [vmem:[#allocation3 + $0x520] sm:$0xff]
    %v2694 = vld [vmem:[#allocation3 + $0x528] sm:$0xff]
    %v2695 = vld [vmem:[#allocation3 + $0x530] sm:$0xff]
    %v2696 = vld [vmem:[#allocation3 + $0x538] sm:$0xff]
    %v2697 = vld [vmem:[#allocation3 + $0x540] sm:$0xff]
    %v2698 = vld [vmem:[#allocation3 + $0x548] sm:$0xff]
    %v2699 = vld [vmem:[#allocation3 + $0x550] sm:$0xff]
    %v2700 = vld [vmem:[#allocation3 + $0x558] sm:$0xff]
    %v2701 = vld [vmem:[#allocation3 + $0x560] sm:$0xff]
    %v2702 = vld [vmem:[#allocation3 + $0x568] sm:$0xff]
    %v2703 = vld [vmem:[#allocation3 + $0x570] sm:$0xff]
    %v2704 = vld [vmem:[#allocation3 + $0x578] sm:$0xff]
    %v2705 = vld [vmem:[#allocation3 + $0x580] sm:$0xff]
    %v2706 = vld [vmem:[#allocation3 + $0x588] sm:$0xff]
    %v2707 = vld [vmem:[#allocation3 + $0x590] sm:$0xff]
    %v2708 = vld [vmem:[#allocation3 + $0x598] sm:$0xff]
    %v2709 = vld [vmem:[#allocation3 + $0x5a0] sm:$0xff]
    %v2710 = vld [vmem:[#allocation3 + $0x5a8] sm:$0xff]
    %v2711 = vld [vmem:[#allocation3 + $0x5b0] sm:$0xff]
    %v2712 = vld [vmem:[#allocation3 + $0x5b8] sm:$0xff]
    %v2713 = vld [vmem:[#allocation3 + $0x5c0] sm:$0xff]
    %v2714 = vld [vmem:[#allocation3 + $0x5c8] sm:$0xff]
    %v2715 = vld [vmem:[#allocation3 + $0x5d0] sm:$0xff]
    %v2716 = vld [vmem:[#allocation3 + $0x5d8] sm:$0xff]
    %v2717 = vld [vmem:[#allocation3 + $0x5e0] sm:$0xff]
    %v2718 = vld [vmem:[#allocation3 + $0x5e8] sm:$0xff]
    %v2719 = vld [vmem:[#allocation3 + $0x5f0] sm:$0xff]
    %v2720 = vld [vmem:[#allocation3 + $0x5f8] sm:$0xff]
    %v2721 = vld [vmem:[#allocation3 + $0x600] sm:$0xff]
    %v2722 = vld [vmem:[#allocation3 + $0x608] sm:$0xff]
    %v2723 = vld [vmem:[#allocation3 + $0x610] sm:$0xff]
    %v2724 = vld [vmem:[#allocation3 + $0x618] sm:$0xff]
    %v2725 = vld [vmem:[#allocation3 + $0x620] sm:$0xff]
    %v2726 = vld [vmem:[#allocation3 + $0x628] sm:$0xff]
    %v2727 = vld [vmem:[#allocation3 + $0x630] sm:$0xff]
    %v2728 = vld [vmem:[#allocation3 + $0x638] sm:$0xff]
    %v2729 = vld [vmem:[#allocation3 + $0x640] sm:$0xff]
    %v2730 = vld [vmem:[#allocation3 + $0x648] sm:$0xff]
    %v2731 = vld [vmem:[#allocation3 + $0x650] sm:$0xff]
    %v2732 = vld [vmem:[#allocation3 + $0x658] sm:$0xff]
    %v2733 = vld [vmem:[#allocation3 + $0x660] sm:$0xff]
    %v2734 = vld [vmem:[#allocation3 + $0x668] sm:$0xff]
    %v2735 = vld [vmem:[#allocation3 + $0x670] sm:$0xff]
    %v2736 = vld [vmem:[#allocation3 + $0x678] sm:$0xff]
    %v2737 = vld [vmem:[#allocation3 + $0x680] sm:$0xff]
    %v2738 = vld [vmem:[#allocation3 + $0x688] sm:$0xff]
    %v2739 = vld [vmem:[#allocation3 + $0x690] sm:$0xff]
    %v2740 = vld [vmem:[#allocation3 + $0x698] sm:$0xff]
    %v2741 = vld [vmem:[#allocation3 + $0x6a0] sm:$0xff]
    %v2742 = vld [vmem:[#allocation3 + $0x6a8] sm:$0xff]
    %v2743 = vld [vmem:[#allocation3 + $0x6b0] sm:$0xff]
    %v2744 = vld [vmem:[#allocation3 + $0x6b8] sm:$0xff]
    %v2745 = vld [vmem:[#allocation14] sm:$0xff]
    %v2746 = vld [vmem:[#allocation14 + $0x8] sm:$0xff]
    %v2747 = vld [vmem:[#allocation14 + $0x10] sm:$0xff]
    %v2748 = vld [vmem:[#allocation14 + $0x18] sm:$0xff]
    %2750 = vset.pattern.permute.xlu0 0
    %2751 = vperm.xlu0 %2750, %v2745
    %v2752 = vpop.permute.xlu0 %2751
    %2755 = vset.pattern.permute.xlu0 0
    %2756 = vperm.xlu0 %2755, %v2746
    %v2757 = vpop.permute.xlu0 %2756
    %2760 = vset.pattern.permute.xlu0 0
    %2761 = vperm.xlu0 %2760, %v2747
    %v2762 = vpop.permute.xlu0 %2761
    %2765 = vset.pattern.permute.xlu0 0
    %2766 = vperm.xlu0 %2765, %v2748
    %v2767 = vpop.permute.xlu0 %2766
    %vm2769 = vcmask 261120
    %v2771 = vsel %vm2769, %v2519, 0
    %v2774 = vsel %vm2769, %v2522, 0
    %v2777 = vsel %vm2769, %v2525, 0
    %v2780 = vsel %vm2769, %v2528, 0
    %2782 = vmatprep.subr.mxu0 %v2530
    %2783 = vmatpush1.msra.mxu0 %v2529
    %2784 = vmatprep.subr.mxu0 %v2536
    %2785 = vmatpush1.msra.mxu0 %v2535
    %2786 = vmatprep.subr.mxu0 %v2542
    %2787 = vmatpush1.msra.mxu0 %v2541
    %2788 = vmatprep.subr.mxu0 %v2548
    %2789 = vmatpush1.msra.mxu0 %v2547
    %2790 = vmatprep.subr.mxu0 %v2554
    %2791 = vmatpush1.msra.mxu0 %v2553
    %2792 = vmatprep.subr.mxu0 %v2560
    %2793 = vmatpush1.msra.mxu0 %v2559
    %2794 = vmatprep.subr.mxu0 %v2566
    %2795 = vmatpush1.msra.mxu0 %v2565
    %2796 = vmatprep.subr.mxu0 %v2572
    %2797 = vmatpush1.msra.mxu0 %v2571
    %2798 = vmatprep.subr.mxu0 %v2578
    %2799 = vmatpush1.msra.mxu0 %v2577
    %2800 = vmatprep.subr.mxu0 %v2584
    %2801 = vmatpush1.msra.mxu0 %v2583
    %2802 = vmatprep.subr.mxu0 %v2590
    %2803 = vmatpush1.msra.mxu0 %v2589
    %2804 = vmatprep.subr.mxu0 %v2596
    %2805 = vmatpush1.msra.mxu0 %v2595
    %2806 = vmatprep.subr.mxu0 %v2602
    %2807 = vmatpush1.msra.mxu0 %v2601
    %2808 = vmatprep.subr.mxu0 %v2608
    %2809 = vmatpush1.msra.mxu0 %v2607
    %2810 = vmatprep.subr.mxu0 %v2614
    %2811 = vmatpush1.msra.mxu0 %v2613
    %2812 = vmatprep.subr.mxu0 %v2620
    %2813 = vmatpush1.msra.mxu0 %v2619
    %2814 = vmatprep.subr.mxu0 %v2626
    %2815 = vmatpush1.msra.mxu0 %v2625
    %2816 = vmatprep.subr.mxu0 %v2632
    %2817 = vmatpush1.msra.mxu0 %v2631
    %2818 = vmatprep.subr.mxu0 %v2638
    %2819 = vmatpush1.msra.mxu0 %v2637
    %2820 = vmatprep.subr.mxu0 %v2644
    %2821 = vmatpush1.msra.mxu0 %v2643
    %2822 = vmatprep.subr.mxu0 %v2650
    %2823 = vmatpush1.msra.mxu0 %v2649
    %2824 = vmatprep.subr.mxu0 %v2656
    %2825 = vmatpush1.msra.mxu0 %v2655
    %2826 = vmatprep.subr.mxu0 %v2662
    %2827 = vmatpush1.msra.mxu0 %v2661
    %2828 = vmatprep.subr.mxu0 %v2668
    %2829 = vmatpush1.msra.mxu0 %v2667
    %2830 = vmatprep.subr.mxu0 %v2674
    %2831 = vmatpush1.msra.mxu0 %v2673
    %2832 = vmatprep.subr.mxu0 %v2680
    %2833 = vmatpush1.msra.mxu0 %v2679
    %2834 = vmatprep.subr.mxu0 %v2686
    %2835 = vmatpush1.msra.mxu0 %v2685
    %2836 = vmatprep.subr.mxu0 %v2692
    %2837 = vmatpush1.msra.mxu0 %v2691
    %2838 = vmatprep.subr.mxu0 %v2698
    %2839 = vmatpush1.msra.mxu0 %v2697
    %2840 = vmatprep.subr.mxu0 %v2704
    %2841 = vmatpush1.msra.mxu0 %v2703
    %2842 = vmatprep.subr.mxu0 %v2710
    %2843 = vmatpush1.msra.mxu0 %v2709
    %2844 = vmatprep.subr.mxu0 %v2716
    %2845 = vmatpush1.msra.mxu0 %v2715
    %2846 = vmatprep.mubr.f32.mxu0 %v2518
    %2847 = vmatmul.mubr.f32.gmra.mrb[0].mxu0 %v2517
    %v2848 = vpop.f32.mrb[0].mxu0
    %v2849 = vadd.f32 %v2752, %v2848
    %v2850 = vpop.f32.mrb[0].mxu0
    %v2851 = vadd.f32 %v2752, %v2850
    %2852 = vmatprep.mubr.f32.mxu0 %v2521
    %2853 = vmatmul.mubr.f32.gmra.mrb[0].mxu0 %v2520
    %v2854 = vpop.f32.mrb[0].mxu0
    %v2855 = vadd.f32 %v2757, %v2854
    %v2856 = vpop.f32.mrb[0].mxu0
    %v2857 = vadd.f32 %v2757, %v2856
    %2858 = vmatprep.mubr.f32.mxu0 %v2524
    %2859 = vmatmul.mubr.f32.gmra.mrb[0].mxu0 %v2523
    %v2860 = vpop.f32.mrb[0].mxu0
    %v2861 = vadd.f32 %v2762, %v2860
    %v2862 = vpop.f32.mrb[0].mxu0
    %v2863 = vadd.f32 %v2762, %v2862
    %2864 = vmatprep.mubr.f32.mxu0 %v2527
    %2865 = vmatmul.mubr.f32.gmra.mrb[0].mxu0 %v2526
    %v2866 = vpop.f32.mrb[0].mxu0
    %v2867 = vadd.f32 %v2767, %v2866
    %v2868 = vpop.f32.mrb[0].mxu0
    %v2869 = vadd.f32 %v2767, %v2868
    %2870 = vdwg.mxu0
    %2871 = vmatprep.subr.mxu0 %v2722
    %2872 = vmatpush1.msra.mxu0 %v2721
    %2873 = vmatprep.subr.mxu0 %v2728
    %2874 = vmatpush1.msra.mxu0 %v2727
    %2875 = vmatprep.subr.mxu0 %v2734
    %2876 = vmatpush1.msra.mxu0 %v2733
    %2877 = vmatprep.subr.mxu0 %v2740
    %2878 = vmatpush1.msra.mxu0 %v2739
    %2879 = vmatprep.subr.mxu0 0.0
    %2880 = vmatpush1.msra.mxu0 0.0
    %2881 = vmatprep.subr.mxu0 0.0
    %2882 = vmatpush1.msra.mxu0 0.0
    %2883 = vmatprep.subr.mxu0 0.0
    %2884 = vmatpush1.msra.mxu0 0.0
    %2885 = vmatprep.subr.mxu0 0.0
    %2886 = vmatpush1.msra.mxu0 0.0
    %2887 = vmatprep.subr.mxu0 0.0
    %2888 = vmatpush1.msra.mxu0 0.0
    %2889 = vmatprep.subr.mxu0 0.0
    %2890 = vmatpush1.msra.mxu0 0.0
    %2891 = vmatprep.subr.mxu0 0.0
    %2892 = vmatpush1.msra.mxu0 0.0
    %2893 = vmatprep.subr.mxu0 0.0
    %2894 = vmatpush1.msra.mxu0 0.0
    %2895 = vmatprep.subr.mxu0 0.0
    %2896 = vmatpush1.msra.mxu0 0.0
    %2897 = vmatprep.subr.mxu0 0.0
    %2898 = vmatpush1.msra.mxu0 0.0
    %2899 = vmatprep.subr.mxu0 0.0
    %2900 = vmatpush1.msra.mxu0 0.0
    %2901 = vmatprep.subr.mxu0 0.0
    %2902 = vmatpush1.msra.mxu0 0.0
    %2903 = vmatprep.subr.mxu0 0.0
    %2904 = vmatpush1.msra.mxu0 0.0
    %2905 = vmatprep.subr.mxu0 0.0
    %2906 = vmatpush1.msra.mxu0 0.0
    %2907 = vmatprep.subr.mxu0 0.0
    %2908 = vmatpush1.msra.mxu0 0.0
    %2909 = vmatprep.subr.mxu0 0.0
    %2910 = vmatpush1.msra.mxu0 0.0
    %2911 = vmatprep.subr.mxu0 0.0
    %2912 = vmatpush1.msra.mxu0 0.0
    %2913 = vmatprep.subr.mxu0 0.0
    %2914 = vmatpush1.msra.mxu0 0.0
    %2915 = vmatprep.subr.mxu0 0.0
    %2916 = vmatpush1.msra.mxu0 0.0
    %2917 = vmatprep.subr.mxu0 0.0
    %2918 = vmatpush1.msra.mxu0 0.0
    %2919 = vmatprep.subr.mxu0 0.0
    %2920 = vmatpush1.msra.mxu0 0.0
    %2921 = vmatprep.subr.mxu0 0.0
    %2922 = vmatpush1.msra.mxu0 0.0
    %2923 = vmatprep.subr.mxu0 0.0
    %2924 = vmatpush1.msra.mxu0 0.0
    %2925 = vmatprep.subr.mxu0 0.0
    %2926 = vmatpush1.msra.mxu0 0.0
    %2927 = vmatprep.subr.mxu0 0.0
    %2928 = vmatpush1.msra.mxu0 0.0
    %2929 = vmatprep.subr.mxu0 0.0
    %2930 = vmatpush1.msra.mxu0 0.0
    %2931 = vmatprep.subr.mxu0 0.0
    %2932 = vmatpush1.msra.mxu0 0.0
    %2933 = vmatprep.subr.mxu0 0.0
    %2934 = vmatpush1.msra.mxu0 0.0
    %2935 = vmatprep.mubr.f32.mxu0 0.0
    %2936 = vmatmul.mubr.f32.gmra.mrb[0].mxu0 %v2771
    %v2937 = vpop.f32.mrb[0].mxu0
    %v2938 = vadd.f32 %v2849, %v2937
    %v2939 = vpop.f32.mrb[0].mxu0
    %v2940 = vadd.f32 %v2851, %v2939
    %2941 = vmatprep.mubr.f32.mxu0 0.0
    %2942 = vmatmul.mubr.f32.gmra.mrb[0].mxu0 %v2774
    %v2943 = vpop.f32.mrb[0].mxu0
    %v2944 = vadd.f32 %v2855, %v2943
    %v2945 = vpop.f32.mrb[0].mxu0
    %v2946 = vadd.f32 %v2857, %v2945
    %2947 = vmatprep.mubr.f32.mxu0 0.0
    %2948 = vmatmul.mubr.f32.gmra.mrb[0].mxu0 %v2777
    %v2949 = vpop.f32.mrb[0].mxu0
    %v2950 = vadd.f32 %v2861, %v2949
    %v2951 = vpop.f32.mrb[0].mxu0
    %v2952 = vadd.f32 %v2863, %v2951
    %2953 = vmatprep.mubr.f32.mxu0 0.0
    %2954 = vmatmul.mubr.f32.gmra.mrb[0].mxu0 %v2780
    %v2955 = vpop.f32.mrb[0].mxu0
    %v2956 = vadd.f32 %v2867, %v2955
    %v2957 = vpop.f32.mrb[0].mxu0
    %v2958 = vadd.f32 %v2869, %v2957
    %2959 = vdwg.mxu0
    %2960 = vmatprep.subr.mxu0 %v2532
    %2961 = vmatpush1.msra.mxu0 %v2531
    %2962 = vmatprep.subr.mxu0 %v2538
    %2963 = vmatpush1.msra.mxu0 %v2537
    %2964 = vmatprep.subr.mxu0 %v2544
    %2965 = vmatpush1.msra.mxu0 %v2543
    %2966 = vmatprep.subr.mxu0 %v2550
    %2967 = vmatpush1.msra.mxu0 %v2549
    %2968 = vmatprep.subr.mxu0 %v2556
    %2969 = vmatpush1.msra.mxu0 %v2555
    %2970 = vmatprep.subr.mxu0 %v2562
    %2971 = vmatpush1.msra.mxu0 %v2561
    %2972 = vmatprep.subr.mxu0 %v2568
    %2973 = vmatpush1.msra.mxu0 %v2567
    %2974 = vmatprep.subr.mxu0 %v2574
    %2975 = vmatpush1.msra.mxu0 %v2573
    %2976 = vmatprep.subr.mxu0 %v2580
    %2977 = vmatpush1.msra.mxu0 %v2579
    %2978 = vmatprep.subr.mxu0 %v2586
    %2979 = vmatpush1.msra.mxu0 %v2585
    %2980 = vmatprep.subr.mxu0 %v2592
    %2981 = vmatpush1.msra.mxu0 %v2591
    %2982 = vmatprep.subr.mxu0 %v2598
    %2983 = vmatpush1.msra.mxu0 %v2597
    %2984 = vmatprep.subr.mxu0 %v2604
    %2985 = vmatpush1.msra.mxu0 %v2603
    %2986 = vmatprep.subr.mxu0 %v2610
    %2987 = vmatpush1.msra.mxu0 %v2609
    %2988 = vmatprep.subr.mxu0 %v2616
    %2989 = vmatpush1.msra.mxu0 %v2615
    %2990 = vmatprep.subr.mxu0 %v2622
    %2991 = vmatpush1.msra.mxu0 %v2621
    %2992 = vmatprep.subr.mxu0 %v2628
    %2993 = vmatpush1.msra.mxu0 %v2627
    %2994 = vmatprep.subr.mxu0 %v2634
    %2995 = vmatpush1.msra.mxu0 %v2633
    %2996 = vmatprep.subr.mxu0 %v2640
    %2997 = vmatpush1.msra.mxu0 %v2639
    %2998 = vmatprep.subr.mxu0 %v2646
    %2999 = vmatpush1.msra.mxu0 %v2645
    %3000 = vmatprep.subr.mxu0 %v2652
    %3001 = vmatpush1.msra.mxu0 %v2651
    %3002 = vmatprep.subr.mxu0 %v2658
    %3003 = vmatpush1.msra.mxu0 %v2657
    %3004 = vmatprep.subr.mxu0 %v2664
    %3005 = vmatpush1.msra.mxu0 %v2663
    %3006 = vmatprep.subr.mxu0 %v2670
    %3007 = vmatpush1.msra.mxu0 %v2669
    %3008 = vmatprep.subr.mxu0 %v2676
    %3009 = vmatpush1.msra.mxu0 %v2675
    %3010 = vmatprep.subr.mxu0 %v2682
    %3011 = vmatpush1.msra.mxu0 %v2681
    %3012 = vmatprep.subr.mxu0 %v2688
    %3013 = vmatpush1.msra.mxu0 %v2687
    %3014 = vmatprep.subr.mxu0 %v2694
    %3015 = vmatpush1.msra.mxu0 %v2693
    %3016 = vmatprep.subr.mxu0 %v2700
    %3017 = vmatpush1.msra.mxu0 %v2699
    %3018 = vmatprep.subr.mxu0 %v2706
    %3019 = vmatpush1.msra.mxu0 %v2705
    %3020 = vmatprep.subr.mxu0 %v2712
    %3021 = vmatpush1.msra.mxu0 %v2711
    %3022 = vmatprep.subr.mxu0 %v2718
    %3023 = vmatpush1.msra.mxu0 %v2717
    %3024 = vmatprep.mubr.f32.mxu0 %v2518
    %3025 = vmatmul.mubr.f32.gmra.mrb[0].mxu0 %v2517
    %v3026 = vpop.f32.mrb[0].mxu0
    %v3027 = vadd.f32 %v2752, %v3026
    %v3028 = vpop.f32.mrb[0].mxu0
    %v3029 = vadd.f32 %v2752, %v3028
    %3030 = vmatprep.mubr.f32.mxu0 %v2521
    %3031 = vmatmul.mubr.f32.gmra.mrb[0].mxu0 %v2520
    %v3032 = vpop.f32.mrb[0].mxu0
    %v3033 = vadd.f32 %v2757, %v3032
    %v3034 = vpop.f32.mrb[0].mxu0
    %v3035 = vadd.f32 %v2757, %v3034
    %3036 = vmatprep.mubr.f32.mxu0 %v2524
    %3037 = vmatmul.mubr.f32.gmra.mrb[0].mxu0 %v2523
    %v3038 = vpop.f32.mrb[0].mxu0
    %v3039 = vadd.f32 %v2762, %v3038
    %v3040 = vpop.f32.mrb[0].mxu0
    %v3041 = vadd.f32 %v2762, %v3040
    %3042 = vmatprep.mubr.f32.mxu0 %v2527
    %3043 = vmatmul.mubr.f32.gmra.mrb[0].mxu0 %v2526
    %v3044 = vpop.f32.mrb[0].mxu0
    %v3045 = vadd.f32 %v2767, %v3044
    %v3046 = vpop.f32.mrb[0].mxu0
    %v3047 = vadd.f32 %v2767, %v3046
    %3048 = vdwg.mxu0
    %3049 = vmatprep.subr.mxu0 %v2724
    %3050 = vmatpush1.msra.mxu0 %v2723
    %3051 = vmatprep.subr.mxu0 %v2730
    %3052 = vmatpush1.msra.mxu0 %v2729
    %3053 = vmatprep.subr.mxu0 %v2736
    %3054 = vmatpush1.msra.mxu0 %v2735
    %3055 = vmatprep.subr.mxu0 %v2742
    %3056 = vmatpush1.msra.mxu0 %v2741
    %3057 = vmatprep.subr.mxu0 0.0
    %3058 = vmatpush1.msra.mxu0 0.0
    %3059 = vmatprep.subr.mxu0 0.0
    %3060 = vmatpush1.msra.mxu0 0.0
    %3061 = vmatprep.subr.mxu0 0.0
    %3062 = vmatpush1.msra.mxu0 0.0
    %3063 = vmatprep.subr.mxu0 0.0
    %3064 = vmatpush1.msra.mxu0 0.0
    %3065 = vmatprep.subr.mxu0 0.0
    %3066 = vmatpush1.msra.mxu0 0.0
    %3067 = vmatprep.subr.mxu0 0.0
    %3068 = vmatpush1.msra.mxu0 0.0
    %3069 = vmatprep.subr.mxu0 0.0
    %3070 = vmatpush1.msra.mxu0 0.0
    %3071 = vmatprep.subr.mxu0 0.0
    %3072 = vmatpush1.msra.mxu0 0.0
    %3073 = vmatprep.subr.mxu0 0.0
    %3074 = vmatpush1.msra.mxu0 0.0
    %3075 = vmatprep.subr.mxu0 0.0
    %3076 = vmatpush1.msra.mxu0 0.0
    %3077 = vmatprep.subr.mxu0 0.0
    %3078 = vmatpush1.msra.mxu0 0.0
    %3079 = vmatprep.subr.mxu0 0.0
    %3080 = vmatpush1.msra.mxu0 0.0
    %3081 = vmatprep.subr.mxu0 0.0
    %3082 = vmatpush1.msra.mxu0 0.0
    %3083 = vmatprep.subr.mxu0 0.0
    %3084 = vmatpush1.msra.mxu0 0.0
    %3085 = vmatprep.subr.mxu0 0.0
    %3086 = vmatpush1.msra.mxu0 0.0
    %3087 = vmatprep.subr.mxu0 0.0
    %3088 = vmatpush1.msra.mxu0 0.0
    %3089 = vmatprep.subr.mxu0 0.0
    %3090 = vmatpush1.msra.mxu0 0.0
    %3091 = vmatprep.subr.mxu0 0.0
    %3092 = vmatpush1.msra.mxu0 0.0
    %3093 = vmatprep.subr.mxu0 0.0
    %3094 = vmatpush1.msra.mxu0 0.0
    %3095 = vmatprep.subr.mxu0 0.0
    %3096 = vmatpush1.msra.mxu0 0.0
    %3097 = vmatprep.subr.mxu0 0.0
    %3098 = vmatpush1.msra.mxu0 0.0
    %3099 = vmatprep.subr.mxu0 0.0
    %3100 = vmatpush1.msra.mxu0 0.0
    %3101 = vmatprep.subr.mxu0 0.0
    %3102 = vmatpush1.msra.mxu0 0.0
    %3103 = vmatprep.subr.mxu0 0.0
    %3104 = vmatpush1.msra.mxu0 0.0
    %3105 = vmatprep.subr.mxu0 0.0
    %3106 = vmatpush1.msra.mxu0 0.0
    %3107 = vmatprep.subr.mxu0 0.0
    %3108 = vmatpush1.msra.mxu0 0.0
    %3109 = vmatprep.subr.mxu0 0.0
    %3110 = vmatpush1.msra.mxu0 0.0
    %3111 = vmatprep.subr.mxu0 0.0
    %3112 = vmatpush1.msra.mxu0 0.0
    %3113 = vmatprep.mubr.f32.mxu0 0.0
    %3114 = vmatmul.mubr.f32.gmra.mrb[0].mxu0 %v2771
    %v3115 = vpop.f32.mrb[0].mxu0
    %v3116 = vadd.f32 %v3027, %v3115
    %v3117 = vpop.f32.mrb[0].mxu0
    %v3118 = vadd.f32 %v3029, %v3117
    %3119 = vmatprep.mubr.f32.mxu0 0.0
    %3120 = vmatmul.mubr.f32.gmra.mrb[0].mxu0 %v2774
    %v3121 = vpop.f32.mrb[0].mxu0
    %v3122 = vadd.f32 %v3033, %v3121
    %v3123 = vpop.f32.mrb[0].mxu0
    %v3124 = vadd.f32 %v3035, %v3123
    %3125 = vmatprep.mubr.f32.mxu0 0.0
    %3126 = vmatmul.mubr.f32.gmra.mrb[0].mxu0 %v2777
    %v3127 = vpop.f32.mrb[0].mxu0
    %v3128 = vadd.f32 %v3039, %v3127
    %v3129 = vpop.f32.mrb[0].mxu0
    %v3130 = vadd.f32 %v3041, %v3129
    %3131 = vmatprep.mubr.f32.mxu0 0.0
    %3132 = vmatmul.mubr.f32.gmra.mrb[0].mxu0 %v2780
    %v3133 = vpop.f32.mrb[0].mxu0
    %v3134 = vadd.f32 %v3045, %v3133
    %v3135 = vpop.f32.mrb[0].mxu0
    %v3136 = vadd.f32 %v3047, %v3135
    %3137 = vdwg.mxu0
    %3138 = vmatprep.subr.mxu0 %v2534
    %3139 = vmatpush1.msra.mxu0 %v2533
    %3140 = vmatprep.subr.mxu0 %v2540
    %3141 = vmatpush1.msra.mxu0 %v2539
    %3142 = vmatprep.subr.mxu0 %v2546
    %3143 = vmatpush1.msra.mxu0 %v2545
    %3144 = vmatprep.subr.mxu0 %v2552
    %3145 = vmatpush1.msra.mxu0 %v2551
    %3146 = vmatprep.subr.mxu0 %v2558
    %3147 = vmatpush1.msra.mxu0 %v2557
    %3148 = vmatprep.subr.mxu0 %v2564
    %3149 = vmatpush1.msra.mxu0 %v2563
    %3150 = vmatprep.subr.mxu0 %v2570
    %3151 = vmatpush1.msra.mxu0 %v2569
    %3152 = vmatprep.subr.mxu0 %v2576
    %3153 = vmatpush1.msra.mxu0 %v2575
    %3154 = vmatprep.subr.mxu0 %v2582
    %3155 = vmatpush1.msra.mxu0 %v2581
    %3156 = vmatprep.subr.mxu0 %v2588
    %3157 = vmatpush1.msra.mxu0 %v2587
    %3158 = vmatprep.subr.mxu0 %v2594
    %3159 = vmatpush1.msra.mxu0 %v2593
    %3160 = vmatprep.subr.mxu0 %v2600
    %3161 = vmatpush1.msra.mxu0 %v2599
    %3162 = vmatprep.subr.mxu0 %v2606
    %3163 = vmatpush1.msra.mxu0 %v2605
    %3164 = vmatprep.subr.mxu0 %v2612
    %3165 = vmatpush1.msra.mxu0 %v2611
    %3166 = vmatprep.subr.mxu0 %v2618
    %3167 = vmatpush1.msra.mxu0 %v2617
    %3168 = vmatprep.subr.mxu0 %v2624
    %3169 = vmatpush1.msra.mxu0 %v2623
    %3170 = vmatprep.subr.mxu0 %v2630
    %3171 = vmatpush1.msra.mxu0 %v2629
    %3172 = vmatprep.subr.mxu0 %v2636
    %3173 = vmatpush1.msra.mxu0 %v2635
    %3174 = vmatprep.subr.mxu0 %v2642
    %3175 = vmatpush1.msra.mxu0 %v2641
    %3176 = vmatprep.subr.mxu0 %v2648
    %3177 = vmatpush1.msra.mxu0 %v2647
    %3178 = vmatprep.subr.mxu0 %v2654
    %3179 = vmatpush1.msra.mxu0 %v2653
    %3180 = vmatprep.subr.mxu0 %v2660
    %3181 = vmatpush1.msra.mxu0 %v2659
    %3182 = vmatprep.subr.mxu0 %v2666
    %3183 = vmatpush1.msra.mxu0 %v2665
    %3184 = vmatprep.subr.mxu0 %v2672
    %3185 = vmatpush1.msra.mxu0 %v2671
    %3186 = vmatprep.subr.mxu0 %v2678
    %3187 = vmatpush1.msra.mxu0 %v2677
    %3188 = vmatprep.subr.mxu0 %v2684
    %3189 = vmatpush1.msra.mxu0 %v2683
    %3190 = vmatprep.subr.mxu0 %v2690
    %3191 = vmatpush1.msra.mxu0 %v2689
    %3192 = vmatprep.subr.mxu0 %v2696
    %3193 = vmatpush1.msra.mxu0 %v2695
    %3194 = vmatprep.subr.mxu0 %v2702
    %3195 = vmatpush1.msra.mxu0 %v2701
    %3196 = vmatprep.subr.mxu0 %v2708
    %3197 = vmatpush1.msra.mxu0 %v2707
    %3198 = vmatprep.subr.mxu0 %v2714
    %3199 = vmatpush1.msra.mxu0 %v2713
    %3200 = vmatprep.subr.mxu0 %v2720
    %3201 = vmatpush1.msra.mxu0 %v2719
    %3202 = vmatprep.mubr.f32.mxu0 %v2518
    %3203 = vmatmul.mubr.f32.gmra.mrb[0].mxu0 %v2517
    %v3204 = vpop.f32.mrb[0].mxu0
    %v3205 = vadd.f32 %v2752, %v3204
    %v3206 = vpop.f32.mrb[0].mxu0
    %v3207 = vadd.f32 %v2752, %v3206
    %3208 = vmatprep.mubr.f32.mxu0 %v2521
    %3209 = vmatmul.mubr.f32.gmra.mrb[0].mxu0 %v2520
    %v3210 = vpop.f32.mrb[0].mxu0
    %v3211 = vadd.f32 %v2757, %v3210
    %v3212 = vpop.f32.mrb[0].mxu0
    %v3213 = vadd.f32 %v2757, %v3212
    %3214 = vmatprep.mubr.f32.mxu0 %v2524
    %3215 = vmatmul.mubr.f32.gmra.mrb[0].mxu0 %v2523
    %v3216 = vpop.f32.mrb[0].mxu0
    %v3217 = vadd.f32 %v2762, %v3216
    %v3218 = vpop.f32.mrb[0].mxu0
    %v3219 = vadd.f32 %v2762, %v3218
    %3220 = vmatprep.mubr.f32.mxu0 %v2527
    %3221 = vmatmul.mubr.f32.gmra.mrb[0].mxu0 %v2526
    %v3222 = vpop.f32.mrb[0].mxu0
    %v3223 = vadd.f32 %v2767, %v3222
    %v3224 = vpop.f32.mrb[0].mxu0
    %v3225 = vadd.f32 %v2767, %v3224
    %3226 = vdwg.mxu0
    %3227 = vmatprep.subr.mxu0 %v2726
    %3228 = vmatpush1.msra.mxu0 %v2725
    %3229 = vmatprep.subr.mxu0 %v2732
    %3230 = vmatpush1.msra.mxu0 %v2731
    %3231 = vmatprep.subr.mxu0 %v2738
    %3232 = vmatpush1.msra.mxu0 %v2737
    %3233 = vmatprep.subr.mxu0 %v2744
    %3234 = vmatpush1.msra.mxu0 %v2743
    %3235 = vmatprep.subr.mxu0 0.0
    %3236 = vmatpush1.msra.mxu0 0.0
    %3237 = vmatprep.subr.mxu0 0.0
    %3238 = vmatpush1.msra.mxu0 0.0
    %3239 = vmatprep.subr.mxu0 0.0
    %3240 = vmatpush1.msra.mxu0 0.0
    %3241 = vmatprep.subr.mxu0 0.0
    %3242 = vmatpush1.msra.mxu0 0.0
    %3243 = vmatprep.subr.mxu0 0.0
    %3244 = vmatpush1.msra.mxu0 0.0
    %3245 = vmatprep.subr.mxu0 0.0
    %3246 = vmatpush1.msra.mxu0 0.0
    %3247 = vmatprep.subr.mxu0 0.0
    %3248 = vmatpush1.msra.mxu0 0.0
    %3249 = vmatprep.subr.mxu0 0.0
    %3250 = vmatpush1.msra.mxu0 0.0
    %3251 = vmatprep.subr.mxu0 0.0
    %3252 = vmatpush1.msra.mxu0 0.0
    %3253 = vmatprep.subr.mxu0 0.0
    %3254 = vmatpush1.msra.mxu0 0.0
    %3255 = vmatprep.subr.mxu0 0.0
    %3256 = vmatpush1.msra.mxu0 0.0
    %3257 = vmatprep.subr.mxu0 0.0
    %3258 = vmatpush1.msra.mxu0 0.0
    %3259 = vmatprep.subr.mxu0 0.0
    %3260 = vmatpush1.msra.mxu0 0.0
    %3261 = vmatprep.subr.mxu0 0.0
    %3262 = vmatpush1.msra.mxu0 0.0
    %3263 = vmatprep.subr.mxu0 0.0
    %3264 = vmatpush1.msra.mxu0 0.0
    %3265 = vmatprep.subr.mxu0 0.0
    %3266 = vmatpush1.msra.mxu0 0.0
    %3267 = vmatprep.subr.mxu0 0.0
    %3268 = vmatpush1.msra.mxu0 0.0
    %3269 = vmatprep.subr.mxu0 0.0
    %3270 = vmatpush1.msra.mxu0 0.0
    %3271 = vmatprep.subr.mxu0 0.0
    %3272 = vmatpush1.msra.mxu0 0.0
    %3273 = vmatprep.subr.mxu0 0.0
    %3274 = vmatpush1.msra.mxu0 0.0
    %3275 = vmatprep.subr.mxu0 0.0
    %3276 = vmatpush1.msra.mxu0 0.0
    %3277 = vmatprep.subr.mxu0 0.0
    %3278 = vmatpush1.msra.mxu0 0.0
    %3279 = vmatprep.subr.mxu0 0.0
    %3280 = vmatpush1.msra.mxu0 0.0
    %3281 = vmatprep.subr.mxu0 0.0
    %3282 = vmatpush1.msra.mxu0 0.0
    %3283 = vmatprep.subr.mxu0 0.0
    %3284 = vmatpush1.msra.mxu0 0.0
    %3285 = vmatprep.subr.mxu0 0.0
    %3286 = vmatpush1.msra.mxu0 0.0
    %3287 = vmatprep.subr.mxu0 0.0
    %3288 = vmatpush1.msra.mxu0 0.0
    %3289 = vmatprep.subr.mxu0 0.0
    %3290 = vmatpush1.msra.mxu0 0.0
    %3291 = vmatprep.mubr.f32.mxu0 0.0
    %3292 = vmatmul.mubr.f32.gmra.mrb[0].mxu0 %v2771
    %v3293 = vpop.f32.mrb[0].mxu0
    %v3294 = vadd.f32 %v3205, %v3293
    %v3295 = vpop.f32.mrb[0].mxu0
    %v3296 = vadd.f32 %v3207, %v3295
    %3297 = vmatprep.mubr.f32.mxu0 0.0
    %3298 = vmatmul.mubr.f32.gmra.mrb[0].mxu0 %v2774
    %v3299 = vpop.f32.mrb[0].mxu0
    %v3300 = vadd.f32 %v3211, %v3299
    %v3301 = vpop.f32.mrb[0].mxu0
    %v3302 = vadd.f32 %v3213, %v3301
    %3303 = vmatprep.mubr.f32.mxu0 0.0
    %3304 = vmatmul.mubr.f32.gmra.mrb[0].mxu0 %v2777
    %v3305 = vpop.f32.mrb[0].mxu0
    %v3306 = vadd.f32 %v3217, %v3305
    %v3307 = vpop.f32.mrb[0].mxu0
    %v3308 = vadd.f32 %v3219, %v3307
    %3309 = vmatprep.mubr.f32.mxu0 0.0
    %3310 = vmatmul.mubr.f32.gmra.mrb[0].mxu0 %v2780
    %v3311 = vpop.f32.mrb[0].mxu0
    %v3312 = vadd.f32 %v3223, %v3311
    %v3313 = vpop.f32.mrb[0].mxu0
    %v3314 = vadd.f32 %v3225, %v3313
    %3315 = vdwg.mxu0
    %v3316 = vmax.f32 %v2938, 0.0
    %v3317 = vmax.f32 %v2940, 0.0
    %v3318 = vmax.f32 %v3116, 0.0
    %v3319 = vmax.f32 %v3118, 0.0
    %v3320 = vmax.f32 %v3294, 0.0
    %v3321 = vmax.f32 %v3296, 0.0
    %v3322 = vmax.f32 %v2944, 0.0
    %v3323 = vmax.f32 %v2946, 0.0
    %v3324 = vmax.f32 %v3122, 0.0
    %v3325 = vmax.f32 %v3124, 0.0
    %v3326 = vmax.f32 %v3300, 0.0
    %v3327 = vmax.f32 %v3302, 0.0
    %v3328 = vmax.f32 %v2950, 0.0
    %v3329 = vmax.f32 %v2952, 0.0
    %v3330 = vmax.f32 %v3128, 0.0
    %v3331 = vmax.f32 %v3130, 0.0
    %v3332 = vmax.f32 %v3306, 0.0
    %v3333 = vmax.f32 %v3308, 0.0
    %v3334 = vmax.f32 %v2956, 0.0
    %v3335 = vmax.f32 %v2958, 0.0
    %v3336 = vmax.f32 %v3134, 0.0
    %v3337 = vmax.f32 %v3136, 0.0
    %v3338 = vmax.f32 %v3312, 0.0
    %v3339 = vmax.f32 %v3314, 0.0
    %3340 = vst [vmem:[#allocation16] sm:$0xff] %v3316
    %3341 = vst [vmem:[#allocation16 + $0x8] sm:$0xff] %v3317
    %3342 = vst [vmem:[#allocation16 + $0x10] sm:$0xff] %v3318
    %3343 = vst [vmem:[#allocation16 + $0x18] sm:$0xff] %v3319
    %3344 = vst [vmem:[#allocation16 + $0x20] sm:$0xff] %v3320
    %3345 = vst [vmem:[#allocation16 + $0x28] sm:$0xff] %v3321
    %3346 = vst [vmem:[#allocation16 + $0x30] sm:$0xff] %v3322
    %3347 = vst [vmem:[#allocation16 + $0x38] sm:$0xff] %v3323
    %3348 = vst [vmem:[#allocation16 + $0x40] sm:$0xff] %v3324
    %3349 = vst [vmem:[#allocation16 + $0x48] sm:$0xff] %v3325
    %3350 = vst [vmem:[#allocation16 + $0x50] sm:$0xff] %v3326
    %3351 = vst [vmem:[#allocation16 + $0x58] sm:$0xff] %v3327
    %3352 = vst [vmem:[#allocation16 + $0x60] sm:$0xff] %v3328
    %3353 = vst [vmem:[#allocation16 + $0x68] sm:$0xff] %v3329
    %3354 = vst [vmem:[#allocation16 + $0x70] sm:$0xff] %v3330
    %3355 = vst [vmem:[#allocation16 + $0x78] sm:$0xff] %v3331
    %3356 = vst [vmem:[#allocation16 + $0x80] sm:$0xff] %v3332
    %3357 = vst [vmem:[#allocation16 + $0x88] sm:$0xff] %v3333
    %3358 = vst [vmem:[#allocation16 + $0x90] sm:$0xff] %v3334
    %3359 = vst [vmem:[#allocation16 + $0x98] sm:$0xff] %v3335
    %3360 = vst [vmem:[#allocation16 + $0xa0] sm:$0xff] %v3336
    %3361 = vst [vmem:[#allocation16 + $0xa8] sm:$0xff] %v3337
    %3362 = vst [vmem:[#allocation16 + $0xb0] sm:$0xff] %v3338
    %3363 = vst [vmem:[#allocation16 + $0xb8] sm:$0xff] %v3339
    // Predicated region
    $region54: #{tpu_custom_call.1} parent=1 // pred_check
      _
    $region55: #{tpu_custom_call.1} parent=1 // pred_check_branch
      %3365 = sbr.rel (0) target = $region57
    $region56: #{tpu_custom_call.1} parent=1 // pred_region
      %s3367 = ssub.s32 3072, 3072
      %3368 = vsyncadd [#allocation7], %s3367
      %s3369 = sshll.u32 [#allocation16], 4
      %s3370 = int_to_ptr.vmem [resolvable:$true] %s3369
      %3375 = dma.vmem_to_hbm [thread:$0]  %s3370, 3072, %s6, [#allocation7], 768, 768, 48
    $region57: #{tpu_custom_call.1} parent=1 // pred_fallthru
      _
    // Predicated region
    $region58: #{tpu_custom_call.1} parent=1 // pred_check
      _
    $region59: #{tpu_custom_call.1} parent=1 // pred_check_branch
      %3377 = sbr.rel (0) target = $region61
    $region60: #{tpu_custom_call.1} parent=1 // pred_region
      %3378 = dma.done [#allocation7], 3072
    $region61: #{tpu_custom_call.1} parent=1 // pred_fallthru
      _
    %3379 = vsyncpa [#allocation6], 1
    %3380 = vsyncpa [#allocation9], 1
    %3381 = vsyncpa [#allocation12], 1
    %3382 = vsyncpa [#allocation15], 1
    %3383 = vsyncpa [#allocation7], 1

</llo_original>
